<compile_context>
chip_gen: v6e
topology: v6e:2x2x1
jax: 0.10.0
libtpu: 0.0.40
codegen_flags: <defaults>
</compile_context>

<pallas_src>
import jax
import jax.numpy as jnp
from jax.experimental import pallas as pl
from jax.experimental.pallas import tpu as pltpu


def _make_kernel(*, th, rows_in_main, has_halo, Wd):
    """Builds the per-tile kernel.

    Per grid step the kernel sees:
      xm_ref : [Cin, th(_or_H+2), W+2]  main padded-original rows of the tile
      xh_ref : [Cin, 8, W+2]            (halo path only) rows below the tile
      w_ref  : [2, tco, 6*Cin]          parity-combined conv weights,
                                        columns ordered (dy, kw, cin)
      b_ref  : [tco, 1]                 bias slice
      u_ref  : [W+2, 2W+2]              0/1 nearest-x2 width-upsample matrix
      o_ref  : [tco, th, 2*2W]          output tile (both row parities per row)
    """

    def kernel(*refs):
        if has_halo:
            xm_ref, xh_ref, w_ref, b_ref, u_ref, o_ref = refs
        else:
            xm_ref, w_ref, b_ref, u_ref, o_ref = refs
            xh_ref = None

        up = u_ref[...]              # [W+2, 2W+2]
        bias = b_ref[...]            # [tco, 1]
        w0 = w_ref[0]                # [tco, 6*Cin]  parity-0 combined weights
        w1 = w_ref[1]                # [tco, 6*Cin]  parity-1 combined weights

        def padded_row(r):           # r is a static, tile-local padded row index
            if r < rows_in_main:
                return xm_ref[:, r, :]                     # [Cin, W+2]
            return xh_ref[:, r - rows_in_main, :]          # [Cin, W+2]

        # 1) nearest-x2 upsample along W (incl. conv padding), in VMEM only:
        #    one small exact 0/1 matmul per padded row.
        xw = [jnp.dot(padded_row(r), up, preferred_element_type=jnp.float32)
              for r in range(th + 2)]                      # each [Cin, 2W+2]

        # 2) stack the 3 horizontal taps of each row along the contraction dim
        #    (kw-major, cin-minor: matches the prepacked weight column order).
        S = [jnp.concatenate([x[:, 0:Wd], x[:, 1:1 + Wd], x[:, 2:2 + Wd]], axis=0)
             for x in xw]                                  # each [3*Cin, 2W]

        # 3) pair consecutive rows (dy = 0, 1) -> full 6*Cin contraction blocks.
        T = [jnp.concatenate([S[r], S[r + 1]], axis=0)
             for r in range(th + 1)]                       # each [6*Cin, 2W]

        # 4) one matmul per (source row, parity); both parities of a source row
        #    go out with a single lane-dense store.
        for y in range(th):
            o0 = jnp.dot(w0, T[y], preferred_element_type=jnp.float32) + bias
            o1 = jnp.dot(w1, T[y + 1], preferred_element_type=jnp.float32) + bias
            o_ref[:, y, :] = jnp.concatenate([o0, o1], axis=-1).astype(o_ref.dtype)

    return kernel


def _pick_tco(cout, cin, esize):
    """Largest Cout block that divides Cout, obeys the (8 | full) sublane rule
    and keeps the (double-buffered) weight block modest in VMEM."""
    budget = 4 * 1024 * 1024
    cands = [d for d in range(1, cout + 1)
             if cout % d == 0 and (d % 8 == 0 or d == cout)]
    pick = cands[0]
    for d in cands:
        if 2 * (2 * d * 6 * cin) * esize <= budget:
            pick = max(pick, d)
    return pick


def _pick_th(h, cin, wp, esize):
    """Row-tile height: largest of {32,16,8} dividing H whose (double-buffered)
    input block fits a small VMEM budget; whole-height fallback otherwise."""
    cands = [t for t in (32, 16, 8) if h % t == 0]
    if not cands:
        return h, False
    for t in cands:
        if 2 * cin * t * wp * esize <= 6 * 1024 * 1024:
            return t, True
    return cands[-1], True


def upsample_forward(x_nchw, weight_oihw, bias, *, scale_factor=2, padding=1):
    """UpSample forward: nearest x2 interpolate, then Conv2d(3x3, padding=1).

    x_nchw      : [B, Cin, H, W]
    weight_oihw : [Cout, Cin, 3, 3]   (PyTorch Conv2d layout)
    bias        : [Cout]
    returns     : [B, Cout, 2H, 2W]   (NCHW, same as the PyTorch module)
    """
    assert int(scale_factor) == 2 and int(padding) == 1, (
        "kernel is specialized to scale_factor=2, padding=1 (module defaults)")
    # TODO(synk): general scale_factor/padding needs a different phase decomposition.

    B, Cin, H, W = x_nchw.shape
    Cout = weight_oihw.shape[0]
    Wp, Wd = W + 2, 2 * W
    dtype = x_nchw.dtype
    esize = jnp.dtype(dtype).itemsize

    th, has_halo = _pick_th(H, Cin, Wp, esize)

    # ---- cheap wrapper-side prep, all at ORIGINAL resolution -----------------
    # Halo path: bottom-pad by 7 extra zero rows so the 8-row halo block of the
    # last tile is always fully in bounds.
    pad_bot = 7 if has_halo else 1
    x_pad = jnp.pad(x_nchw, ((0, 0), (0, 0), (1, pad_bot), (1, 1)))

    # Row-parity combined conv weights with (dy, kw, cin) folded into one
    # contraction axis:
    #   py=0 output rows see original padded rows (g, g+1) with vertical-tap
    #        groups {kh=0} and {kh=1,2}; py=1 sees (g+1, g+2) with {0,1} / {2}.
    w0 = weight_oihw[:, :, 0, :]            # [Cout, Cin, 3(kw)]
    w1 = weight_oihw[:, :, 1, :]
    w2 = weight_oihw[:, :, 2, :]
    wc = jnp.stack([jnp.stack([w0, w1 + w2]),          # py = 0
                    jnp.stack([w0 + w1, w2])])         # py = 1
    # [2(py),2(dy),Cout,Cin,3(kw)] -> [2,Cout,2(dy),3(kw),Cin] -> [2,Cout,6*Cin]
    wcat = jnp.transpose(wc, (0, 2, 1, 4, 3)).reshape(2, Cout, 6 * Cin).astype(dtype)

    bias2 = bias.reshape(Cout, 1).astype(dtype)

    # 0/1 matrix realizing nearest-x2 upsample + conv padding along W:
    #   upsampled_padded_row[j] = padded_row[(j-1)//2 + 1],  j in [0, 2W+2)
    jj = jnp.arange(Wd + 2, dtype=jnp.int32)
    src = (jj - 1) // 2 + 1
    umat = (src[None, :] ==
            jnp.arange(Wp, dtype=jnp.int32)[:, None]).astype(dtype)   # [W+2, 2W+2]

    # ---- tiling ---------------------------------------------------------------
    tco = _pick_tco(Cout, Cin, esize)
    CO = Cout // tco
    if has_halo:
        T = H // th
        rows_in_main = th
    else:
        T = 1
        rows_in_main = H + 2
    grid = (B, CO, T)          # row-tile axis innermost: weights stay resident.

    common_specs = [
        pl.BlockSpec((2, tco, 6 * Cin), lambda b, co, t: (0, co, 0)),
        pl.BlockSpec((tco, 1), lambda b, co, t: (co, 0)),
        pl.BlockSpec((Wp, Wd + 2), lambda b, co, t: (0, 0)),
    ]
    if has_halo:
        in_arrays = (x_pad, x_pad, wcat, bias2, umat)
        in_specs = [
            # main rows of the tile
            pl.BlockSpec((None, Cin, th, Wp), lambda b, co, t: (b, 0, t, 0)),
            # 2-row halo below the tile, fetched as an 8-row-aligned block
            pl.BlockSpec((None, Cin, 8, Wp),
                         lambda b, co, t: (b, 0, (t + 1) * (th // 8), 0)),
        ] + common_specs
    else:
        in_arrays = (x_pad, wcat, bias2, umat)
        in_specs = [
            pl.BlockSpec((None, Cin, H + 2, Wp), lambda b, co, t: (b, 0, 0, 0)),
        ] + common_specs

    kernel = _make_kernel(th=th, rows_in_main=rows_in_main,
                          has_halo=has_halo, Wd=Wd)

    # Output is produced as [B, Cout, H, 2*2W] (both parities of a source row
    # adjacent along lanes); the final reshape to [B, Cout, 2H, 2W] is a free
    # contiguous reshape (no HBM pass).
    out4 = pl.pallas_call(
        kernel,
        out_shape=jax.ShapeDtypeStruct((B, Cout, H, 2 * Wd), dtype),
        grid=grid,
        in_specs=in_specs,
        out_specs=pl.BlockSpec((None, tco, th, 2 * Wd),
                               lambda b, co, t: (b, co, t, 0)),
        compiler_params=pltpu.CompilerParams(
            dimension_semantics=("parallel", "parallel", "parallel"),
            vmem_limit_bytes=48 * 1024 * 1024),
    )(*in_arrays)

    return out4.reshape(B, Cout, 2 * H, Wd)


if __name__ == "__main__":
    key = jax.random.PRNGKey(0)
    k_x, k_w, k_b = jax.random.split(key, 3)

    B, Cin, H, W = 2, 4, 16, 16
    Cout = Cin  # out_channels defaults to in_channels

    x = jax.random.normal(k_x, (B, Cin, H, W), dtype=jnp.float32)

    # Deterministic parameter init (mimics PyTorch Conv2d uniform bound 1/sqrt(fan_in))
    fan_in = Cin * 3 * 3
    bound = 1.0 / (fan_in ** 0.5)
    weight = jax.random.uniform(k_w, (Cout, Cin, 3, 3), jnp.float32, -bound, bound)
    bias = jax.random.uniform(k_b, (Cout,), jnp.float32, -bound, bound)

    fwd = jax.jit(upsample_forward)
    out = fwd(x, weight, bias)
    out = jax.block_until_ready(out)

    # pure-JAX reference: nearest x2 upsample + 3x3 conv (padding=1)
    x_up = jnp.repeat(jnp.repeat(x, 2, axis=2), 2, axis=3)
    ref = jax.lax.conv_general_dilated(
        x_up, weight, window_strides=(1, 1), padding=((1, 1), (1, 1)),
        dimension_numbers=("NCHW", "OIHW", "NCHW"),
        precision=jax.lax.Precision.HIGHEST,
    ) + bias.reshape(1, Cout, 1, 1)

    assert out.shape == (B, Cout, 2 * H, 2 * W), out.shape
    max_err = float(jnp.max(jnp.abs(out - ref)))
    assert jnp.allclose(out, ref, atol=2e-4, rtol=2e-4), max_err
    print("KERNEL_OK")
</pallas_src>

<mosaic_0001>
module attributes {stable_mosaic.version = 11 : i64} {
  func.func @kernel(%arg0: i32, %arg1: i32, %arg2: i32, %arg3: memref<1x4x16x18xf32, #tpu.memory_space<vmem>>, %arg4: memref<1x4x8x18xf32, #tpu.memory_space<vmem>>, %arg5: memref<2x4x24xf32, #tpu.memory_space<vmem>>, %arg6: memref<4x1xf32, #tpu.memory_space<vmem>>, %arg7: memref<18x34xf32, #tpu.memory_space<vmem>>, %arg8: memref<1x4x16x64xf32, #tpu.memory_space<vmem>>) attributes {dimension_semantics = [#tpu.dimension_semantics<parallel>, #tpu.dimension_semantics<parallel>, #tpu.dimension_semantics<parallel>], iteration_bounds = array<i64: 2, 1, 1>, scalar_prefetch = 0 : i64, scratch_operands = 0 : i64, tpu.core_type = #tpu.core_type<tc>, window_params = [{transform_indices = @transform_0, window_bounds = array<i64: 1, 4, 16, 18>}, {transform_indices = @transform_1, window_bounds = array<i64: 1, 4, 8, 18>}, {transform_indices = @transform_2, window_bounds = array<i64: 2, 4, 24>}, {transform_indices = @transform_3, window_bounds = array<i64: 4, 1>}, {pipeline_mode = #tpu.pipeline_mode<synchronous>, transform_indices = @transform_4, window_bounds = array<i64: 18, 34>}, {transform_indices = @transform_5, window_bounds = array<i64: 1, 4, 16, 64>}]} {
    %c0 = arith.constant 0 : index
    %c0_0 = arith.constant 0 : index
    %0 = vector.load %arg7[%c0, %c0_0] : memref<18x34xf32, #tpu.memory_space<vmem>>, vector<18x34xf32>
    %c0_1 = arith.constant 0 : index
    %c0_2 = arith.constant 0 : index
    %1 = vector.load %arg6[%c0_1, %c0_2] : memref<4x1xf32, #tpu.memory_space<vmem>>, vector<4x1xf32>
    %c0_3 = arith.constant 0 : index
    %c0_4 = arith.constant 0 : index
    %c0_5 = arith.constant 0 : index
    %2 = vector.load %arg5[%c0_3, %c0_4, %c0_5] : memref<2x4x24xf32, #tpu.memory_space<vmem>>, vector<1x4x24xf32>
    %3 = vector.shape_cast %2 : vector<1x4x24xf32> to vector<4x24xf32>
    %c1 = arith.constant 1 : index
    %c0_6 = arith.constant 0 : index
    %c0_7 = arith.constant 0 : index
    %4 = vector.load %arg5[%c1, %c0_6, %c0_7] : memref<2x4x24xf32, #tpu.memory_space<vmem>>, vector<1x4x24xf32>
    %5 = vector.shape_cast %4 : vector<1x4x24xf32> to vector<4x24xf32>
    %c0_8 = arith.constant 0 : index
    %c0_9 = arith.constant 0 : index
    %c0_10 = arith.constant 0 : index
    %c0_11 = arith.constant 0 : index
    %6 = vector.load %arg3[%c0_8, %c0_9, %c0_10, %c0_11] : memref<1x4x16x18xf32, #tpu.memory_space<vmem>>, vector<1x4x1x18xf32>
    %7 = vector.shape_cast %6 : vector<1x4x1x18xf32> to vector<4x18xf32>
    %cst = arith.constant dense<0.000000e+00> : vector<4x34xf32>
    %8 = tpu.matmul %7, %0, %cst {dimension_numbers = #tpu.dot_dimension_numbers<[1], [0], [0], [1], [0, 0, 1, 1], [], []>} : vector<4x18xf32>, vector<18x34xf32>, vector<4x34xf32> -> vector<4x34xf32>
    %c0_12 = arith.constant 0 : index
    %c0_13 = arith.constant 0 : index
    %c1_14 = arith.constant 1 : index
    %c0_15 = arith.constant 0 : index
    %9 = vector.load %arg3[%c0_12, %c0_13, %c1_14, %c0_15] : memref<1x4x16x18xf32, #tpu.memory_space<vmem>>, vector<1x4x1x18xf32>
    %10 = vector.shape_cast %9 : vector<1x4x1x18xf32> to vector<4x18xf32>
    %cst_16 = arith.constant dense<0.000000e+00> : vector<4x34xf32>
    %11 = tpu.matmul %10, %0, %cst_16 {dimension_numbers = #tpu.dot_dimension_numbers<[1], [0], [0], [1], [0, 0, 1, 1], [], []>} : vector<4x18xf32>, vector<18x34xf32>, vector<4x34xf32> -> vector<4x34xf32>
    %c0_17 = arith.constant 0 : index
    %c0_18 = arith.constant 0 : index
    %c2 = arith.constant 2 : index
    %c0_19 = arith.constant 0 : index
    %12 = vector.load %arg3[%c0_17, %c0_18, %c2, %c0_19] : memref<1x4x16x18xf32, #tpu.memory_space<vmem>>, vector<1x4x1x18xf32>
    %13 = vector.shape_cast %12 : vector<1x4x1x18xf32> to vector<4x18xf32>
    %cst_20 = arith.constant dense<0.000000e+00> : vector<4x34xf32>
    %14 = tpu.matmul %13, %0, %cst_20 {dimension_numbers = #tpu.dot_dimension_numbers<[1], [0], [0], [1], [0, 0, 1, 1], [], []>} : vector<4x18xf32>, vector<18x34xf32>, vector<4x34xf32> -> vector<4x34xf32>
    %c0_21 = arith.constant 0 : index
    %c0_22 = arith.constant 0 : index
    %c3 = arith.constant 3 : index
    %c0_23 = arith.constant 0 : index
    %15 = vector.load %arg3[%c0_21, %c0_22, %c3, %c0_23] : memref<1x4x16x18xf32, #tpu.memory_space<vmem>>, vector<1x4x1x18xf32>
    %16 = vector.shape_cast %15 : vector<1x4x1x18xf32> to vector<4x18xf32>
    %cst_24 = arith.constant dense<0.000000e+00> : vector<4x34xf32>
    %17 = tpu.matmul %16, %0, %cst_24 {dimension_numbers = #tpu.dot_dimension_numbers<[1], [0], [0], [1], [0, 0, 1, 1], [], []>} : vector<4x18xf32>, vector<18x34xf32>, vector<4x34xf32> -> vector<4x34xf32>
    %c0_25 = arith.constant 0 : index
    %c0_26 = arith.constant 0 : index
    %c4 = arith.constant 4 : index
    %c0_27 = arith.constant 0 : index
    %18 = vector.load %arg3[%c0_25, %c0_26, %c4, %c0_27] : memref<1x4x16x18xf32, #tpu.memory_space<vmem>>, vector<1x4x1x18xf32>
    %19 = vector.shape_cast %18 : vector<1x4x1x18xf32> to vector<4x18xf32>
    %cst_28 = arith.constant dense<0.000000e+00> : vector<4x34xf32>
    %20 = tpu.matmul %19, %0, %cst_28 {dimension_numbers = #tpu.dot_dimension_numbers<[1], [0], [0], [1], [0, 0, 1, 1], [], []>} : vector<4x18xf32>, vector<18x34xf32>, vector<4x34xf32> -> vector<4x34xf32>
    %c0_29 = arith.constant 0 : index
    %c0_30 = arith.constant 0 : index
    %c5 = arith.constant 5 : index
    %c0_31 = arith.constant 0 : index
    %21 = vector.load %arg3[%c0_29, %c0_30, %c5, %c0_31] : memref<1x4x16x18xf32, #tpu.memory_space<vmem>>, vector<1x4x1x18xf32>
    %22 = vector.shape_cast %21 : vector<1x4x1x18xf32> to vector<4x18xf32>
    %cst_32 = arith.constant dense<0.000000e+00> : vector<4x34xf32>
    %23 = tpu.matmul %22, %0, %cst_32 {dimension_numbers = #tpu.dot_dimension_numbers<[1], [0], [0], [1], [0, 0, 1, 1], [], []>} : vector<4x18xf32>, vector<18x34xf32>, vector<4x34xf32> -> vector<4x34xf32>
    %c0_33 = arith.constant 0 : index
    %c0_34 = arith.constant 0 : index
    %c6 = arith.constant 6 : index
    %c0_35 = arith.constant 0 : index
    %24 = vector.load %arg3[%c0_33, %c0_34, %c6, %c0_35] : memref<1x4x16x18xf32, #tpu.memory_space<vmem>>, vector<1x4x1x18xf32>
    %25 = vector.shape_cast %24 : vector<1x4x1x18xf32> to vector<4x18xf32>
    %cst_36 = arith.constant dense<0.000000e+00> : vector<4x34xf32>
    %26 = tpu.matmul %25, %0, %cst_36 {dimension_numbers = #tpu.dot_dimension_numbers<[1], [0], [0], [1], [0, 0, 1, 1], [], []>} : vector<4x18xf32>, vector<18x34xf32>, vector<4x34xf32> -> vector<4x34xf32>
    %c0_37 = arith.constant 0 : index
    %c0_38 = arith.constant 0 : index
    %c7 = arith.constant 7 : index
    %c0_39 = arith.constant 0 : index
    %27 = vector.load %arg3[%c0_37, %c0_38, %c7, %c0_39] : memref<1x4x16x18xf32, #tpu.memory_space<vmem>>, vector<1x4x1x18xf32>
    %28 = vector.shape_cast %27 : vector<1x4x1x18xf32> to vector<4x18xf32>
    %cst_40 = arith.constant dense<0.000000e+00> : vector<4x34xf32>
    %29 = tpu.matmul %28, %0, %cst_40 {dimension_numbers = #tpu.dot_dimension_numbers<[1], [0], [0], [1], [0, 0, 1, 1], [], []>} : vector<4x18xf32>, vector<18x34xf32>, vector<4x34xf32> -> vector<4x34xf32>
    %c0_41 = arith.constant 0 : index
    %c0_42 = arith.constant 0 : index
    %c8 = arith.constant 8 : index
    %c0_43 = arith.constant 0 : index
    %30 = vector.load %arg3[%c0_41, %c0_42, %c8, %c0_43] : memref<1x4x16x18xf32, #tpu.memory_space<vmem>>, vector<1x4x1x18xf32>
    %31 = vector.shape_cast %30 : vector<1x4x1x18xf32> to vector<4x18xf32>
    %cst_44 = arith.constant dense<0.000000e+00> : vector<4x34xf32>
    %32 = tpu.matmul %31, %0, %cst_44 {dimension_numbers = #tpu.dot_dimension_numbers<[1], [0], [0], [1], [0, 0, 1, 1], [], []>} : vector<4x18xf32>, vector<18x34xf32>, vector<4x34xf32> -> vector<4x34xf32>
    %c0_45 = arith.constant 0 : index
    %c0_46 = arith.constant 0 : index
    %c9 = arith.constant 9 : index
    %c0_47 = arith.constant 0 : index
    %33 = vector.load %arg3[%c0_45, %c0_46, %c9, %c0_47] : memref<1x4x16x18xf32, #tpu.memory_space<vmem>>, vector<1x4x1x18xf32>
    %34 = vector.shape_cast %33 : vector<1x4x1x18xf32> to vector<4x18xf32>
    %cst_48 = arith.constant dense<0.000000e+00> : vector<4x34xf32>
    %35 = tpu.matmul %34, %0, %cst_48 {dimension_numbers = #tpu.dot_dimension_numbers<[1], [0], [0], [1], [0, 0, 1, 1], [], []>} : vector<4x18xf32>, vector<18x34xf32>, vector<4x34xf32> -> vector<4x34xf32>
    %c0_49 = arith.constant 0 : index
    %c0_50 = arith.constant 0 : index
    %c10 = arith.constant 10 : index
    %c0_51 = arith.constant 0 : index
    %36 = vector.load %arg3[%c0_49, %c0_50, %c10, %c0_51] : memref<1x4x16x18xf32, #tpu.memory_space<vmem>>, vector<1x4x1x18xf32>
    %37 = vector.shape_cast %36 : vector<1x4x1x18xf32> to vector<4x18xf32>
    %cst_52 = arith.constant dense<0.000000e+00> : vector<4x34xf32>
    %38 = tpu.matmul %37, %0, %cst_52 {dimension_numbers = #tpu.dot_dimension_numbers<[1], [0], [0], [1], [0, 0, 1, 1], [], []>} : vector<4x18xf32>, vector<18x34xf32>, vector<4x34xf32> -> vector<4x34xf32>
    %c0_53 = arith.constant 0 : index
    %c0_54 = arith.constant 0 : index
    %c11 = arith.constant 11 : index
    %c0_55 = arith.constant 0 : index
    %39 = vector.load %arg3[%c0_53, %c0_54, %c11, %c0_55] : memref<1x4x16x18xf32, #tpu.memory_space<vmem>>, vector<1x4x1x18xf32>
    %40 = vector.shape_cast %39 : vector<1x4x1x18xf32> to vector<4x18xf32>
    %cst_56 = arith.constant dense<0.000000e+00> : vector<4x34xf32>
    %41 = tpu.matmul %40, %0, %cst_56 {dimension_numbers = #tpu.dot_dimension_numbers<[1], [0], [0], [1], [0, 0, 1, 1], [], []>} : vector<4x18xf32>, vector<18x34xf32>, vector<4x34xf32> -> vector<4x34xf32>
    %c0_57 = arith.constant 0 : index
    %c0_58 = arith.constant 0 : index
    %c12 = arith.constant 12 : index
    %c0_59 = arith.constant 0 : index
    %42 = vector.load %arg3[%c0_57, %c0_58, %c12, %c0_59] : memref<1x4x16x18xf32, #tpu.memory_space<vmem>>, vector<1x4x1x18xf32>
    %43 = vector.shape_cast %42 : vector<1x4x1x18xf32> to vector<4x18xf32>
    %cst_60 = arith.constant dense<0.000000e+00> : vector<4x34xf32>
    %44 = tpu.matmul %43, %0, %cst_60 {dimension_numbers = #tpu.dot_dimension_numbers<[1], [0], [0], [1], [0, 0, 1, 1], [], []>} : vector<4x18xf32>, vector<18x34xf32>, vector<4x34xf32> -> vector<4x34xf32>
    %c0_61 = arith.constant 0 : index
    %c0_62 = arith.constant 0 : index
    %c13 = arith.constant 13 : index
    %c0_63 = arith.constant 0 : index
    %45 = vector.load %arg3[%c0_61, %c0_62, %c13, %c0_63] : memref<1x4x16x18xf32, #tpu.memory_space<vmem>>, vector<1x4x1x18xf32>
    %46 = vector.shape_cast %45 : vector<1x4x1x18xf32> to vector<4x18xf32>
    %cst_64 = arith.constant dense<0.000000e+00> : vector<4x34xf32>
    %47 = tpu.matmul %46, %0, %cst_64 {dimension_numbers = #tpu.dot_dimension_numbers<[1], [0], [0], [1], [0, 0, 1, 1], [], []>} : vector<4x18xf32>, vector<18x34xf32>, vector<4x34xf32> -> vector<4x34xf32>
    %c0_65 = arith.constant 0 : index
    %c0_66 = arith.constant 0 : index
    %c14 = arith.constant 14 : index
    %c0_67 = arith.constant 0 : index
    %48 = vector.load %arg3[%c0_65, %c0_66, %c14, %c0_67] : memref<1x4x16x18xf32, #tpu.memory_space<vmem>>, vector<1x4x1x18xf32>
    %49 = vector.shape_cast %48 : vector<1x4x1x18xf32> to vector<4x18xf32>
    %cst_68 = arith.constant dense<0.000000e+00> : vector<4x34xf32>
    %50 = tpu.matmul %49, %0, %cst_68 {dimension_numbers = #tpu.dot_dimension_numbers<[1], [0], [0], [1], [0, 0, 1, 1], [], []>} : vector<4x18xf32>, vector<18x34xf32>, vector<4x34xf32> -> vector<4x34xf32>
    %c0_69 = arith.constant 0 : index
    %c0_70 = arith.constant 0 : index
    %c15 = arith.constant 15 : index
    %c0_71 = arith.constant 0 : index
    %51 = vector.load %arg3[%c0_69, %c0_70, %c15, %c0_71] : memref<1x4x16x18xf32, #tpu.memory_space<vmem>>, vector<1x4x1x18xf32>
    %52 = vector.shape_cast %51 : vector<1x4x1x18xf32> to vector<4x18xf32>
    %cst_72 = arith.constant dense<0.000000e+00> : vector<4x34xf32>
    %53 = tpu.matmul %52, %0, %cst_72 {dimension_numbers = #tpu.dot_dimension_numbers<[1], [0], [0], [1], [0, 0, 1, 1], [], []>} : vector<4x18xf32>, vector<18x34xf32>, vector<4x34xf32> -> vector<4x34xf32>
    %c0_73 = arith.constant 0 : index
    %c0_74 = arith.constant 0 : index
    %c0_75 = arith.constant 0 : index
    %c0_76 = arith.constant 0 : index
    %54 = vector.load %arg4[%c0_73, %c0_74, %c0_75, %c0_76] : memref<1x4x8x18xf32, #tpu.memory_space<vmem>>, vector<1x4x1x18xf32>
    %55 = vector.shape_cast %54 : vector<1x4x1x18xf32> to vector<4x18xf32>
    %cst_77 = arith.constant dense<0.000000e+00> : vector<4x34xf32>
    %56 = tpu.matmul %55, %0, %cst_77 {dimension_numbers = #tpu.dot_dimension_numbers<[1], [0], [0], [1], [0, 0, 1, 1], [], []>} : vector<4x18xf32>, vector<18x34xf32>, vector<4x34xf32> -> vector<4x34xf32>
    %c0_78 = arith.constant 0 : index
    %c0_79 = arith.constant 0 : index
    %c1_80 = arith.constant 1 : index
    %c0_81 = arith.constant 0 : index
    %57 = vector.load %arg4[%c0_78, %c0_79, %c1_80, %c0_81] : memref<1x4x8x18xf32, #tpu.memory_space<vmem>>, vector<1x4x1x18xf32>
    %58 = vector.shape_cast %57 : vector<1x4x1x18xf32> to vector<4x18xf32>
    %cst_82 = arith.constant dense<0.000000e+00> : vector<4x34xf32>
    %59 = tpu.matmul %58, %0, %cst_82 {dimension_numbers = #tpu.dot_dimension_numbers<[1], [0], [0], [1], [0, 0, 1, 1], [], []>} : vector<4x18xf32>, vector<18x34xf32>, vector<4x34xf32> -> vector<4x34xf32>
    %60 = vector.extract_strided_slice %8 {offsets = [0, 0], sizes = [4, 32], strides = [1, 1]} : vector<4x34xf32> to vector<4x32xf32>
    %61 = vector.extract_strided_slice %8 {offsets = [0, 1], sizes = [4, 32], strides = [1, 1]} : vector<4x34xf32> to vector<4x32xf32>
    %62 = vector.extract_strided_slice %8 {offsets = [0, 2], sizes = [4, 32], strides = [1, 1]} : vector<4x34xf32> to vector<4x32xf32>
    %63 = tpu.concatenate %60, %61, %62 in 0 : vector<4x32xf32>, vector<4x32xf32>, vector<4x32xf32> -> vector<12x32xf32>
    %64 = vector.extract_strided_slice %11 {offsets = [0, 0], sizes = [4, 32], strides = [1, 1]} : vector<4x34xf32> to vector<4x32xf32>
    %65 = vector.extract_strided_slice %11 {offsets = [0, 1], sizes = [4, 32], strides = [1, 1]} : vector<4x34xf32> to vector<4x32xf32>
    %66 = vector.extract_strided_slice %11 {offsets = [0, 2], sizes = [4, 32], strides = [1, 1]} : vector<4x34xf32> to vector<4x32xf32>
    %67 = tpu.concatenate %64, %65, %66 in 0 : vector<4x32xf32>, vector<4x32xf32>, vector<4x32xf32> -> vector<12x32xf32>
    %68 = vector.extract_strided_slice %14 {offsets = [0, 0], sizes = [4, 32], strides = [1, 1]} : vector<4x34xf32> to vector<4x32xf32>
    %69 = vector.extract_strided_slice %14 {offsets = [0, 1], sizes = [4, 32], strides = [1, 1]} : vector<4x34xf32> to vector<4x32xf32>
    %70 = vector.extract_strided_slice %14 {offsets = [0, 2], sizes = [4, 32], strides = [1, 1]} : vector<4x34xf32> to vector<4x32xf32>
    %71 = tpu.concatenate %68, %69, %70 in 0 : vector<4x32xf32>, vector<4x32xf32>, vector<4x32xf32> -> vector<12x32xf32>
    %72 = vector.extract_strided_slice %17 {offsets = [0, 0], sizes = [4, 32], strides = [1, 1]} : vector<4x34xf32> to vector<4x32xf32>
    %73 = vector.extract_strided_slice %17 {offsets = [0, 1], sizes = [4, 32], strides = [1, 1]} : vector<4x34xf32> to vector<4x32xf32>
    %74 = vector.extract_strided_slice %17 {offsets = [0, 2], sizes = [4, 32], strides = [1, 1]} : vector<4x34xf32> to vector<4x32xf32>
    %75 = tpu.concatenate %72, %73, %74 in 0 : vector<4x32xf32>, vector<4x32xf32>, vector<4x32xf32> -> vector<12x32xf32>
    %76 = vector.extract_strided_slice %20 {offsets = [0, 0], sizes = [4, 32], strides = [1, 1]} : vector<4x34xf32> to vector<4x32xf32>
    %77 = vector.extract_strided_slice %20 {offsets = [0, 1], sizes = [4, 32], strides = [1, 1]} : vector<4x34xf32> to vector<4x32xf32>
    %78 = vector.extract_strided_slice %20 {offsets = [0, 2], sizes = [4, 32], strides = [1, 1]} : vector<4x34xf32> to vector<4x32xf32>
    %79 = tpu.concatenate %76, %77, %78 in 0 : vector<4x32xf32>, vector<4x32xf32>, vector<4x32xf32> -> vector<12x32xf32>
    %80 = vector.extract_strided_slice %23 {offsets = [0, 0], sizes = [4, 32], strides = [1, 1]} : vector<4x34xf32> to vector<4x32xf32>
    %81 = vector.extract_strided_slice %23 {offsets = [0, 1], sizes = [4, 32], strides = [1, 1]} : vector<4x34xf32> to vector<4x32xf32>
    %82 = vector.extract_strided_slice %23 {offsets = [0, 2], sizes = [4, 32], strides = [1, 1]} : vector<4x34xf32> to vector<4x32xf32>
    %83 = tpu.concatenate %80, %81, %82 in 0 : vector<4x32xf32>, vector<4x32xf32>, vector<4x32xf32> -> vector<12x32xf32>
    %84 = vector.extract_strided_slice %26 {offsets = [0, 0], sizes = [4, 32], strides = [1, 1]} : vector<4x34xf32> to vector<4x32xf32>
    %85 = vector.extract_strided_slice %26 {offsets = [0, 1], sizes = [4, 32], strides = [1, 1]} : vector<4x34xf32> to vector<4x32xf32>
    %86 = vector.extract_strided_slice %26 {offsets = [0, 2], sizes = [4, 32], strides = [1, 1]} : vector<4x34xf32> to vector<4x32xf32>
    %87 = tpu.concatenate %84, %85, %86 in 0 : vector<4x32xf32>, vector<4x32xf32>, vector<4x32xf32> -> vector<12x32xf32>
    %88 = vector.extract_strided_slice %29 {offsets = [0, 0], sizes = [4, 32], strides = [1, 1]} : vector<4x34xf32> to vector<4x32xf32>
    %89 = vector.extract_strided_slice %29 {offsets = [0, 1], sizes = [4, 32], strides = [1, 1]} : vector<4x34xf32> to vector<4x32xf32>
    %90 = vector.extract_strided_slice %29 {offsets = [0, 2], sizes = [4, 32], strides = [1, 1]} : vector<4x34xf32> to vector<4x32xf32>
    %91 = tpu.concatenate %88, %89, %90 in 0 : vector<4x32xf32>, vector<4x32xf32>, vector<4x32xf32> -> vector<12x32xf32>
    %92 = vector.extract_strided_slice %32 {offsets = [0, 0], sizes = [4, 32], strides = [1, 1]} : vector<4x34xf32> to vector<4x32xf32>
    %93 = vector.extract_strided_slice %32 {offsets = [0, 1], sizes = [4, 32], strides = [1, 1]} : vector<4x34xf32> to vector<4x32xf32>
    %94 = vector.extract_strided_slice %32 {offsets = [0, 2], sizes = [4, 32], strides = [1, 1]} : vector<4x34xf32> to vector<4x32xf32>
    %95 = tpu.concatenate %92, %93, %94 in 0 : vector<4x32xf32>, vector<4x32xf32>, vector<4x32xf32> -> vector<12x32xf32>
    %96 = vector.extract_strided_slice %35 {offsets = [0, 0], sizes = [4, 32], strides = [1, 1]} : vector<4x34xf32> to vector<4x32xf32>
    %97 = vector.extract_strided_slice %35 {offsets = [0, 1], sizes = [4, 32], strides = [1, 1]} : vector<4x34xf32> to vector<4x32xf32>
    %98 = vector.extract_strided_slice %35 {offsets = [0, 2], sizes = [4, 32], strides = [1, 1]} : vector<4x34xf32> to vector<4x32xf32>
    %99 = tpu.concatenate %96, %97, %98 in 0 : vector<4x32xf32>, vector<4x32xf32>, vector<4x32xf32> -> vector<12x32xf32>
    %100 = vector.extract_strided_slice %38 {offsets = [0, 0], sizes = [4, 32], strides = [1, 1]} : vector<4x34xf32> to vector<4x32xf32>
    %101 = vector.extract_strided_slice %38 {offsets = [0, 1], sizes = [4, 32], strides = [1, 1]} : vector<4x34xf32> to vector<4x32xf32>
    %102 = vector.extract_strided_slice %38 {offsets = [0, 2], sizes = [4, 32], strides = [1, 1]} : vector<4x34xf32> to vector<4x32xf32>
    %103 = tpu.concatenate %100, %101, %102 in 0 : vector<4x32xf32>, vector<4x32xf32>, vector<4x32xf32> -> vector<12x32xf32>
    %104 = vector.extract_strided_slice %41 {offsets = [0, 0], sizes = [4, 32], strides = [1, 1]} : vector<4x34xf32> to vector<4x32xf32>
    %105 = vector.extract_strided_slice %41 {offsets = [0, 1], sizes = [4, 32], strides = [1, 1]} : vector<4x34xf32> to vector<4x32xf32>
    %106 = vector.extract_strided_slice %41 {offsets = [0, 2], sizes = [4, 32], strides = [1, 1]} : vector<4x34xf32> to vector<4x32xf32>
    %107 = tpu.concatenate %104, %105, %106 in 0 : vector<4x32xf32>, vector<4x32xf32>, vector<4x32xf32> -> vector<12x32xf32>
    %108 = vector.extract_strided_slice %44 {offsets = [0, 0], sizes = [4, 32], strides = [1, 1]} : vector<4x34xf32> to vector<4x32xf32>
    %109 = vector.extract_strided_slice %44 {offsets = [0, 1], sizes = [4, 32], strides = [1, 1]} : vector<4x34xf32> to vector<4x32xf32>
    %110 = vector.extract_strided_slice %44 {offsets = [0, 2], sizes = [4, 32], strides = [1, 1]} : vector<4x34xf32> to vector<4x32xf32>
    %111 = tpu.concatenate %108, %109, %110 in 0 : vector<4x32xf32>, vector<4x32xf32>, vector<4x32xf32> -> vector<12x32xf32>
    %112 = vector.extract_strided_slice %47 {offsets = [0, 0], sizes = [4, 32], strides = [1, 1]} : vector<4x34xf32> to vector<4x32xf32>
    %113 = vector.extract_strided_slice %47 {offsets = [0, 1], sizes = [4, 32], strides = [1, 1]} : vector<4x34xf32> to vector<4x32xf32>
    %114 = vector.extract_strided_slice %47 {offsets = [0, 2], sizes = [4, 32], strides = [1, 1]} : vector<4x34xf32> to vector<4x32xf32>
    %115 = tpu.concatenate %112, %113, %114 in 0 : vector<4x32xf32>, vector<4x32xf32>, vector<4x32xf32> -> vector<12x32xf32>
    %116 = vector.extract_strided_slice %50 {offsets = [0, 0], sizes = [4, 32], strides = [1, 1]} : vector<4x34xf32> to vector<4x32xf32>
    %117 = vector.extract_strided_slice %50 {offsets = [0, 1], sizes = [4, 32], strides = [1, 1]} : vector<4x34xf32> to vector<4x32xf32>
    %118 = vector.extract_strided_slice %50 {offsets = [0, 2], sizes = [4, 32], strides = [1, 1]} : vector<4x34xf32> to vector<4x32xf32>
    %119 = tpu.concatenate %116, %117, %118 in 0 : vector<4x32xf32>, vector<4x32xf32>, vector<4x32xf32> -> vector<12x32xf32>
    %120 = vector.extract_strided_slice %53 {offsets = [0, 0], sizes = [4, 32], strides = [1, 1]} : vector<4x34xf32> to vector<4x32xf32>
    %121 = vector.extract_strided_slice %53 {offsets = [0, 1], sizes = [4, 32], strides = [1, 1]} : vector<4x34xf32> to vector<4x32xf32>
    %122 = vector.extract_strided_slice %53 {offsets = [0, 2], sizes = [4, 32], strides = [1, 1]} : vector<4x34xf32> to vector<4x32xf32>
    %123 = tpu.concatenate %120, %121, %122 in 0 : vector<4x32xf32>, vector<4x32xf32>, vector<4x32xf32> -> vector<12x32xf32>
    %124 = vector.extract_strided_slice %56 {offsets = [0, 0], sizes = [4, 32], strides = [1, 1]} : vector<4x34xf32> to vector<4x32xf32>
    %125 = vector.extract_strided_slice %56 {offsets = [0, 1], sizes = [4, 32], strides = [1, 1]} : vector<4x34xf32> to vector<4x32xf32>
    %126 = vector.extract_strided_slice %56 {offsets = [0, 2], sizes = [4, 32], strides = [1, 1]} : vector<4x34xf32> to vector<4x32xf32>
    %127 = tpu.concatenate %124, %125, %126 in 0 : vector<4x32xf32>, vector<4x32xf32>, vector<4x32xf32> -> vector<12x32xf32>
    %128 = vector.extract_strided_slice %59 {offsets = [0, 0], sizes = [4, 32], strides = [1, 1]} : vector<4x34xf32> to vector<4x32xf32>
    %129 = vector.extract_strided_slice %59 {offsets = [0, 1], sizes = [4, 32], strides = [1, 1]} : vector<4x34xf32> to vector<4x32xf32>
    %130 = vector.extract_strided_slice %59 {offsets = [0, 2], sizes = [4, 32], strides = [1, 1]} : vector<4x34xf32> to vector<4x32xf32>
    %131 = tpu.concatenate %128, %129, %130 in 0 : vector<4x32xf32>, vector<4x32xf32>, vector<4x32xf32> -> vector<12x32xf32>
    %132 = tpu.concatenate %63, %67 in 0 : vector<12x32xf32>, vector<12x32xf32> -> vector<24x32xf32>
    %133 = tpu.concatenate %67, %71 in 0 : vector<12x32xf32>, vector<12x32xf32> -> vector<24x32xf32>
    %134 = tpu.concatenate %71, %75 in 0 : vector<12x32xf32>, vector<12x32xf32> -> vector<24x32xf32>
    %135 = tpu.concatenate %75, %79 in 0 : vector<12x32xf32>, vector<12x32xf32> -> vector<24x32xf32>
    %136 = tpu.concatenate %79, %83 in 0 : vector<12x32xf32>, vector<12x32xf32> -> vector<24x32xf32>
    %137 = tpu.concatenate %83, %87 in 0 : vector<12x32xf32>, vector<12x32xf32> -> vector<24x32xf32>
    %138 = tpu.concatenate %87, %91 in 0 : vector<12x32xf32>, vector<12x32xf32> -> vector<24x32xf32>
    %139 = tpu.concatenate %91, %95 in 0 : vector<12x32xf32>, vector<12x32xf32> -> vector<24x32xf32>
    %140 = tpu.concatenate %95, %99 in 0 : vector<12x32xf32>, vector<12x32xf32> -> vector<24x32xf32>
    %141 = tpu.concatenate %99, %103 in 0 : vector<12x32xf32>, vector<12x32xf32> -> vector<24x32xf32>
    %142 = tpu.concatenate %103, %107 in 0 : vector<12x32xf32>, vector<12x32xf32> -> vector<24x32xf32>
    %143 = tpu.concatenate %107, %111 in 0 : vector<12x32xf32>, vector<12x32xf32> -> vector<24x32xf32>
    %144 = tpu.concatenate %111, %115 in 0 : vector<12x32xf32>, vector<12x32xf32> -> vector<24x32xf32>
    %145 = tpu.concatenate %115, %119 in 0 : vector<12x32xf32>, vector<12x32xf32> -> vector<24x32xf32>
    %146 = tpu.concatenate %119, %123 in 0 : vector<12x32xf32>, vector<12x32xf32> -> vector<24x32xf32>
    %147 = tpu.concatenate %123, %127 in 0 : vector<12x32xf32>, vector<12x32xf32> -> vector<24x32xf32>
    %148 = tpu.concatenate %127, %131 in 0 : vector<12x32xf32>, vector<12x32xf32> -> vector<24x32xf32>
    %cst_83 = arith.constant dense<0.000000e+00> : vector<4x32xf32>
    %149 = tpu.matmul %3, %132, %cst_83 {dimension_numbers = #tpu.dot_dimension_numbers<[1], [0], [0], [1], [0, 0, 1, 1], [], []>} : vector<4x24xf32>, vector<24x32xf32>, vector<4x32xf32> -> vector<4x32xf32>
    %150 = vector.broadcast %1 : vector<4x1xf32> to vector<4x32xf32>
    %151 = arith.addf %149, %150 : vector<4x32xf32>
    %cst_84 = arith.constant dense<0.000000e+00> : vector<4x32xf32>
    %152 = tpu.matmul %5, %133, %cst_84 {dimension_numbers = #tpu.dot_dimension_numbers<[1], [0], [0], [1], [0, 0, 1, 1], [], []>} : vector<4x24xf32>, vector<24x32xf32>, vector<4x32xf32> -> vector<4x32xf32>
    %153 = vector.broadcast %1 : vector<4x1xf32> to vector<4x32xf32>
    %154 = arith.addf %152, %153 : vector<4x32xf32>
    %155 = tpu.concatenate %151, %154 in 1 : vector<4x32xf32>, vector<4x32xf32> -> vector<4x64xf32>
    %c0_85 = arith.constant 0 : index
    %c0_86 = arith.constant 0 : index
    %c0_87 = arith.constant 0 : index
    %c0_88 = arith.constant 0 : index
    %156 = vector.load %arg8[%c0_85, %c0_86, %c0_87, %c0_88] : memref<1x4x16x64xf32, #tpu.memory_space<vmem>>, vector<1x4x1x64xf32>
    %157 = vector.shape_cast %156 : vector<1x4x1x64xf32> to vector<4x64xf32>
    %158 = vector.shape_cast %155 : vector<4x64xf32> to vector<1x4x1x64xf32>
    tpu.vector_store %arg8[%c0_85, %c0_86, %c0_87, %c0_88], %158 {strides = array<i32>} : memref<1x4x16x64xf32, #tpu.memory_space<vmem>>, vector<1x4x1x64xf32>,
    %cst_89 = arith.constant dense<0.000000e+00> : vector<4x32xf32>
    %159 = tpu.matmul %3, %133, %cst_89 {dimension_numbers = #tpu.dot_dimension_numbers<[1], [0], [0], [1], [0, 0, 1, 1], [], []>} : vector<4x24xf32>, vector<24x32xf32>, vector<4x32xf32> -> vector<4x32xf32>
    %160 = vector.broadcast %1 : vector<4x1xf32> to vector<4x32xf32>
    %161 = arith.addf %159, %160 : vector<4x32xf32>
    %cst_90 = arith.constant dense<0.000000e+00> : vector<4x32xf32>
    %162 = tpu.matmul %5, %134, %cst_90 {dimension_numbers = #tpu.dot_dimension_numbers<[1], [0], [0], [1], [0, 0, 1, 1], [], []>} : vector<4x24xf32>, vector<24x32xf32>, vector<4x32xf32> -> vector<4x32xf32>
    %163 = vector.broadcast %1 : vector<4x1xf32> to vector<4x32xf32>
    %164 = arith.addf %162, %163 : vector<4x32xf32>
    %165 = tpu.concatenate %161, %164 in 1 : vector<4x32xf32>, vector<4x32xf32> -> vector<4x64xf32>
    %c0_91 = arith.constant 0 : index
    %c0_92 = arith.constant 0 : index
    %c1_93 = arith.constant 1 : index
    %c0_94 = arith.constant 0 : index
    %166 = vector.load %arg8[%c0_91, %c0_92, %c1_93, %c0_94] : memref<1x4x16x64xf32, #tpu.memory_space<vmem>>, vector<1x4x1x64xf32>
    %167 = vector.shape_cast %166 : vector<1x4x1x64xf32> to vector<4x64xf32>
    %168 = vector.shape_cast %165 : vector<4x64xf32> to vector<1x4x1x64xf32>
    tpu.vector_store %arg8[%c0_91, %c0_92, %c1_93, %c0_94], %168 {strides = array<i32>} : memref<1x4x16x64xf32, #tpu.memory_space<vmem>>, vector<1x4x1x64xf32>,
    %cst_95 = arith.constant dense<0.000000e+00> : vector<4x32xf32>
    %169 = tpu.matmul %3, %134, %cst_95 {dimension_numbers = #tpu.dot_dimension_numbers<[1], [0], [0], [1], [0, 0, 1, 1], [], []>} : vector<4x24xf32>, vector<24x32xf32>, vector<4x32xf32> -> vector<4x32xf32>
    %170 = vector.broadcast %1 : vector<4x1xf32> to vector<4x32xf32>
    %171 = arith.addf %169, %170 : vector<4x32xf32>
    %cst_96 = arith.constant dense<0.000000e+00> : vector<4x32xf32>
    %172 = tpu.matmul %5, %135, %cst_96 {dimension_numbers = #tpu.dot_dimension_numbers<[1], [0], [0], [1], [0, 0, 1, 1], [], []>} : vector<4x24xf32>, vector<24x32xf32>, vector<4x32xf32> -> vector<4x32xf32>
    %173 = vector.broadcast %1 : vector<4x1xf32> to vector<4x32xf32>
    %174 = arith.addf %172, %173 : vector<4x32xf32>
    %175 = tpu.concatenate %171, %174 in 1 : vector<4x32xf32>, vector<4x32xf32> -> vector<4x64xf32>
    %c0_97 = arith.constant 0 : index
    %c0_98 = arith.constant 0 : index
    %c2_99 = arith.constant 2 : index
    %c0_100 = arith.constant 0 : index
    %176 = vector.load %arg8[%c0_97, %c0_98, %c2_99, %c0_100] : memref<1x4x16x64xf32, #tpu.memory_space<vmem>>, vector<1x4x1x64xf32>
    %177 = vector.shape_cast %176 : vector<1x4x1x64xf32> to vector<4x64xf32>
    %178 = vector.shape_cast %175 : vector<4x64xf32> to vector<1x4x1x64xf32>
    tpu.vector_store %arg8[%c0_97, %c0_98, %c2_99, %c0_100], %178 {strides = array<i32>} : memref<1x4x16x64xf32, #tpu.memory_space<vmem>>, vector<1x4x1x64xf32>,
    %cst_101 = arith.constant dense<0.000000e+00> : vector<4x32xf32>
    %179 = tpu.matmul %3, %135, %cst_101 {dimension_numbers = #tpu.dot_dimension_numbers<[1], [0], [0], [1], [0, 0, 1, 1], [], []>} : vector<4x24xf32>, vector<24x32xf32>, vector<4x32xf32> -> vector<4x32xf32>
    %180 = vector.broadcast %1 : vector<4x1xf32> to vector<4x32xf32>
    %181 = arith.addf %179, %180 : vector<4x32xf32>
    %cst_102 = arith.constant dense<0.000000e+00> : vector<4x32xf32>
    %182 = tpu.matmul %5, %136, %cst_102 {dimension_numbers = #tpu.dot_dimension_numbers<[1], [0], [0], [1], [0, 0, 1, 1], [], []>} : vector<4x24xf32>, vector<24x32xf32>, vector<4x32xf32> -> vector<4x32xf32>
    %183 = vector.broadcast %1 : vector<4x1xf32> to vector<4x32xf32>
    %184 = arith.addf %182, %183 : vector<4x32xf32>
    %185 = tpu.concatenate %181, %184 in 1 : vector<4x32xf32>, vector<4x32xf32> -> vector<4x64xf32>
    %c0_103 = arith.constant 0 : index
    %c0_104 = arith.constant 0 : index
    %c3_105 = arith.constant 3 : index
    %c0_106 = arith.constant 0 : index
    %186 = vector.load %arg8[%c0_103, %c0_104, %c3_105, %c0_106] : memref<1x4x16x64xf32, #tpu.memory_space<vmem>>, vector<1x4x1x64xf32>
    %187 = vector.shape_cast %186 : vector<1x4x1x64xf32> to vector<4x64xf32>
    %188 = vector.shape_cast %185 : vector<4x64xf32> to vector<1x4x1x64xf32>
    tpu.vector_store %arg8[%c0_103, %c0_104, %c3_105, %c0_106], %188 {strides = array<i32>} : memref<1x4x16x64xf32, #tpu.memory_space<vmem>>, vector<1x4x1x64xf32>,
    %cst_107 = arith.constant dense<0.000000e+00> : vector<4x32xf32>
    %189 = tpu.matmul %3, %136, %cst_107 {dimension_numbers = #tpu.dot_dimension_numbers<[1], [0], [0], [1], [0, 0, 1, 1], [], []>} : vector<4x24xf32>, vector<24x32xf32>, vector<4x32xf32> -> vector<4x32xf32>
    %190 = vector.broadcast %1 : vector<4x1xf32> to vector<4x32xf32>
    %191 = arith.addf %189, %190 : vector<4x32xf32>
    %cst_108 = arith.constant dense<0.000000e+00> : vector<4x32xf32>
    %192 = tpu.matmul %5, %137, %cst_108 {dimension_numbers = #tpu.dot_dimension_numbers<[1], [0], [0], [1], [0, 0, 1, 1], [], []>} : vector<4x24xf32>, vector<24x32xf32>, vector<4x32xf32> -> vector<4x32xf32>
    %193 = vector.broadcast %1 : vector<4x1xf32> to vector<4x32xf32>
    %194 = arith.addf %192, %193 : vector<4x32xf32>
    %195 = tpu.concatenate %191, %194 in 1 : vector<4x32xf32>, vector<4x32xf32> -> vector<4x64xf32>
    %c0_109 = arith.constant 0 : index
    %c0_110 = arith.constant 0 : index
    %c4_111 = arith.constant 4 : index
    %c0_112 = arith.constant 0 : index
    %196 = vector.load %arg8[%c0_109, %c0_110, %c4_111, %c0_112] : memref<1x4x16x64xf32, #tpu.memory_space<vmem>>, vector<1x4x1x64xf32>
    %197 = vector.shape_cast %196 : vector<1x4x1x64xf32> to vector<4x64xf32>
    %198 = vector.shape_cast %195 : vector<4x64xf32> to vector<1x4x1x64xf32>
    tpu.vector_store %arg8[%c0_109, %c0_110, %c4_111, %c0_112], %198 {strides = array<i32>} : memref<1x4x16x64xf32, #tpu.memory_space<vmem>>, vector<1x4x1x64xf32>,
    %cst_113 = arith.constant dense<0.000000e+00> : vector<4x32xf32>
    %199 = tpu.matmul %3, %137, %cst_113 {dimension_numbers = #tpu.dot_dimension_numbers<[1], [0], [0], [1], [0, 0, 1, 1], [], []>} : vector<4x24xf32>, vector<24x32xf32>, vector<4x32xf32> -> vector<4x32xf32>
    %200 = vector.broadcast %1 : vector<4x1xf32> to vector<4x32xf32>
    %201 = arith.addf %199, %200 : vector<4x32xf32>
    %cst_114 = arith.constant dense<0.000000e+00> : vector<4x32xf32>
    %202 = tpu.matmul %5, %138, %cst_114 {dimension_numbers = #tpu.dot_dimension_numbers<[1], [0], [0], [1], [0, 0, 1, 1], [], []>} : vector<4x24xf32>, vector<24x32xf32>, vector<4x32xf32> -> vector<4x32xf32>
    %203 = vector.broadcast %1 : vector<4x1xf32> to vector<4x32xf32>
    %204 = arith.addf %202, %203 : vector<4x32xf32>
    %205 = tpu.concatenate %201, %204 in 1 : vector<4x32xf32>, vector<4x32xf32> -> vector<4x64xf32>
    %c0_115 = arith.constant 0 : index
    %c0_116 = arith.constant 0 : index
    %c5_117 = arith.constant 5 : index
    %c0_118 = arith.constant 0 : index
    %206 = vector.load %arg8[%c0_115, %c0_116, %c5_117, %c0_118] : memref<1x4x16x64xf32, #tpu.memory_space<vmem>>, vector<1x4x1x64xf32>
    %207 = vector.shape_cast %206 : vector<1x4x1x64xf32> to vector<4x64xf32>
    %208 = vector.shape_cast %205 : vector<4x64xf32> to vector<1x4x1x64xf32>
    tpu.vector_store %arg8[%c0_115, %c0_116, %c5_117, %c0_118], %208 {strides = array<i32>} : memref<1x4x16x64xf32, #tpu.memory_space<vmem>>, vector<1x4x1x64xf32>,
    %cst_119 = arith.constant dense<0.000000e+00> : vector<4x32xf32>
    %209 = tpu.matmul %3, %138, %cst_119 {dimension_numbers = #tpu.dot_dimension_numbers<[1], [0], [0], [1], [0, 0, 1, 1], [], []>} : vector<4x24xf32>, vector<24x32xf32>, vector<4x32xf32> -> vector<4x32xf32>
    %210 = vector.broadcast %1 : vector<4x1xf32> to vector<4x32xf32>
    %211 = arith.addf %209, %210 : vector<4x32xf32>
    %cst_120 = arith.constant dense<0.000000e+00> : vector<4x32xf32>
    %212 = tpu.matmul %5, %139, %cst_120 {dimension_numbers = #tpu.dot_dimension_numbers<[1], [0], [0], [1], [0, 0, 1, 1], [], []>} : vector<4x24xf32>, vector<24x32xf32>, vector<4x32xf32> -> vector<4x32xf32>
    %213 = vector.broadcast %1 : vector<4x1xf32> to vector<4x32xf32>
    %214 = arith.addf %212, %213 : vector<4x32xf32>
    %215 = tpu.concatenate %211, %214 in 1 : vector<4x32xf32>, vector<4x32xf32> -> vector<4x64xf32>
    %c0_121 = arith.constant 0 : index
    %c0_122 = arith.constant 0 : index
    %c6_123 = arith.constant 6 : index
    %c0_124 = arith.constant 0 : index
    %216 = vector.load %arg8[%c0_121, %c0_122, %c6_123, %c0_124] : memref<1x4x16x64xf32, #tpu.memory_space<vmem>>, vector<1x4x1x64xf32>
    %217 = vector.shape_cast %216 : vector<1x4x1x64xf32> to vector<4x64xf32>
    %218 = vector.shape_cast %215 : vector<4x64xf32> to vector<1x4x1x64xf32>
    tpu.vector_store %arg8[%c0_121, %c0_122, %c6_123, %c0_124], %218 {strides = array<i32>} : memref<1x4x16x64xf32, #tpu.memory_space<vmem>>, vector<1x4x1x64xf32>,
    %cst_125 = arith.constant dense<0.000000e+00> : vector<4x32xf32>
    %219 = tpu.matmul %3, %139, %cst_125 {dimension_numbers = #tpu.dot_dimension_numbers<[1], [0], [0], [1], [0, 0, 1, 1], [], []>} : vector<4x24xf32>, vector<24x32xf32>, vector<4x32xf32> -> vector<4x32xf32>
    %220 = vector.broadcast %1 : vector<4x1xf32> to vector<4x32xf32>
    %221 = arith.addf %219, %220 : vector<4x32xf32>
    %cst_126 = arith.constant dense<0.000000e+00> : vector<4x32xf32>
    %222 = tpu.matmul %5, %140, %cst_126 {dimension_numbers = #tpu.dot_dimension_numbers<[1], [0], [0], [1], [0, 0, 1, 1], [], []>} : vector<4x24xf32>, vector<24x32xf32>, vector<4x32xf32> -> vector<4x32xf32>
    %223 = vector.broadcast %1 : vector<4x1xf32> to vector<4x32xf32>
    %224 = arith.addf %222, %223 : vector<4x32xf32>
    %225 = tpu.concatenate %221, %224 in 1 : vector<4x32xf32>, vector<4x32xf32> -> vector<4x64xf32>
    %c0_127 = arith.constant 0 : index
    %c0_128 = arith.constant 0 : index
    %c7_129 = arith.constant 7 : index
    %c0_130 = arith.constant 0 : index
    %226 = vector.load %arg8[%c0_127, %c0_128, %c7_129, %c0_130] : memref<1x4x16x64xf32, #tpu.memory_space<vmem>>, vector<1x4x1x64xf32>
    %227 = vector.shape_cast %226 : vector<1x4x1x64xf32> to vector<4x64xf32>
    %228 = vector.shape_cast %225 : vector<4x64xf32> to vector<1x4x1x64xf32>
    tpu.vector_store %arg8[%c0_127, %c0_128, %c7_129, %c0_130], %228 {strides = array<i32>} : memref<1x4x16x64xf32, #tpu.memory_space<vmem>>, vector<1x4x1x64xf32>,
    %cst_131 = arith.constant dense<0.000000e+00> : vector<4x32xf32>
    %229 = tpu.matmul %3, %140, %cst_131 {dimension_numbers = #tpu.dot_dimension_numbers<[1], [0], [0], [1], [0, 0, 1, 1], [], []>} : vector<4x24xf32>, vector<24x32xf32>, vector<4x32xf32> -> vector<4x32xf32>
    %230 = vector.broadcast %1 : vector<4x1xf32> to vector<4x32xf32>
    %231 = arith.addf %229, %230 : vector<4x32xf32>
    %cst_132 = arith.constant dense<0.000000e+00> : vector<4x32xf32>
    %232 = tpu.matmul %5, %141, %cst_132 {dimension_numbers = #tpu.dot_dimension_numbers<[1], [0], [0], [1], [0, 0, 1, 1], [], []>} : vector<4x24xf32>, vector<24x32xf32>, vector<4x32xf32> -> vector<4x32xf32>
    %233 = vector.broadcast %1 : vector<4x1xf32> to vector<4x32xf32>
    %234 = arith.addf %232, %233 : vector<4x32xf32>
    %235 = tpu.concatenate %231, %234 in 1 : vector<4x32xf32>, vector<4x32xf32> -> vector<4x64xf32>
    %c0_133 = arith.constant 0 : index
    %c0_134 = arith.constant 0 : index
    %c8_135 = arith.constant 8 : index
    %c0_136 = arith.constant 0 : index
    %236 = vector.load %arg8[%c0_133, %c0_134, %c8_135, %c0_136] : memref<1x4x16x64xf32, #tpu.memory_space<vmem>>, vector<1x4x1x64xf32>
    %237 = vector.shape_cast %236 : vector<1x4x1x64xf32> to vector<4x64xf32>
    %238 = vector.shape_cast %235 : vector<4x64xf32> to vector<1x4x1x64xf32>
    tpu.vector_store %arg8[%c0_133, %c0_134, %c8_135, %c0_136], %238 {strides = array<i32>} : memref<1x4x16x64xf32, #tpu.memory_space<vmem>>, vector<1x4x1x64xf32>,
    %cst_137 = arith.constant dense<0.000000e+00> : vector<4x32xf32>
    %239 = tpu.matmul %3, %141, %cst_137 {dimension_numbers = #tpu.dot_dimension_numbers<[1], [0], [0], [1], [0, 0, 1, 1], [], []>} : vector<4x24xf32>, vector<24x32xf32>, vector<4x32xf32> -> vector<4x32xf32>
    %240 = vector.broadcast %1 : vector<4x1xf32> to vector<4x32xf32>
    %241 = arith.addf %239, %240 : vector<4x32xf32>
    %cst_138 = arith.constant dense<0.000000e+00> : vector<4x32xf32>
    %242 = tpu.matmul %5, %142, %cst_138 {dimension_numbers = #tpu.dot_dimension_numbers<[1], [0], [0], [1], [0, 0, 1, 1], [], []>} : vector<4x24xf32>, vector<24x32xf32>, vector<4x32xf32> -> vector<4x32xf32>
    %243 = vector.broadcast %1 : vector<4x1xf32> to vector<4x32xf32>
    %244 = arith.addf %242, %243 : vector<4x32xf32>
    %245 = tpu.concatenate %241, %244 in 1 : vector<4x32xf32>, vector<4x32xf32> -> vector<4x64xf32>
    %c0_139 = arith.constant 0 : index
    %c0_140 = arith.constant 0 : index
    %c9_141 = arith.constant 9 : index
    %c0_142 = arith.constant 0 : index
    %246 = vector.load %arg8[%c0_139, %c0_140, %c9_141, %c0_142] : memref<1x4x16x64xf32, #tpu.memory_space<vmem>>, vector<1x4x1x64xf32>
    %247 = vector.shape_cast %246 : vector<1x4x1x64xf32> to vector<4x64xf32>
    %248 = vector.shape_cast %245 : vector<4x64xf32> to vector<1x4x1x64xf32>
    tpu.vector_store %arg8[%c0_139, %c0_140, %c9_141, %c0_142], %248 {strides = array<i32>} : memref<1x4x16x64xf32, #tpu.memory_space<vmem>>, vector<1x4x1x64xf32>,
    %cst_143 = arith.constant dense<0.000000e+00> : vector<4x32xf32>
    %249 = tpu.matmul %3, %142, %cst_143 {dimension_numbers = #tpu.dot_dimension_numbers<[1], [0], [0], [1], [0, 0, 1, 1], [], []>} : vector<4x24xf32>, vector<24x32xf32>, vector<4x32xf32> -> vector<4x32xf32>
    %250 = vector.broadcast %1 : vector<4x1xf32> to vector<4x32xf32>
    %251 = arith.addf %249, %250 : vector<4x32xf32>
    %cst_144 = arith.constant dense<0.000000e+00> : vector<4x32xf32>
    %252 = tpu.matmul %5, %143, %cst_144 {dimension_numbers = #tpu.dot_dimension_numbers<[1], [0], [0], [1], [0, 0, 1, 1], [], []>} : vector<4x24xf32>, vector<24x32xf32>, vector<4x32xf32> -> vector<4x32xf32>
    %253 = vector.broadcast %1 : vector<4x1xf32> to vector<4x32xf32>
    %254 = arith.addf %252, %253 : vector<4x32xf32>
    %255 = tpu.concatenate %251, %254 in 1 : vector<4x32xf32>, vector<4x32xf32> -> vector<4x64xf32>
    %c0_145 = arith.constant 0 : index
    %c0_146 = arith.constant 0 : index
    %c10_147 = arith.constant 10 : index
    %c0_148 = arith.constant 0 : index
    %256 = vector.load %arg8[%c0_145, %c0_146, %c10_147, %c0_148] : memref<1x4x16x64xf32, #tpu.memory_space<vmem>>, vector<1x4x1x64xf32>
    %257 = vector.shape_cast %256 : vector<1x4x1x64xf32> to vector<4x64xf32>
    %258 = vector.shape_cast %255 : vector<4x64xf32> to vector<1x4x1x64xf32>
    tpu.vector_store %arg8[%c0_145, %c0_146, %c10_147, %c0_148], %258 {strides = array<i32>} : memref<1x4x16x64xf32, #tpu.memory_space<vmem>>, vector<1x4x1x64xf32>,
    %cst_149 = arith.constant dense<0.000000e+00> : vector<4x32xf32>
    %259 = tpu.matmul %3, %143, %cst_149 {dimension_numbers = #tpu.dot_dimension_numbers<[1], [0], [0], [1], [0, 0, 1, 1], [], []>} : vector<4x24xf32>, vector<24x32xf32>, vector<4x32xf32> -> vector<4x32xf32>
    %260 = vector.broadcast %1 : vector<4x1xf32> to vector<4x32xf32>
    %261 = arith.addf %259, %260 : vector<4x32xf32>
    %cst_150 = arith.constant dense<0.000000e+00> : vector<4x32xf32>
    %262 = tpu.matmul %5, %144, %cst_150 {dimension_numbers = #tpu.dot_dimension_numbers<[1], [0], [0], [1], [0, 0, 1, 1], [], []>} : vector<4x24xf32>, vector<24x32xf32>, vector<4x32xf32> -> vector<4x32xf32>
    %263 = vector.broadcast %1 : vector<4x1xf32> to vector<4x32xf32>
    %264 = arith.addf %262, %263 : vector<4x32xf32>
    %265 = tpu.concatenate %261, %264 in 1 : vector<4x32xf32>, vector<4x32xf32> -> vector<4x64xf32>
    %c0_151 = arith.constant 0 : index
    %c0_152 = arith.constant 0 : index
    %c11_153 = arith.constant 11 : index
    %c0_154 = arith.constant 0 : index
    %266 = vector.load %arg8[%c0_151, %c0_152, %c11_153, %c0_154] : memref<1x4x16x64xf32, #tpu.memory_space<vmem>>, vector<1x4x1x64xf32>
    %267 = vector.shape_cast %266 : vector<1x4x1x64xf32> to vector<4x64xf32>
    %268 = vector.shape_cast %265 : vector<4x64xf32> to vector<1x4x1x64xf32>
    tpu.vector_store %arg8[%c0_151, %c0_152, %c11_153, %c0_154], %268 {strides = array<i32>} : memref<1x4x16x64xf32, #tpu.memory_space<vmem>>, vector<1x4x1x64xf32>,
    %cst_155 = arith.constant dense<0.000000e+00> : vector<4x32xf32>
    %269 = tpu.matmul %3, %144, %cst_155 {dimension_numbers = #tpu.dot_dimension_numbers<[1], [0], [0], [1], [0, 0, 1, 1], [], []>} : vector<4x24xf32>, vector<24x32xf32>, vector<4x32xf32> -> vector<4x32xf32>
    %270 = vector.broadcast %1 : vector<4x1xf32> to vector<4x32xf32>
    %271 = arith.addf %269, %270 : vector<4x32xf32>
    %cst_156 = arith.constant dense<0.000000e+00> : vector<4x32xf32>
    %272 = tpu.matmul %5, %145, %cst_156 {dimension_numbers = #tpu.dot_dimension_numbers<[1], [0], [0], [1], [0, 0, 1, 1], [], []>} : vector<4x24xf32>, vector<24x32xf32>, vector<4x32xf32> -> vector<4x32xf32>
    %273 = vector.broadcast %1 : vector<4x1xf32> to vector<4x32xf32>
    %274 = arith.addf %272, %273 : vector<4x32xf32>
    %275 = tpu.concatenate %271, %274 in 1 : vector<4x32xf32>, vector<4x32xf32> -> vector<4x64xf32>
    %c0_157 = arith.constant 0 : index
    %c0_158 = arith.constant 0 : index
    %c12_159 = arith.constant 12 : index
    %c0_160 = arith.constant 0 : index
    %276 = vector.load %arg8[%c0_157, %c0_158, %c12_159, %c0_160] : memref<1x4x16x64xf32, #tpu.memory_space<vmem>>, vector<1x4x1x64xf32>
    %277 = vector.shape_cast %276 : vector<1x4x1x64xf32> to vector<4x64xf32>
    %278 = vector.shape_cast %275 : vector<4x64xf32> to vector<1x4x1x64xf32>
    tpu.vector_store %arg8[%c0_157, %c0_158, %c12_159, %c0_160], %278 {strides = array<i32>} : memref<1x4x16x64xf32, #tpu.memory_space<vmem>>, vector<1x4x1x64xf32>,
    %cst_161 = arith.constant dense<0.000000e+00> : vector<4x32xf32>
    %279 = tpu.matmul %3, %145, %cst_161 {dimension_numbers = #tpu.dot_dimension_numbers<[1], [0], [0], [1], [0, 0, 1, 1], [], []>} : vector<4x24xf32>, vector<24x32xf32>, vector<4x32xf32> -> vector<4x32xf32>
    %280 = vector.broadcast %1 : vector<4x1xf32> to vector<4x32xf32>
    %281 = arith.addf %279, %280 : vector<4x32xf32>
    %cst_162 = arith.constant dense<0.000000e+00> : vector<4x32xf32>
    %282 = tpu.matmul %5, %146, %cst_162 {dimension_numbers = #tpu.dot_dimension_numbers<[1], [0], [0], [1], [0, 0, 1, 1], [], []>} : vector<4x24xf32>, vector<24x32xf32>, vector<4x32xf32> -> vector<4x32xf32>
    %283 = vector.broadcast %1 : vector<4x1xf32> to vector<4x32xf32>
    %284 = arith.addf %282, %283 : vector<4x32xf32>
    %285 = tpu.concatenate %281, %284 in 1 : vector<4x32xf32>, vector<4x32xf32> -> vector<4x64xf32>
    %c0_163 = arith.constant 0 : index
    %c0_164 = arith.constant 0 : index
    %c13_165 = arith.constant 13 : index
    %c0_166 = arith.constant 0 : index
    %286 = vector.load %arg8[%c0_163, %c0_164, %c13_165, %c0_166] : memref<1x4x16x64xf32, #tpu.memory_space<vmem>>, vector<1x4x1x64xf32>
    %287 = vector.shape_cast %286 : vector<1x4x1x64xf32> to vector<4x64xf32>
    %288 = vector.shape_cast %285 : vector<4x64xf32> to vector<1x4x1x64xf32>
    tpu.vector_store %arg8[%c0_163, %c0_164, %c13_165, %c0_166], %288 {strides = array<i32>} : memref<1x4x16x64xf32, #tpu.memory_space<vmem>>, vector<1x4x1x64xf32>,
    %cst_167 = arith.constant dense<0.000000e+00> : vector<4x32xf32>
    %289 = tpu.matmul %3, %146, %cst_167 {dimension_numbers = #tpu.dot_dimension_numbers<[1], [0], [0], [1], [0, 0, 1, 1], [], []>} : vector<4x24xf32>, vector<24x32xf32>, vector<4x32xf32> -> vector<4x32xf32>
    %290 = vector.broadcast %1 : vector<4x1xf32> to vector<4x32xf32>
    %291 = arith.addf %289, %290 : vector<4x32xf32>
    %cst_168 = arith.constant dense<0.000000e+00> : vector<4x32xf32>
    %292 = tpu.matmul %5, %147, %cst_168 {dimension_numbers = #tpu.dot_dimension_numbers<[1], [0], [0], [1], [0, 0, 1, 1], [], []>} : vector<4x24xf32>, vector<24x32xf32>, vector<4x32xf32> -> vector<4x32xf32>
    %293 = vector.broadcast %1 : vector<4x1xf32> to vector<4x32xf32>
    %294 = arith.addf %292, %293 : vector<4x32xf32>
    %295 = tpu.concatenate %291, %294 in 1 : vector<4x32xf32>, vector<4x32xf32> -> vector<4x64xf32>
    %c0_169 = arith.constant 0 : index
    %c0_170 = arith.constant 0 : index
    %c14_171 = arith.constant 14 : index
    %c0_172 = arith.constant 0 : index
    %296 = vector.load %arg8[%c0_169, %c0_170, %c14_171, %c0_172] : memref<1x4x16x64xf32, #tpu.memory_space<vmem>>, vector<1x4x1x64xf32>
    %297 = vector.shape_cast %296 : vector<1x4x1x64xf32> to vector<4x64xf32>
    %298 = vector.shape_cast %295 : vector<4x64xf32> to vector<1x4x1x64xf32>
    tpu.vector_store %arg8[%c0_169, %c0_170, %c14_171, %c0_172], %298 {strides = array<i32>} : memref<1x4x16x64xf32, #tpu.memory_space<vmem>>, vector<1x4x1x64xf32>,
    %cst_173 = arith.constant dense<0.000000e+00> : vector<4x32xf32>
    %299 = tpu.matmul %3, %147, %cst_173 {dimension_numbers = #tpu.dot_dimension_numbers<[1], [0], [0], [1], [0, 0, 1, 1], [], []>} : vector<4x24xf32>, vector<24x32xf32>, vector<4x32xf32> -> vector<4x32xf32>
    %300 = vector.broadcast %1 : vector<4x1xf32> to vector<4x32xf32>
    %301 = arith.addf %299, %300 : vector<4x32xf32>
    %cst_174 = arith.constant dense<0.000000e+00> : vector<4x32xf32>
    %302 = tpu.matmul %5, %148, %cst_174 {dimension_numbers = #tpu.dot_dimension_numbers<[1], [0], [0], [1], [0, 0, 1, 1], [], []>} : vector<4x24xf32>, vector<24x32xf32>, vector<4x32xf32> -> vector<4x32xf32>
    %303 = vector.broadcast %1 : vector<4x1xf32> to vector<4x32xf32>
    %304 = arith.addf %302, %303 : vector<4x32xf32>
    %305 = tpu.concatenate %301, %304 in 1 : vector<4x32xf32>, vector<4x32xf32> -> vector<4x64xf32>
    %c0_175 = arith.constant 0 : index
    %c0_176 = arith.constant 0 : index
    %c15_177 = arith.constant 15 : index
    %c0_178 = arith.constant 0 : index
    %306 = vector.load %arg8[%c0_175, %c0_176, %c15_177, %c0_178] : memref<1x4x16x64xf32, #tpu.memory_space<vmem>>, vector<1x4x1x64xf32>
    %307 = vector.shape_cast %306 : vector<1x4x1x64xf32> to vector<4x64xf32>
    %308 = vector.shape_cast %305 : vector<4x64xf32> to vector<1x4x1x64xf32>
    tpu.vector_store %arg8[%c0_175, %c0_176, %c15_177, %c0_178], %308 {strides = array<i32>} : memref<1x4x16x64xf32, #tpu.memory_space<vmem>>, vector<1x4x1x64xf32>,
    return
  }
  func.func @transform_0(%arg0: i32, %arg1: i32, %arg2: i32) -> (i32, i32, i32, i32) {
    %c0_i32 = arith.constant 0 : i32
    %c0_i32_0 = arith.constant 0 : i32
    %c0_i32_1 = arith.constant 0 : i32
    return %arg0, %c0_i32, %arg2, %c0_i32_0 : i32, i32, i32, i32
  }
  func.func @transform_1(%arg0: i32, %arg1: i32, %arg2: i32) -> (i32, i32, i32, i32) {
    %c1_i32 = arith.constant 1 : i32
    %0 = arith.addi %arg2, %c1_i32 : i32
    %c2_i32 = arith.constant 2 : i32
    %1 = arith.muli %0, %c2_i32 : i32
    %c0_i32 = arith.constant 0 : i32
    %c0_i32_0 = arith.constant 0 : i32
    %c0_i32_1 = arith.constant 0 : i32
    return %arg0, %c0_i32, %1, %c0_i32_0 : i32, i32, i32, i32
  }
  func.func @transform_2(%arg0: i32, %arg1: i32, %arg2: i32) -> (i32, i32, i32) {
    %c0_i32 = arith.constant 0 : i32
    %c0_i32_0 = arith.constant 0 : i32
    %c0_i32_1 = arith.constant 0 : i32
    return %c0_i32, %arg1, %c0_i32_0 : i32, i32, i32
  }
  func.func @transform_3(%arg0: i32, %arg1: i32, %arg2: i32) -> (i32, i32) {
    %c0_i32 = arith.constant 0 : i32
    %c0_i32_0 = arith.constant 0 : i32
    return %arg1, %c0_i32 : i32, i32
  }
  func.func @transform_4(%arg0: i32, %arg1: i32, %arg2: i32) -> (i32, i32) {
    %c0_i32 = arith.constant 0 : i32
    %c0_i32_0 = arith.constant 0 : i32
    %c0_i32_1 = arith.constant 0 : i32
    return %c0_i32, %c0_i32_0 : i32, i32
  }
  func.func @transform_5(%arg0: i32, %arg1: i32, %arg2: i32) -> (i32, i32, i32, i32) {
    %c0_i32 = arith.constant 0 : i32
    %c0_i32_0 = arith.constant 0 : i32
    return %arg0, %arg1, %arg2, %c0_i32 : i32, i32, i32, i32
  }
}

</mosaic_0001>

<llo_original>
// kernel: upsample_forward.1
$region0: #{upsample_forward.1}
  #allocation0 [shape = 'u32[]', space=smem, size = 0x4, offset = 0x4, fixed_abs, tag = 'smem constant byte address 0x4 - core index']
  #allocation1 [shape = 'u32[144,128]{1,0:T(1,128)}', space=vmem, size = 0x12000, scoped, tag = 'internal scratch']
  %s0 = inlined_call_operand.vmem [shape: f32[2,4,24,18], index: 0, kind: input, shape index: {}, may-alias: {0,1}]
  %s1 = inlined_call_operand.vmem [shape: f32[2,4,24,18], index: 1, kind: input, shape index: {}, may-alias: {0,1}]
  %s2 = inlined_call_operand.vmem [shape: f32[2,4,24], index: 2, kind: input, shape index: {}]
  %s3 = inlined_call_operand.vmem [shape: f32[4,1], index: 3, kind: input, shape index: {}]
  %s4 = inlined_call_operand.vmem [shape: f32[18,34], index: 4, kind: input, shape index: {}]
  %s5 = inlined_call_operand.vmem [shape: f32[2,4,16,64], index: 5, kind: output, shape index: {}]
  %s6 = sld [smem:[#allocation0]]
  $region143: #{upsample_forward.1} parent=0
    _
  %s8 = ssub.s32 1, %s6
  %s9 = scalar_select 0, %s8, %s6
  $region1: #{upsample_forward.1} parent=0
    #allocation2 [shape = 'u8[65536]{0}', space=vmem, size = 0x10000, scoped, tag = 'input window, operand 0']
    #allocation3 [shape = 'u8[32768]{0}', space=vmem, size = 0x8000, scoped, tag = 'input window, operand 1']
    loop: start=0, step=1, limit=4
    $region2: #{upsample_forward.1} parent=1 // loop_pre_header
      _
    $region3: #{upsample_forward.1} parent=1 // loop_header
      %s11 = sphi 0, %s15
      %p12 = scmp.ge.s32.totalorder %s11, 4
      %s18 = sphi 0, %s37
      %s19 = sphi 0, %s33
      %s20 = sphi 0, %s29
      %s21 = sphi 0, %s18
      %s22 = sphi 0, %s19
      %s23 = sphi 0, %s20
      %s24 = sphi 0, %s21
      %s25 = sphi 0, %s22
      %s26 = sphi 0, %s23
      %s42 = sphi 0, %s44
      %s45 = sphi 0, %s42
      %s46 = sphi 0, %s45
      %s62 = sphi 0, %s46
      %s74 = sphi 0, %s76
      %s77 = sphi 0, %s74
      %s78 = sphi 0, %s77
      %s94 = sphi 0, %s78
      %s100 = sphi 0, %s102
      %s103 = sphi 0, %s100
      %s104 = sphi 0, %s103
      %s120 = sphi 0, %s104
      %s126 = sphi 0, %s128
      %s129 = sphi 0, %s126
      %s130 = sphi 0, %s129
      %s146 = sphi 0, %s130
      %s150 = sphi 0, %s150
      %s152 = sphi 0, %s150
      %s153 = sphi 0, %s152
      %s167 = sphi 0, %s153
      %s177 = sphi 0, %s179
      %s180 = sphi 0, %s177
      %s181 = sphi 0, %s180
      %s197 = sphi 0, %s181
    $region4: #{upsample_forward.1} parent=1 // loop_header_branch
      %14 = sbr.rel (%p12) target = $region8
    $region5: #{upsample_forward.1} parent=1 // loop_body
      %s16 = ssub.s32 %s11, 1
      %s17 = ssub.s32 %s11, 2
      %s27 = sadd.s32 1, %s20
      %p28 = scmp.ge.s32.totalorder %s27, 1
      %s29 = scalar_select %p28, 0, %s27
      %s30 = sadd.s32 1, %s19
      %s31 = scalar_select %p28, %s30, %s19
      %p32 = scmp.ge.s32.totalorder %s31, 1
      %s33 = scalar_select %p32, 0, %s31
      %s34 = sadd.s32 1, %s18
      %s35 = scalar_select %p32, %s34, %s18
      %p36 = scmp.ge.s32.totalorder %s35, 2
      %s37 = scalar_select %p36, 0, %s35
      %s38 = ssub.s32 %s18, %s37
      %s39 = ssub.s32 %s20, %s29
      %s40 = sor.u32 %s38, %s39
      %p41 = scmp.eq.s32.totalorder %s40, 0
      %s43 = sadd.s32 %s42, 1
      %s44 = scalar_select %p41, %s42, %s43
      %p47 = pneg %p41
      %p48 = scmp.eq.s32.totalorder %s11, 1
      %p49 = por %p47, %p48
      %p50 = scmp.ne.s32.totalorder %s42, %s45
      %p51 = scmp.eq.s32.totalorder %s11, 0
      %p52 = por %p50, %p51
      %p53 = scmp.ne.s32.totalorder %s42, %s45
      %p54 = scmp.eq.s32.totalorder %s16, 1
      %p55 = por %p53, %p54
      %p56 = scmp.ne.s32.totalorder %s45, %s46
      %p57 = scmp.eq.s32.totalorder %s16, 0
      %p58 = por %p56, %p57
      %p59 = scmp.ne.s32.totalorder %s45, %s46
      %p60 = scmp.eq.s32.totalorder %s17, 1
      %p61 = por %p59, %p60
      %p63 = scmp.ne.s32.totalorder %s46, %s62
      %p64 = scmp.eq.s32.totalorder %s17, 0
      %p65 = por %p63, %p64
      %s66 = sadd.s32 %s20, 1
      %s67 = smul.u32 %s66, 2
      %s68 = sadd.s32 %s29, 1
      %s69 = smul.u32 %s68, 2
      %s70 = ssub.s32 %s18, %s37
      %s71 = ssub.s32 %s67, %s69
      %s72 = sor.u32 %s70, %s71
      %p73 = scmp.eq.s32.totalorder %s72, 0
      %s75 = sadd.s32 %s74, 1
      %s76 = scalar_select %p73, %s74, %s75
      %p79 = pneg %p73
      %p80 = scmp.eq.s32.totalorder %s11, 1
      %p81 = por %p79, %p80
      %p82 = scmp.ne.s32.totalorder %s74, %s77
      %p83 = scmp.eq.s32.totalorder %s11, 0
      %p84 = por %p82, %p83
      %p85 = scmp.ne.s32.totalorder %s74, %s77
      %p86 = scmp.eq.s32.totalorder %s16, 1
      %p87 = por %p85, %p86
      %p88 = scmp.ne.s32.totalorder %s77, %s78
      %p89 = scmp.eq.s32.totalorder %s16, 0
      %p90 = por %p88, %p89
      %p91 = scmp.ne.s32.totalorder %s77, %s78
      %p92 = scmp.eq.s32.totalorder %s17, 1
      %p93 = por %p91, %p92
      %p95 = scmp.ne.s32.totalorder %s78, %s94
      %p96 = scmp.eq.s32.totalorder %s17, 0
      %p97 = por %p95, %p96
      %s98 = ssub.s32 %s19, %s33
      %p99 = scmp.eq.s32.totalorder %s98, 0
      %s101 = sadd.s32 %s100, 1
      %s102 = scalar_select %p99, %s100, %s101
      %p105 = pneg %p99
      %p106 = scmp.eq.s32.totalorder %s11, 1
      %p107 = por %p105, %p106
      %p108 = scmp.ne.s32.totalorder %s100, %s103
      %p109 = scmp.eq.s32.totalorder %s11, 0
      %p110 = por %p108, %p109
      %p111 = scmp.ne.s32.totalorder %s100, %s103
      %p112 = scmp.eq.s32.totalorder %s16, 1
      %p113 = por %p111, %p112
      %p114 = scmp.ne.s32.totalorder %s103, %s104
      %p115 = scmp.eq.s32.totalorder %s16, 0
      %p116 = por %p114, %p115
      %p117 = scmp.ne.s32.totalorder %s103, %s104
      %p118 = scmp.eq.s32.totalorder %s17, 1
      %p119 = por %p117, %p118
      %p121 = scmp.ne.s32.totalorder %s104, %s120
      %p122 = scmp.eq.s32.totalorder %s17, 0
      %p123 = por %p121, %p122
      %s124 = ssub.s32 %s19, %s33
      %p125 = scmp.eq.s32.totalorder %s124, 0
      %s127 = sadd.s32 %s126, 1
      %s128 = scalar_select %p125, %s126, %s127
      %p131 = pneg %p125
      %p132 = scmp.eq.s32.totalorder %s11, 1
      %p133 = por %p131, %p132
      %p134 = scmp.ne.s32.totalorder %s126, %s129
      %p135 = scmp.eq.s32.totalorder %s11, 0
      %p136 = por %p134, %p135
      %p137 = scmp.ne.s32.totalorder %s126, %s129
      %p138 = scmp.eq.s32.totalorder %s16, 1
      %p139 = por %p137, %p138
      %p140 = scmp.ne.s32.totalorder %s129, %s130
      %p141 = scmp.eq.s32.totalorder %s16, 0
      %p142 = por %p140, %p141
      %p143 = scmp.ne.s32.totalorder %s129, %s130
      %p144 = scmp.eq.s32.totalorder %s17, 1
      %p145 = por %p143, %p144
      %p147 = scmp.ne.s32.totalorder %s130, %s146
      %p148 = scmp.eq.s32.totalorder %s17, 0
      %p149 = por %p147, %p148
      %s151 = sadd.s32 %s150, 1
      %p154 = scmp.eq.s32.totalorder %s11, 1
      %p155 = scmp.ne.s32.totalorder %s150, %s152
      %p156 = scmp.eq.s32.totalorder %s11, 0
      %p157 = por %p155, %p156
      %p158 = scmp.ne.s32.totalorder %s150, %s152
      %p159 = scmp.eq.s32.totalorder %s16, 1
      %p160 = por %p158, %p159
      %p161 = scmp.ne.s32.totalorder %s152, %s153
      %p162 = scmp.eq.s32.totalorder %s16, 0
      %p163 = por %p161, %p162
      %p164 = scmp.ne.s32.totalorder %s152, %s153
      %p165 = scmp.eq.s32.totalorder %s17, 1
      %p166 = por %p164, %p165
      %p168 = scmp.ne.s32.totalorder %s153, %s167
      %p169 = scmp.eq.s32.totalorder %s17, 0
      %p170 = por %p168, %p169
      %s171 = ssub.s32 %s18, %s37
      %s172 = ssub.s32 %s19, %s33
      %s173 = sor.u32 %s171, %s172
      %s174 = ssub.s32 %s20, %s29
      %s175 = sor.u32 %s173, %s174
      %p176 = scmp.eq.s32.totalorder %s175, 0
      %s178 = sadd.s32 %s177, 1
      %s179 = scalar_select %p176, %s177, %s178
      %p182 = pneg %p176
      %p183 = scmp.eq.s32.totalorder %s11, 1
      %p184 = por %p182, %p183
      %p185 = scmp.ne.s32.totalorder %s177, %s180
      %p186 = scmp.eq.s32.totalorder %s11, 0
      %p187 = por %p185, %p186
      %p188 = scmp.ne.s32.totalorder %s177, %s180
      %p189 = scmp.eq.s32.totalorder %s16, 1
      %p190 = por %p188, %p189
      %p191 = scmp.ne.s32.totalorder %s180, %s181
      %p192 = scmp.eq.s32.totalorder %s16, 0
      %p193 = por %p191, %p192
      %p194 = scmp.ne.s32.totalorder %s180, %s181
      %p195 = scmp.eq.s32.totalorder %s17, 1
      %p196 = por %p194, %p195
      %p198 = scmp.ne.s32.totalorder %s181, %s197
      %p199 = scmp.eq.s32.totalorder %s17, 0
      %p200 = por %p198, %p199
      %p201 = scmp.le.s32.totalorder 1, %s11
      %p202 = scmp.lt.s32.totalorder %s11, 3
      %p203 = pnand %p201, %p202
      %p204 = pneg %p203
      // Predicated region
      $region9: #{upsample_forward.1} parent=5 // pred_check
        _
      $region10: #{upsample_forward.1} parent=5 // pred_check_branch
        %206 = sbr.rel (%p203) target = $region12
      $region11: #{upsample_forward.1} parent=5 // pred_region
        %s207 = ssub.s32 %s11, 1
        // Predicated region
        $region13: #{upsample_forward.1} parent=11 // pred_check
          %p208 = pneg %p116
        $region14: #{upsample_forward.1} parent=11 // pred_check_branch
          %210 = sbr.rel (%p208) target = $region16
        $region15: #{upsample_forward.1} parent=11 // pred_region
          %p211 = scmp.lt.s32.totalorder %s22, 0
          %s212 = scalar_select %p211, %s22, 0
          %s213 = smul.addr %s212, 4
          %s214 = scalar_lea.vmem %s2, %s213
        $region16: #{upsample_forward.1} parent=11 // pred_fallthru
          _
        // Predicated region
        $region17: #{upsample_forward.1} parent=11 // pred_check
          %p215 = pneg %p142
        $region18: #{upsample_forward.1} parent=11 // pred_check_branch
          %217 = sbr.rel (%p215) target = $region20
        $region19: #{upsample_forward.1} parent=11 // pred_region
          %p218 = scmp.lt.s32.totalorder %s22, 0
          %s219 = scalar_select %p218, %s22, 0
          %s220 = smul.addr %s219, 4
          %s221 = scalar_lea.vmem %s3, %s220
        $region20: #{upsample_forward.1} parent=11 // pred_fallthru
          _
        // Predicated region
        $region21: #{upsample_forward.1} parent=11 // pred_check
          %p222 = pneg %p163
        $region22: #{upsample_forward.1} parent=11 // pred_check_branch
          %224 = sbr.rel (%p222) target = $region24
        $region23: #{upsample_forward.1} parent=11 // pred_region
          _
        $region24: #{upsample_forward.1} parent=11 // pred_fallthru
          _
      $region12: #{upsample_forward.1} parent=5 // pred_fallthru
        _
      %p225 = scmp.lt.s32.totalorder %s11, 2
      // Predicated region
      $region25: #{upsample_forward.1} parent=5 // pred_check
        %p226 = pneg %p225
      $region26: #{upsample_forward.1} parent=5 // pred_check_branch
        %228 = sbr.rel (%p226) target = $region28
      $region27: #{upsample_forward.1} parent=5 // pred_region
        // Predicated region
        $region29: #{upsample_forward.1} parent=27 // pred_check
          %p229 = pneg %p52
        $region30: #{upsample_forward.1} parent=27 // pred_check_branch
          %231 = sbr.rel (%p229) target = $region32
        $region31: #{upsample_forward.1} parent=27 // pred_region
          %s232 = sand.u32 %s42, 1
          %s233 = sand.u32 %s42, 1
          %s234 = smul.addr %s233, 64
          %s235 = scalar_lea.vmem [#allocation2], %s234
          %s236 = smul.u32 2, %s20
          %s237 = ssub.s32 3, %s236
          %p238 = scmp.lt.s32.totalorder %s237, 2
          %s239 = scalar_select %p238, %s237, 2
          %s240 = smul.u32 512, %s239
          %p241 = scmp.ne.s32.totalorder 0, %s240
          %s242 = smul.addr %s18, 12
          %s243 = sadd.s32 %s236, %s242
          %s244 = smul.addr %s243, 8
          %s245 = scalar_lea.vmem %s0, %s244
          // Predicated region
          $region33: #{upsample_forward.1} parent=31 // pred_check
            %p246 = pneg %p241
          $region34: #{upsample_forward.1} parent=31 // pred_check_branch
            %248 = sbr.rel (%p246) target = $region36
          $region35: #{upsample_forward.1} parent=31 // pred_region
            // Predicated region
            $region37: #{upsample_forward.1} parent=35 // pred_check
              _
            $region38: #{upsample_forward.1} parent=35 // pred_check_branch
              %250 = sbr.rel (0) target = $region40
            $region39: #{upsample_forward.1} parent=35 // pred_region
              // Predicated region
              $region59: #{upsample_forward.1} parent=39 // pred_check
                _
              $region60: #{upsample_forward.1} parent=39 // pred_check_branch
                %320 = sbr.rel (0) target = $region62
              $region61: #{upsample_forward.1} parent=39 // pred_region
                %s321 = sshrl.u32 %s239, 1
                // While loop
                $region63: #{upsample_forward.1} parent=61 // loop_pre_header
                  _
                $region64: #{upsample_forward.1} parent=61 // loop_header
                  %s323 = sphi 0, %s325
                  %p324 = scmp.ge.s32.totalorder %s323, %s321
                  %s328 = sphi 0, %s349
                  %s329 = sphi %s245, %s352
                  %s330 = sphi %s235, %s353
                $region65: #{upsample_forward.1} parent=61 // loop_header_branch
                  %327 = sbr.rel (%p324) target = $region69
                $region66: #{upsample_forward.1} parent=61 // loop_body
                  %v331 = vld [vmem:[%s329] sm:$0xff]
                  %332 = vst [vmem:[%s330] sm:$0xff] %v331
                  %v333 = vld [vmem:[%s329 + $0x8] sm:$0xff]
                  %334 = vst [vmem:[%s330 + $0x8] sm:$0xff] %v333
                  %v335 = vld [vmem:[%s329 + $0x18] sm:$0xff]
                  %336 = vst [vmem:[%s330 + $0x10] sm:$0xff] %v335
                  %v337 = vld [vmem:[%s329 + $0x20] sm:$0xff]
                  %338 = vst [vmem:[%s330 + $0x18] sm:$0xff] %v337
                  %v339 = vld [vmem:[%s329 + $0x30] sm:$0xff]
                  %340 = vst [vmem:[%s330 + $0x20] sm:$0xff] %v339
                  %v341 = vld [vmem:[%s329 + $0x38] sm:$0xff]
                  %342 = vst [vmem:[%s330 + $0x28] sm:$0xff] %v341
                  %v343 = vld [vmem:[%s329 + $0x48] sm:$0xff]
                  %344 = vst [vmem:[%s330 + $0x30] sm:$0xff] %v343
                  %v345 = vld [vmem:[%s329 + $0x50] sm:$0xff]
                  %346 = vst [vmem:[%s330 + $0x38] sm:$0xff] %v345
                  %s347 = sadd.s32 1, %s328
                  %p348 = scmp.ge.s32.totalorder %s347, %s321
                  %s349 = scalar_select %p348, 0, %s347
                  %s350 = smul.u32 %s349, 16
                  %s351 = smul.u32 %s349, 16
                  %s352 = scalar_lea.vmem %s245, %s350
                  %s353 = scalar_lea.vmem %s235, %s351 [#allocation2]
                $region67: #{upsample_forward.1} parent=61 // loop_footer
                  %s325 = sadd.s32 %s323, 1
                $region68: #{upsample_forward.1} parent=61 // loop_footer_branch
                  %322 = sbr.rel target = $region64
                $region69: #{upsample_forward.1} parent=61 // loop_exit
                  _
                %s354 = sshrl.u32 %s239, 1
                %s355 = sand.u32 %s239, 1
                %s356 = smul.u32 %s354, 2
                %s357 = smul.u32 8, %s356
                %s358 = scalar_lea.vmem %s245, %s357
                %s359 = smul.u32 8, %s356
                %s360 = scalar_lea.vmem %s235, %s359 [#allocation2]
                // While loop
                $region70: #{upsample_forward.1} parent=61 // loop_pre_header
                  _
                $region71: #{upsample_forward.1} parent=61 // loop_header
                  %s362 = sphi 0, %s364
                  %p363 = scmp.ge.s32.totalorder %s362, %s355
                  %s367 = sphi 0, %s380
                  %s368 = sphi %s358, %s383
                  %s369 = sphi %s360, %s384
                $region72: #{upsample_forward.1} parent=61 // loop_header_branch
                  %366 = sbr.rel (%p363) target = $region76
                $region73: #{upsample_forward.1} parent=61 // loop_body
                  %v370 = vld [vmem:[%s368] sm:$0xff]
                  %371 = vst [vmem:[%s369] sm:$0xff] %v370
                  %v372 = vld [vmem:[%s368 + $0x18] sm:$0xff]
                  %373 = vst [vmem:[%s369 + $0x10] sm:$0xff] %v372
                  %v374 = vld [vmem:[%s368 + $0x30] sm:$0xff]
                  %375 = vst [vmem:[%s369 + $0x20] sm:$0xff] %v374
                  %v376 = vld [vmem:[%s368 + $0x48] sm:$0xff]
                  %377 = vst [vmem:[%s369 + $0x30] sm:$0xff] %v376
                  %s378 = sadd.s32 1, %s367
                  %p379 = scmp.ge.s32.totalorder %s378, %s355
                  %s380 = scalar_select %p379, 0, %s378
                  %s381 = smul.u32 %s380, 8
                  %s382 = smul.u32 %s380, 8
                  %s383 = scalar_lea.vmem %s358, %s381
                  %s384 = scalar_lea.vmem %s360, %s382 [#allocation2]
                $region74: #{upsample_forward.1} parent=61 // loop_footer
                  %s364 = sadd.s32 %s362, 1
                $region75: #{upsample_forward.1} parent=61 // loop_footer_branch
                  %361 = sbr.rel target = $region71
                $region76: #{upsample_forward.1} parent=61 // loop_exit
                  _
              $region62: #{upsample_forward.1} parent=39 // pred_fallthru
                _
              // Predicated region
              $region77: #{upsample_forward.1} parent=39 // pred_check
                _
              $region78: #{upsample_forward.1} parent=39 // pred_check_branch
                %386 = sbr.rel target = $region80
              $region79: #{upsample_forward.1} parent=39 // pred_region
                _
              $region80: #{upsample_forward.1} parent=39 // pred_fallthru
                _
            $region40: #{upsample_forward.1} parent=35 // pred_fallthru
              _
            // Predicated region
            $region41: #{upsample_forward.1} parent=35 // pred_check
              _
            $region42: #{upsample_forward.1} parent=35 // pred_check_branch
              %252 = sbr.rel target = $region44
            $region43: #{upsample_forward.1} parent=35 // pred_region
              %s254 = ssub.s32 256, 1
              %s255 = sshrl.u32 %s239, 1
              // While loop
              $region45: #{upsample_forward.1} parent=43 // loop_pre_header
                _
              $region46: #{upsample_forward.1} parent=43 // loop_header
                %s257 = sphi 0, %s259
                %p258 = scmp.ge.s32.totalorder %s257, %s255
                %s262 = sphi 0, %s283
                %s263 = sphi %s245, %s286
                %s264 = sphi %s235, %s287
              $region47: #{upsample_forward.1} parent=43 // loop_header_branch
                %261 = sbr.rel (%p258) target = $region51
              $region48: #{upsample_forward.1} parent=43 // loop_body
                %v265 = vld [vmem:[%s263] sm:%s254]
                %266 = vst [vmem:[%s264] sm:%s254] %v265
                %v267 = vld [vmem:[%s263 + $0x8] sm:%s254]
                %268 = vst [vmem:[%s264 + $0x8] sm:%s254] %v267
                %v269 = vld [vmem:[%s263 + $0x18] sm:%s254]
                %270 = vst [vmem:[%s264 + $0x10] sm:%s254] %v269
                %v271 = vld [vmem:[%s263 + $0x20] sm:%s254]
                %272 = vst [vmem:[%s264 + $0x18] sm:%s254] %v271
                %v273 = vld [vmem:[%s263 + $0x30] sm:%s254]
                %274 = vst [vmem:[%s264 + $0x20] sm:%s254] %v273
                %v275 = vld [vmem:[%s263 + $0x38] sm:%s254]
                %276 = vst [vmem:[%s264 + $0x28] sm:%s254] %v275
                %v277 = vld [vmem:[%s263 + $0x48] sm:%s254]
                %278 = vst [vmem:[%s264 + $0x30] sm:%s254] %v277
                %v279 = vld [vmem:[%s263 + $0x50] sm:%s254]
                %280 = vst [vmem:[%s264 + $0x38] sm:%s254] %v279
                %s281 = sadd.s32 1, %s262
                %p282 = scmp.ge.s32.totalorder %s281, %s255
                %s283 = scalar_select %p282, 0, %s281
                %s284 = smul.u32 %s283, 16
                %s285 = smul.u32 %s283, 16
                %s286 = scalar_lea.vmem %s245, %s284
                %s287 = scalar_lea.vmem %s235, %s285 [#allocation2]
              $region49: #{upsample_forward.1} parent=43 // loop_footer
                %s259 = sadd.s32 %s257, 1
              $region50: #{upsample_forward.1} parent=43 // loop_footer_branch
                %256 = sbr.rel target = $region46
              $region51: #{upsample_forward.1} parent=43 // loop_exit
                _
              %s288 = sshrl.u32 %s239, 1
              %s289 = sand.u32 %s239, 1
              %s290 = smul.u32 %s288, 2
              %s291 = smul.u32 8, %s290
              %s292 = scalar_lea.vmem %s245, %s291
              %s293 = smul.u32 8, %s290
              %s294 = scalar_lea.vmem %s235, %s293 [#allocation2]
              // While loop
              $region52: #{upsample_forward.1} parent=43 // loop_pre_header
                _
              $region53: #{upsample_forward.1} parent=43 // loop_header
                %s296 = sphi 0, %s298
                %p297 = scmp.ge.s32.totalorder %s296, %s289
                %s301 = sphi 0, %s314
                %s302 = sphi %s292, %s317
                %s303 = sphi %s294, %s318
              $region54: #{upsample_forward.1} parent=43 // loop_header_branch
                %300 = sbr.rel (%p297) target = $region58
              $region55: #{upsample_forward.1} parent=43 // loop_body
                %v304 = vld [vmem:[%s302] sm:%s254]
                %305 = vst [vmem:[%s303] sm:%s254] %v304
                %v306 = vld [vmem:[%s302 + $0x18] sm:%s254]
                %307 = vst [vmem:[%s303 + $0x10] sm:%s254] %v306
                %v308 = vld [vmem:[%s302 + $0x30] sm:%s254]
                %309 = vst [vmem:[%s303 + $0x20] sm:%s254] %v308
                %v310 = vld [vmem:[%s302 + $0x48] sm:%s254]
                %311 = vst [vmem:[%s303 + $0x30] sm:%s254] %v310
                %s312 = sadd.s32 1, %s301
                %p313 = scmp.ge.s32.totalorder %s312, %s289
                %s314 = scalar_select %p313, 0, %s312
                %s315 = smul.u32 %s314, 8
                %s316 = smul.u32 %s314, 8
                %s317 = scalar_lea.vmem %s292, %s315
                %s318 = scalar_lea.vmem %s294, %s316 [#allocation2]
              $region56: #{upsample_forward.1} parent=43 // loop_footer
                %s298 = sadd.s32 %s296, 1
              $region57: #{upsample_forward.1} parent=43 // loop_footer_branch
                %295 = sbr.rel target = $region53
              $region58: #{upsample_forward.1} parent=43 // loop_exit
                _
            $region44: #{upsample_forward.1} parent=35 // pred_fallthru
              _
          $region36: #{upsample_forward.1} parent=31 // pred_fallthru
            _
          %387 = vnop
        $region32: #{upsample_forward.1} parent=27 // pred_fallthru
          _
        // Predicated region
        $region81: #{upsample_forward.1} parent=27 // pred_check
          %p388 = pneg %p84
        $region82: #{upsample_forward.1} parent=27 // pred_check_branch
          %390 = sbr.rel (%p388) target = $region84
        $region83: #{upsample_forward.1} parent=27 // pred_region
          %s391 = sand.u32 %s74, 1
          %s392 = sand.u32 %s74, 1
          %s393 = smul.addr %s392, 32
          %s394 = scalar_lea.vmem [#allocation3], %s393
          %s395 = sadd.s32 %s20, 1
          %s396 = smul.u32 %s395, 2
          %s397 = smul.addr %s18, 12
          %s398 = sadd.s32 %s396, %s397
          %s399 = smul.addr %s398, 8
          %s400 = scalar_lea.vmem %s1, %s399
          // Predicated region
          $region85: #{upsample_forward.1} parent=83 // pred_check
            _
          $region86: #{upsample_forward.1} parent=83 // pred_check_branch
            %402 = sbr.rel (0) target = $region88
          $region87: #{upsample_forward.1} parent=83 // pred_region
            // Predicated region
            $region89: #{upsample_forward.1} parent=87 // pred_check
              _
            $region90: #{upsample_forward.1} parent=87 // pred_check_branch
              %404 = sbr.rel (0) target = $region92
            $region91: #{upsample_forward.1} parent=87 // pred_region
              // Predicated region
              $region104: #{upsample_forward.1} parent=91 // pred_check
                _
              $region105: #{upsample_forward.1} parent=91 // pred_check_branch
                %426 = sbr.rel (0) target = $region107
              $region106: #{upsample_forward.1} parent=91 // pred_region
                loop: start=0, step=1, limit=1
                $region108: #{upsample_forward.1} parent=106 // loop_pre_header
                  _
                $region109: #{upsample_forward.1} parent=106 // loop_header
                  %s428 = sphi 0, %s432
                  %p429 = scmp.ge.s32.totalorder %s428, 1
                  %s433 = sphi %s400, %s400
                  %s434 = sphi %s394, %s394
                $region110: #{upsample_forward.1} parent=106 // loop_header_branch
                  %431 = sbr.rel (%p429) target = $region114
                $region111: #{upsample_forward.1} parent=106 // loop_body
                  %v435 = vld [vmem:[%s433] sm:$0xff]
                  %436 = vst [vmem:[%s434] sm:$0xff] %v435
                  %v437 = vld [vmem:[%s433 + $0x18] sm:$0xff]
                  %438 = vst [vmem:[%s434 + $0x8] sm:$0xff] %v437
                  %v439 = vld [vmem:[%s433 + $0x30] sm:$0xff]
                  %440 = vst [vmem:[%s434 + $0x10] sm:$0xff] %v439
                  %v441 = vld [vmem:[%s433 + $0x48] sm:$0xff]
                  %442 = vst [vmem:[%s434 + $0x18] sm:$0xff] %v441
                $region112: #{upsample_forward.1} parent=106 // loop_footer
                  %s432 = sadd.s32 1, %s428
                $region113: #{upsample_forward.1} parent=106 // loop_footer_branch
                  %427 = sbr.rel target = $region109
                $region114: #{upsample_forward.1} parent=106 // loop_exit
                  _
              $region107: #{upsample_forward.1} parent=91 // pred_fallthru
                _
              // Predicated region
              $region115: #{upsample_forward.1} parent=91 // pred_check
                _
              $region116: #{upsample_forward.1} parent=91 // pred_check_branch
                %444 = sbr.rel target = $region118
              $region117: #{upsample_forward.1} parent=91 // pred_region
                _
              $region118: #{upsample_forward.1} parent=91 // pred_fallthru
                _
            $region92: #{upsample_forward.1} parent=87 // pred_fallthru
              _
            // Predicated region
            $region93: #{upsample_forward.1} parent=87 // pred_check
              _
            $region94: #{upsample_forward.1} parent=87 // pred_check_branch
              %406 = sbr.rel target = $region96
            $region95: #{upsample_forward.1} parent=87 // pred_region
              %s408 = ssub.s32 256, 1
              loop: start=0, step=1, limit=1
              $region97: #{upsample_forward.1} parent=95 // loop_pre_header
                _
              $region98: #{upsample_forward.1} parent=95 // loop_header
                %s410 = sphi 0, %s414
                %p411 = scmp.ge.s32.totalorder %s410, 1
                %s415 = sphi %s400, %s400
                %s416 = sphi %s394, %s394
              $region99: #{upsample_forward.1} parent=95 // loop_header_branch
                %413 = sbr.rel (%p411) target = $region103
              $region100: #{upsample_forward.1} parent=95 // loop_body
                %v417 = vld [vmem:[%s415] sm:%s408]
                %418 = vst [vmem:[%s416] sm:%s408] %v417
                %v419 = vld [vmem:[%s415 + $0x18] sm:%s408]
                %420 = vst [vmem:[%s416 + $0x8] sm:%s408] %v419
                %v421 = vld [vmem:[%s415 + $0x30] sm:%s408]
                %422 = vst [vmem:[%s416 + $0x10] sm:%s408] %v421
                %v423 = vld [vmem:[%s415 + $0x48] sm:%s408]
                %424 = vst [vmem:[%s416 + $0x18] sm:%s408] %v423
              $region101: #{upsample_forward.1} parent=95 // loop_footer
                %s414 = sadd.s32 1, %s410
              $region102: #{upsample_forward.1} parent=95 // loop_footer_branch
                %409 = sbr.rel target = $region98
              $region103: #{upsample_forward.1} parent=95 // loop_exit
                _
            $region96: #{upsample_forward.1} parent=87 // pred_fallthru
              _
          $region88: #{upsample_forward.1} parent=83 // pred_fallthru
            _
          %445 = vnop
        $region84: #{upsample_forward.1} parent=27 // pred_fallthru
          _
      $region28: #{upsample_forward.1} parent=5 // pred_fallthru
        _
      %p446 = scmp.le.s32.totalorder 1, %s11
      %p447 = scmp.lt.s32.totalorder %s11, 3
      %p448 = pnand %p446, %p447
      %p449 = pneg %p448
      // Predicated region
      $region119: #{upsample_forward.1} parent=5 // pred_check
        _
      $region120: #{upsample_forward.1} parent=5 // pred_check_branch
        %451 = sbr.rel (%p448) target = $region122
      $region121: #{upsample_forward.1} parent=5 // pred_region
        %s452 = ssub.s32 %s11, 1
        %s453 = sand.u32 %s45, 1
        %s454 = sand.u32 %s45, 1
        %s455 = smul.addr %s454, 64
        %s456 = scalar_lea.vmem [#allocation2], %s455
        // Predicated region
        $region123: #{upsample_forward.1} parent=121 // pred_check
          %p457 = pneg %p58
        $region124: #{upsample_forward.1} parent=121 // pred_check_branch
          %459 = sbr.rel (%p457) target = $region126
        $region125: #{upsample_forward.1} parent=121 // pred_region
          _
        $region126: #{upsample_forward.1} parent=121 // pred_fallthru
          _
        %s460 = sand.u32 %s77, 1
        %s461 = sand.u32 %s77, 1
        %s462 = smul.addr %s461, 32
        %s463 = scalar_lea.vmem [#allocation3], %s462
        // Predicated region
        $region127: #{upsample_forward.1} parent=121 // pred_check
          %p464 = pneg %p90
        $region128: #{upsample_forward.1} parent=121 // pred_check_branch
          %466 = sbr.rel (%p464) target = $region130
        $region129: #{upsample_forward.1} parent=121 // pred_region
          _
        $region130: #{upsample_forward.1} parent=121 // pred_fallthru
          _
        %s467 = sand.u32 %s45, 1
        %s468 = sand.u32 %s45, 1
        %s469 = smul.addr %s468, 64
        %s470 = scalar_lea.vmem [#allocation2], %s469
        %p471 = pneg %p58
        %p472 = pneg %p55
        %s473 = sand.u32 %s77, 1
        %s474 = sand.u32 %s77, 1
        %s475 = smul.addr %s474, 32
        %s476 = scalar_lea.vmem [#allocation3], %s475
        %p477 = pneg %p90
        %p478 = pneg %p87
        %p479 = scmp.lt.s32.totalorder %s22, 0
        %s480 = scalar_select %p479, %s22, 0
        %s481 = smul.addr %s480, 4
        %s482 = scalar_lea.vmem %s2, %s481
        %p483 = pneg %p116
        %p484 = pneg %p113
        %p485 = scmp.lt.s32.totalorder %s22, 0
        %s486 = scalar_select %p485, %s22, 0
        %s487 = smul.addr %s486, 4
        %s488 = scalar_lea.vmem %s3, %s487
        %p489 = pneg %p142
        %p490 = pneg %p139
        %p491 = pneg %p163
        %p492 = pneg %p160
        %p493 = pneg %p193
        %p494 = pneg %p190
        %s495 = smul.u32 4, %s22
        %s496 = smul.u32 2, %s23
        %p497 = scmp.lt.s32.totalorder %s21, 1
        %s498 = scalar_select %p497, %s21, 1
        %p499 = scmp.lt.s32.totalorder %s495, 3
        %s500 = scalar_select %p499, %s495, 3
        %p501 = scmp.lt.s32.totalorder %s496, 1
        %s502 = scalar_select %p501, %s496, 1
        %s503 = smul.addr %s500, 2
        %s504 = sadd.s32 %s502, %s503
        %s505 = smul.addr %s498, 8
        %s506 = sadd.s32 %s504, %s505
        %s507 = smul.addr %s506, 8
        %s508 = scalar_lea.vmem %s5, %s507
        %s509 = smul.u32 2, %s23
        %s510 = ssub.s32 3, %s509
        %p511 = scmp.lt.s32.totalorder %s510, 2
        %s512 = scalar_select %p511, %s510, 2
        %s513 = smul.u32 512, %s512
        %s514 = sadd.s32 %s23, 1
        %s515 = smul.u32 %s514, 2
        %p516 = scmp.lt.s32.totalorder %s22, 0
        %s517 = scalar_select %p516, %s22, 0
        %s518 = smul.addr %s517, 4
        %s519 = scalar_lea.vmem %s2, %s518
        %p520 = scmp.lt.s32.totalorder %s22, 0
        %s521 = scalar_select %p520, %s22, 0
        %s522 = smul.addr %s521, 4
        %s523 = scalar_lea.vmem %s3, %s522
        %s524 = smul.u32 4, %s22
        %s525 = smul.u32 2, %s23
        %p526 = scmp.lt.s32.totalorder %s21, 1
        %s527 = scalar_select %p526, %s21, 1
        %p528 = scmp.lt.s32.totalorder %s524, 3
        %s529 = scalar_select %p528, %s524, 3
        %p530 = scmp.lt.s32.totalorder %s525, 1
        %s531 = scalar_select %p530, %s525, 1
        %s532 = smul.addr %s529, 2
        %s533 = sadd.s32 %s531, %s532
        %s534 = smul.addr %s527, 8
        %s535 = sadd.s32 %s533, %s534
        %s536 = smul.addr %s535, 8
        %s537 = scalar_lea.vmem %s5, %s536
        %s538 = smul.u32 4, %s22
        %s539 = smul.u32 2, %s23
        %v540 = vld [vmem:[%s4] sm:$0xff]
        %v541 = vld [vmem:[%s4 + $0x8] sm:$0xff]
        %v542 = vld [vmem:[%s4 + $0x10] sm:$0x3]
        %v543 = vld [vmem:[%s523] sm:$0xf]
        %v544 = vld [vmem:[%s519] sm:$0xf]
        %s545 = scalar_lea.vmem %s519, 4
        %v546 = vld [vmem:[%s545] sm:$0xf]
        %v547 = vld [vmem:[%s456] sm:$0x1]
        %v548 = vld [vmem:[%s456 + $0x10] sm:$0x1]
        %v549 = vld [vmem:[%s456 + $0x20] sm:$0x1]
        %v550 = vld [vmem:[%s456 + $0x30] sm:$0x1]
        %v555 = vrot.slane %v548, 7
        %vm556 = vcmask 1041409
        %v557 = vsel %vm556, %v555, %v547
        %v558 = vrot.slane %v549, 6
        %vm559 = vcmask 1042434
        %v560 = vsel %vm559, %v558, %v557
        %v561 = vrot.slane %v550, 5
        %vm562 = vcmask 1043459
        %v563 = vsel %vm562, %v561, %v560
        %vm564 = vcmask 146432
        %v565 = vsel %vm564, %v563, 0
        %vm567 = vcmask 1041408
        %v569 = vsel %vm567, %v542, 0
        %571 = vmatprep.subr.mxu0 0.0
        %572 = vmatpush1.msra.mxu0 0.0
        %573 = vmatprep.subr.mxu0 0.0
        %574 = vmatpush1.msra.mxu0 0.0
        %575 = vmatprep.subr.mxu0 0.0
        %576 = vmatpush1.msra.mxu0 0.0
        %577 = vmatprep.subr.mxu0 0.0
        %578 = vmatpush1.msra.mxu0 0.0
        %579 = vmatprep.subr.mxu0 0.0
        %580 = vmatpush1.msra.mxu0 0.0
        %581 = vmatprep.subr.mxu0 0.0
        %582 = vmatpush1.msra.mxu0 0.0
        %583 = vmatprep.subr.mxu0 0.0
        %584 = vmatpush1.msra.mxu0 0.0
        %585 = vmatprep.subr.mxu0 0.0
        %586 = vmatpush1.msra.mxu0 0.0
        %587 = vmatprep.subr.mxu0 0.0
        %588 = vmatpush1.msra.mxu0 0.0
        %589 = vmatprep.subr.mxu0 0.0
        %590 = vmatpush1.msra.mxu0 0.0
        %591 = vmatprep.subr.mxu0 0.0
        %592 = vmatpush1.msra.mxu0 0.0
        %593 = vmatprep.subr.mxu0 0.0
        %594 = vmatpush1.msra.mxu0 0.0
        %595 = vmatprep.subr.mxu0 0.0
        %596 = vmatpush1.msra.mxu0 0.0
        %597 = vmatprep.subr.mxu0 0.0
        %598 = vmatpush1.msra.mxu0 %v569
        %599 = vmatprep.subr.mxu0 0.0
        %600 = vmatpush1.msra.mxu0 %v541
        %601 = vmatprep.subr.mxu0 0.0
        %602 = vmatpush1.msra.mxu0 %v540
        %603 = vmatprep.subr.mxu0 0.0
        %604 = vmatpush2.msra.mxu0 0.0
        %605 = vmatprep.subr.mxu0 0.0
        %606 = vmatpush2.msra.mxu0 0.0
        %607 = vmatprep.subr.mxu0 0.0
        %608 = vmatpush2.msra.mxu0 0.0
        %609 = vmatprep.subr.mxu0 0.0
        %610 = vmatpush2.msra.mxu0 0.0
        %611 = vmatprep.subr.mxu0 0.0
        %612 = vmatpush2.msra.mxu0 0.0
        %613 = vmatprep.subr.mxu0 0.0
        %614 = vmatpush2.msra.mxu0 0.0
        %615 = vmatprep.subr.mxu0 0.0
        %616 = vmatpush2.msra.mxu0 0.0
        %617 = vmatprep.subr.mxu0 0.0
        %618 = vmatpush2.msra.mxu0 0.0
        %619 = vmatprep.subr.mxu0 0.0
        %620 = vmatpush2.msra.mxu0 0.0
        %621 = vmatprep.subr.mxu0 0.0
        %622 = vmatpush2.msra.mxu0 0.0
        %623 = vmatprep.subr.mxu0 0.0
        %624 = vmatpush2.msra.mxu0 0.0
        %625 = vmatprep.subr.mxu0 0.0
        %626 = vmatpush2.msra.mxu0 0.0
        %627 = vmatprep.subr.mxu0 0.0
        %628 = vmatpush2.msra.mxu0 0.0
        %629 = vmatprep.subr.mxu0 0.0
        %630 = vmatpush2.msra.mxu0 0.0
        %631 = vmatprep.subr.mxu0 0.0
        %632 = vmatpush2.msra.mxu0 0.0
        %633 = vmatprep.subr.mxu0 0.0
        %634 = vmatpush2.msra.mxu0 0.0
        %635 = vmatprep.mubr.f32.mxu0 0.0
        %636 = vmatmul.mubr.f32.gmra.mxu0 %v565
        %v637 = vpop.f32.mrf.mxu0
        %v638 = vadd.f32 0.0, %v637
        %v639 = vpop.f32.mrf.mxu0
        %640 = vdwg.mxu0
        %v641 = vld [vmem:[%s456 + $0x1] sm:$0x1]
        %v642 = vld [vmem:[%s456 + $0x11] sm:$0x1]
        %v643 = vld [vmem:[%s456 + $0x21] sm:$0x1]
        %v644 = vld [vmem:[%s456 + $0x31] sm:$0x1]
        %v649 = vrot.slane %v642, 7
        %v650 = vsel %vm556, %v649, %v641
        %v651 = vrot.slane %v643, 6
        %v652 = vsel %vm559, %v651, %v650
        %v653 = vrot.slane %v644, 5
        %v654 = vsel %vm562, %v653, %v652
        %v655 = vsel %vm564, %v654, 0
        %657 = vmatprep.subr.mxu0 0.0
        %658 = vmatpush1.msra.mxu0 0.0
        %659 = vmatprep.subr.mxu0 0.0
        %660 = vmatpush1.msra.mxu0 0.0
        %661 = vmatprep.subr.mxu0 0.0
        %662 = vmatpush1.msra.mxu0 0.0
        %663 = vmatprep.subr.mxu0 0.0
        %664 = vmatpush1.msra.mxu0 0.0
        %665 = vmatprep.subr.mxu0 0.0
        %666 = vmatpush1.msra.mxu0 0.0
        %667 = vmatprep.subr.mxu0 0.0
        %668 = vmatpush1.msra.mxu0 0.0
        %669 = vmatprep.subr.mxu0 0.0
        %670 = vmatpush1.msra.mxu0 0.0
        %671 = vmatprep.subr.mxu0 0.0
        %672 = vmatpush1.msra.mxu0 0.0
        %673 = vmatprep.subr.mxu0 0.0
        %674 = vmatpush1.msra.mxu0 0.0
        %675 = vmatprep.subr.mxu0 0.0
        %676 = vmatpush1.msra.mxu0 0.0
        %677 = vmatprep.subr.mxu0 0.0
        %678 = vmatpush1.msra.mxu0 0.0
        %679 = vmatprep.subr.mxu0 0.0
        %680 = vmatpush1.msra.mxu0 0.0
        %681 = vmatprep.subr.mxu0 0.0
        %682 = vmatpush1.msra.mxu0 0.0
        %683 = vmatprep.subr.mxu0 0.0
        %684 = vmatpush1.msra.mxu0 %v569
        %685 = vmatprep.subr.mxu0 0.0
        %686 = vmatpush1.msra.mxu0 %v541
        %687 = vmatprep.subr.mxu0 0.0
        %688 = vmatpush1.msra.mxu0 %v540
        %689 = vmatprep.subr.mxu0 0.0
        %690 = vmatpush2.msra.mxu0 0.0
        %691 = vmatprep.subr.mxu0 0.0
        %692 = vmatpush2.msra.mxu0 0.0
        %693 = vmatprep.subr.mxu0 0.0
        %694 = vmatpush2.msra.mxu0 0.0
        %695 = vmatprep.subr.mxu0 0.0
        %696 = vmatpush2.msra.mxu0 0.0
        %697 = vmatprep.subr.mxu0 0.0
        %698 = vmatpush2.msra.mxu0 0.0
        %699 = vmatprep.subr.mxu0 0.0
        %700 = vmatpush2.msra.mxu0 0.0
        %701 = vmatprep.subr.mxu0 0.0
        %702 = vmatpush2.msra.mxu0 0.0
        %703 = vmatprep.subr.mxu0 0.0
        %704 = vmatpush2.msra.mxu0 0.0
        %705 = vmatprep.subr.mxu0 0.0
        %706 = vmatpush2.msra.mxu0 0.0
        %707 = vmatprep.subr.mxu0 0.0
        %708 = vmatpush2.msra.mxu0 0.0
        %709 = vmatprep.subr.mxu0 0.0
        %710 = vmatpush2.msra.mxu0 0.0
        %711 = vmatprep.subr.mxu0 0.0
        %712 = vmatpush2.msra.mxu0 0.0
        %713 = vmatprep.subr.mxu0 0.0
        %714 = vmatpush2.msra.mxu0 0.0
        %715 = vmatprep.subr.mxu0 0.0
        %716 = vmatpush2.msra.mxu0 0.0
        %717 = vmatprep.subr.mxu0 0.0
        %718 = vmatpush2.msra.mxu0 0.0
        %719 = vmatprep.subr.mxu0 0.0
        %720 = vmatpush2.msra.mxu0 0.0
        %721 = vmatprep.mubr.f32.mxu0 0.0
        %722 = vmatmul.mubr.f32.gmra.mxu0 %v655
        %v723 = vpop.f32.mrf.mxu0
        %v724 = vadd.f32 0.0, %v723
        %v725 = vpop.f32.mrf.mxu0
        %726 = vdwg.mxu0
        %v727 = vld [vmem:[%s456 + $0x2] sm:$0x1]
        %v728 = vld [vmem:[%s456 + $0x12] sm:$0x1]
        %v729 = vld [vmem:[%s456 + $0x22] sm:$0x1]
        %v730 = vld [vmem:[%s456 + $0x32] sm:$0x1]
        %v735 = vrot.slane %v728, 7
        %v736 = vsel %vm556, %v735, %v727
        %v737 = vrot.slane %v729, 6
        %v738 = vsel %vm559, %v737, %v736
        %v739 = vrot.slane %v730, 5
        %v740 = vsel %vm562, %v739, %v738
        %v741 = vsel %vm564, %v740, 0
        %743 = vmatprep.subr.mxu0 0.0
        %744 = vmatpush1.msra.mxu0 0.0
        %745 = vmatprep.subr.mxu0 0.0
        %746 = vmatpush1.msra.mxu0 0.0
        %747 = vmatprep.subr.mxu0 0.0
        %748 = vmatpush1.msra.mxu0 0.0
        %749 = vmatprep.subr.mxu0 0.0
        %750 = vmatpush1.msra.mxu0 0.0
        %751 = vmatprep.subr.mxu0 0.0
        %752 = vmatpush1.msra.mxu0 0.0
        %753 = vmatprep.subr.mxu0 0.0
        %754 = vmatpush1.msra.mxu0 0.0
        %755 = vmatprep.subr.mxu0 0.0
        %756 = vmatpush1.msra.mxu0 0.0
        %757 = vmatprep.subr.mxu0 0.0
        %758 = vmatpush1.msra.mxu0 0.0
        %759 = vmatprep.subr.mxu0 0.0
        %760 = vmatpush1.msra.mxu0 0.0
        %761 = vmatprep.subr.mxu0 0.0
        %762 = vmatpush1.msra.mxu0 0.0
        %763 = vmatprep.subr.mxu0 0.0
        %764 = vmatpush1.msra.mxu0 0.0
        %765 = vmatprep.subr.mxu0 0.0
        %766 = vmatpush1.msra.mxu0 0.0
        %767 = vmatprep.subr.mxu0 0.0
        %768 = vmatpush1.msra.mxu0 0.0
        %769 = vmatprep.subr.mxu0 0.0
        %770 = vmatpush1.msra.mxu0 %v569
        %771 = vmatprep.subr.mxu0 0.0
        %772 = vmatpush1.msra.mxu0 %v541
        %773 = vmatprep.subr.mxu0 0.0
        %774 = vmatpush1.msra.mxu0 %v540
        %775 = vmatprep.subr.mxu0 0.0
        %776 = vmatpush2.msra.mxu0 0.0
        %777 = vmatprep.subr.mxu0 0.0
        %778 = vmatpush2.msra.mxu0 0.0
        %779 = vmatprep.subr.mxu0 0.0
        %780 = vmatpush2.msra.mxu0 0.0
        %781 = vmatprep.subr.mxu0 0.0
        %782 = vmatpush2.msra.mxu0 0.0
        %783 = vmatprep.subr.mxu0 0.0
        %784 = vmatpush2.msra.mxu0 0.0
        %785 = vmatprep.subr.mxu0 0.0
        %786 = vmatpush2.msra.mxu0 0.0
        %787 = vmatprep.subr.mxu0 0.0
        %788 = vmatpush2.msra.mxu0 0.0
        %789 = vmatprep.subr.mxu0 0.0
        %790 = vmatpush2.msra.mxu0 0.0
        %791 = vmatprep.subr.mxu0 0.0
        %792 = vmatpush2.msra.mxu0 0.0
        %793 = vmatprep.subr.mxu0 0.0
        %794 = vmatpush2.msra.mxu0 0.0
        %795 = vmatprep.subr.mxu0 0.0
        %796 = vmatpush2.msra.mxu0 0.0
        %797 = vmatprep.subr.mxu0 0.0
        %798 = vmatpush2.msra.mxu0 0.0
        %799 = vmatprep.subr.mxu0 0.0
        %800 = vmatpush2.msra.mxu0 0.0
        %801 = vmatprep.subr.mxu0 0.0
        %802 = vmatpush2.msra.mxu0 0.0
        %803 = vmatprep.subr.mxu0 0.0
        %804 = vmatpush2.msra.mxu0 0.0
        %805 = vmatprep.subr.mxu0 0.0
        %806 = vmatpush2.msra.mxu0 0.0
        %807 = vmatprep.mubr.f32.mxu0 0.0
        %808 = vmatmul.mubr.f32.gmra.mxu0 %v741
        %v809 = vpop.f32.mrf.mxu0
        %v810 = vadd.f32 0.0, %v809
        %v811 = vpop.f32.mrf.mxu0
        %812 = vdwg.mxu0
        %v813 = vld [vmem:[%s456 + $0x3] sm:$0x1]
        %v814 = vld [vmem:[%s456 + $0x13] sm:$0x1]
        %v815 = vld [vmem:[%s456 + $0x23] sm:$0x1]
        %v816 = vld [vmem:[%s456 + $0x33] sm:$0x1]
        %v821 = vrot.slane %v814, 7
        %v822 = vsel %vm556, %v821, %v813
        %v823 = vrot.slane %v815, 6
        %v824 = vsel %vm559, %v823, %v822
        %v825 = vrot.slane %v816, 5
        %v826 = vsel %vm562, %v825, %v824
        %v827 = vsel %vm564, %v826, 0
        %829 = vmatprep.subr.mxu0 0.0
        %830 = vmatpush1.msra.mxu0 0.0
        %831 = vmatprep.subr.mxu0 0.0
        %832 = vmatpush1.msra.mxu0 0.0
        %833 = vmatprep.subr.mxu0 0.0
        %834 = vmatpush1.msra.mxu0 0.0
        %835 = vmatprep.subr.mxu0 0.0
        %836 = vmatpush1.msra.mxu0 0.0
        %837 = vmatprep.subr.mxu0 0.0
        %838 = vmatpush1.msra.mxu0 0.0
        %839 = vmatprep.subr.mxu0 0.0
        %840 = vmatpush1.msra.mxu0 0.0
        %841 = vmatprep.subr.mxu0 0.0
        %842 = vmatpush1.msra.mxu0 0.0
        %843 = vmatprep.subr.mxu0 0.0
        %844 = vmatpush1.msra.mxu0 0.0
        %845 = vmatprep.subr.mxu0 0.0
        %846 = vmatpush1.msra.mxu0 0.0
        %847 = vmatprep.subr.mxu0 0.0
        %848 = vmatpush1.msra.mxu0 0.0
        %849 = vmatprep.subr.mxu0 0.0
        %850 = vmatpush1.msra.mxu0 0.0
        %851 = vmatprep.subr.mxu0 0.0
        %852 = vmatpush1.msra.mxu0 0.0
        %853 = vmatprep.subr.mxu0 0.0
        %854 = vmatpush1.msra.mxu0 0.0
        %855 = vmatprep.subr.mxu0 0.0
        %856 = vmatpush1.msra.mxu0 %v569
        %857 = vmatprep.subr.mxu0 0.0
        %858 = vmatpush1.msra.mxu0 %v541
        %859 = vmatprep.subr.mxu0 0.0
        %860 = vmatpush1.msra.mxu0 %v540
        %861 = vmatprep.subr.mxu0 0.0
        %862 = vmatpush2.msra.mxu0 0.0
        %863 = vmatprep.subr.mxu0 0.0
        %864 = vmatpush2.msra.mxu0 0.0
        %865 = vmatprep.subr.mxu0 0.0
        %866 = vmatpush2.msra.mxu0 0.0
        %867 = vmatprep.subr.mxu0 0.0
        %868 = vmatpush2.msra.mxu0 0.0
        %869 = vmatprep.subr.mxu0 0.0
        %870 = vmatpush2.msra.mxu0 0.0
        %871 = vmatprep.subr.mxu0 0.0
        %872 = vmatpush2.msra.mxu0 0.0
        %873 = vmatprep.subr.mxu0 0.0
        %874 = vmatpush2.msra.mxu0 0.0
        %875 = vmatprep.subr.mxu0 0.0
        %876 = vmatpush2.msra.mxu0 0.0
        %877 = vmatprep.subr.mxu0 0.0
        %878 = vmatpush2.msra.mxu0 0.0
        %879 = vmatprep.subr.mxu0 0.0
        %880 = vmatpush2.msra.mxu0 0.0
        %881 = vmatprep.subr.mxu0 0.0
        %882 = vmatpush2.msra.mxu0 0.0
        %883 = vmatprep.subr.mxu0 0.0
        %884 = vmatpush2.msra.mxu0 0.0
        %885 = vmatprep.subr.mxu0 0.0
        %886 = vmatpush2.msra.mxu0 0.0
        %887 = vmatprep.subr.mxu0 0.0
        %888 = vmatpush2.msra.mxu0 0.0
        %889 = vmatprep.subr.mxu0 0.0
        %890 = vmatpush2.msra.mxu0 0.0
        %891 = vmatprep.subr.mxu0 0.0
        %892 = vmatpush2.msra.mxu0 0.0
        %893 = vmatprep.mubr.f32.mxu0 0.0
        %894 = vmatmul.mubr.f32.gmra.mxu0 %v827
        %v895 = vpop.f32.mrf.mxu0
        %v896 = vadd.f32 0.0, %v895
        %v897 = vpop.f32.mrf.mxu0
        %898 = vdwg.mxu0
        %v899 = vld [vmem:[%s456 + $0x4] sm:$0x1]
        %v900 = vld [vmem:[%s456 + $0x14] sm:$0x1]
        %v901 = vld [vmem:[%s456 + $0x24] sm:$0x1]
        %v902 = vld [vmem:[%s456 + $0x34] sm:$0x1]
        %v907 = vrot.slane %v900, 7
        %v908 = vsel %vm556, %v907, %v899
        %v909 = vrot.slane %v901, 6
        %v910 = vsel %vm559, %v909, %v908
        %v911 = vrot.slane %v902, 5
        %v912 = vsel %vm562, %v911, %v910
        %v913 = vsel %vm564, %v912, 0
        %915 = vmatprep.subr.mxu0 0.0
        %916 = vmatpush1.msra.mxu0 0.0
        %917 = vmatprep.subr.mxu0 0.0
        %918 = vmatpush1.msra.mxu0 0.0
        %919 = vmatprep.subr.mxu0 0.0
        %920 = vmatpush1.msra.mxu0 0.0
        %921 = vmatprep.subr.mxu0 0.0
        %922 = vmatpush1.msra.mxu0 0.0
        %923 = vmatprep.subr.mxu0 0.0
        %924 = vmatpush1.msra.mxu0 0.0
        %925 = vmatprep.subr.mxu0 0.0
        %926 = vmatpush1.msra.mxu0 0.0
        %927 = vmatprep.subr.mxu0 0.0
        %928 = vmatpush1.msra.mxu0 0.0
        %929 = vmatprep.subr.mxu0 0.0
        %930 = vmatpush1.msra.mxu0 0.0
        %931 = vmatprep.subr.mxu0 0.0
        %932 = vmatpush1.msra.mxu0 0.0
        %933 = vmatprep.subr.mxu0 0.0
        %934 = vmatpush1.msra.mxu0 0.0
        %935 = vmatprep.subr.mxu0 0.0
        %936 = vmatpush1.msra.mxu0 0.0
        %937 = vmatprep.subr.mxu0 0.0
        %938 = vmatpush1.msra.mxu0 0.0
        %939 = vmatprep.subr.mxu0 0.0
        %940 = vmatpush1.msra.mxu0 0.0
        %941 = vmatprep.subr.mxu0 0.0
        %942 = vmatpush1.msra.mxu0 %v569
        %943 = vmatprep.subr.mxu0 0.0
        %944 = vmatpush1.msra.mxu0 %v541
        %945 = vmatprep.subr.mxu0 0.0
        %946 = vmatpush1.msra.mxu0 %v540
        %947 = vmatprep.subr.mxu0 0.0
        %948 = vmatpush2.msra.mxu0 0.0
        %949 = vmatprep.subr.mxu0 0.0
        %950 = vmatpush2.msra.mxu0 0.0
        %951 = vmatprep.subr.mxu0 0.0
        %952 = vmatpush2.msra.mxu0 0.0
        %953 = vmatprep.subr.mxu0 0.0
        %954 = vmatpush2.msra.mxu0 0.0
        %955 = vmatprep.subr.mxu0 0.0
        %956 = vmatpush2.msra.mxu0 0.0
        %957 = vmatprep.subr.mxu0 0.0
        %958 = vmatpush2.msra.mxu0 0.0
        %959 = vmatprep.subr.mxu0 0.0
        %960 = vmatpush2.msra.mxu0 0.0
        %961 = vmatprep.subr.mxu0 0.0
        %962 = vmatpush2.msra.mxu0 0.0
        %963 = vmatprep.subr.mxu0 0.0
        %964 = vmatpush2.msra.mxu0 0.0
        %965 = vmatprep.subr.mxu0 0.0
        %966 = vmatpush2.msra.mxu0 0.0
        %967 = vmatprep.subr.mxu0 0.0
        %968 = vmatpush2.msra.mxu0 0.0
        %969 = vmatprep.subr.mxu0 0.0
        %970 = vmatpush2.msra.mxu0 0.0
        %971 = vmatprep.subr.mxu0 0.0
        %972 = vmatpush2.msra.mxu0 0.0
        %973 = vmatprep.subr.mxu0 0.0
        %974 = vmatpush2.msra.mxu0 0.0
        %975 = vmatprep.subr.mxu0 0.0
        %976 = vmatpush2.msra.mxu0 0.0
        %977 = vmatprep.subr.mxu0 0.0
        %978 = vmatpush2.msra.mxu0 0.0
        %979 = vmatprep.mubr.f32.mxu0 0.0
        %980 = vmatmul.mubr.f32.gmra.mxu0 %v913
        %v981 = vpop.f32.mrf.mxu0
        %v982 = vadd.f32 0.0, %v981
        %v983 = vpop.f32.mrf.mxu0
        %984 = vdwg.mxu0
        %v985 = vld [vmem:[%s456 + $0x5] sm:$0x1]
        %v986 = vld [vmem:[%s456 + $0x15] sm:$0x1]
        %v987 = vld [vmem:[%s456 + $0x25] sm:$0x1]
        %v988 = vld [vmem:[%s456 + $0x35] sm:$0x1]
        %v993 = vrot.slane %v986, 7
        %v994 = vsel %vm556, %v993, %v985
        %v995 = vrot.slane %v987, 6
        %v996 = vsel %vm559, %v995, %v994
        %v997 = vrot.slane %v988, 5
        %v998 = vsel %vm562, %v997, %v996
        %v999 = vsel %vm564, %v998, 0
        %1001 = vmatprep.subr.mxu0 0.0
        %1002 = vmatpush1.msra.mxu0 0.0
        %1003 = vmatprep.subr.mxu0 0.0
        %1004 = vmatpush1.msra.mxu0 0.0
        %1005 = vmatprep.subr.mxu0 0.0
        %1006 = vmatpush1.msra.mxu0 0.0
        %1007 = vmatprep.subr.mxu0 0.0
        %1008 = vmatpush1.msra.mxu0 0.0
        %1009 = vmatprep.subr.mxu0 0.0
        %1010 = vmatpush1.msra.mxu0 0.0
        %1011 = vmatprep.subr.mxu0 0.0
        %1012 = vmatpush1.msra.mxu0 0.0
        %1013 = vmatprep.subr.mxu0 0.0
        %1014 = vmatpush1.msra.mxu0 0.0
        %1015 = vmatprep.subr.mxu0 0.0
        %1016 = vmatpush1.msra.mxu0 0.0
        %1017 = vmatprep.subr.mxu0 0.0
        %1018 = vmatpush1.msra.mxu0 0.0
        %1019 = vmatprep.subr.mxu0 0.0
        %1020 = vmatpush1.msra.mxu0 0.0
        %1021 = vmatprep.subr.mxu0 0.0
        %1022 = vmatpush1.msra.mxu0 0.0
        %1023 = vmatprep.subr.mxu0 0.0
        %1024 = vmatpush1.msra.mxu0 0.0
        %1025 = vmatprep.subr.mxu0 0.0
        %1026 = vmatpush1.msra.mxu0 0.0
        %1027 = vmatprep.subr.mxu0 0.0
        %1028 = vmatpush1.msra.mxu0 %v569
        %1029 = vmatprep.subr.mxu0 0.0
        %1030 = vmatpush1.msra.mxu0 %v541
        %1031 = vmatprep.subr.mxu0 0.0
        %1032 = vmatpush1.msra.mxu0 %v540
        %1033 = vmatprep.subr.mxu0 0.0
        %1034 = vmatpush2.msra.mxu0 0.0
        %1035 = vmatprep.subr.mxu0 0.0
        %1036 = vmatpush2.msra.mxu0 0.0
        %1037 = vmatprep.subr.mxu0 0.0
        %1038 = vmatpush2.msra.mxu0 0.0
        %1039 = vmatprep.subr.mxu0 0.0
        %1040 = vmatpush2.msra.mxu0 0.0
        %1041 = vmatprep.subr.mxu0 0.0
        %1042 = vmatpush2.msra.mxu0 0.0
        %1043 = vmatprep.subr.mxu0 0.0
        %1044 = vmatpush2.msra.mxu0 0.0
        %1045 = vmatprep.subr.mxu0 0.0
        %1046 = vmatpush2.msra.mxu0 0.0
        %1047 = vmatprep.subr.mxu0 0.0
        %1048 = vmatpush2.msra.mxu0 0.0
        %1049 = vmatprep.subr.mxu0 0.0
        %1050 = vmatpush2.msra.mxu0 0.0
        %1051 = vmatprep.subr.mxu0 0.0
        %1052 = vmatpush2.msra.mxu0 0.0
        %1053 = vmatprep.subr.mxu0 0.0
        %1054 = vmatpush2.msra.mxu0 0.0
        %1055 = vmatprep.subr.mxu0 0.0
        %1056 = vmatpush2.msra.mxu0 0.0
        %1057 = vmatprep.subr.mxu0 0.0
        %1058 = vmatpush2.msra.mxu0 0.0
        %1059 = vmatprep.subr.mxu0 0.0
        %1060 = vmatpush2.msra.mxu0 0.0
        %1061 = vmatprep.subr.mxu0 0.0
        %1062 = vmatpush2.msra.mxu0 0.0
        %1063 = vmatprep.subr.mxu0 0.0
        %1064 = vmatpush2.msra.mxu0 0.0
        %1065 = vmatprep.mubr.f32.mxu0 0.0
        %1066 = vmatmul.mubr.f32.gmra.mxu0 %v999
        %v1067 = vpop.f32.mrf.mxu0
        %v1068 = vadd.f32 0.0, %v1067
        %v1069 = vpop.f32.mrf.mxu0
        %1070 = vdwg.mxu0
        %v1071 = vld [vmem:[%s456 + $0x6] sm:$0x1]
        %v1072 = vld [vmem:[%s456 + $0x16] sm:$0x1]
        %v1073 = vld [vmem:[%s456 + $0x26] sm:$0x1]
        %v1074 = vld [vmem:[%s456 + $0x36] sm:$0x1]
        %v1079 = vrot.slane %v1072, 7
        %v1080 = vsel %vm556, %v1079, %v1071
        %v1081 = vrot.slane %v1073, 6
        %v1082 = vsel %vm559, %v1081, %v1080
        %v1083 = vrot.slane %v1074, 5
        %v1084 = vsel %vm562, %v1083, %v1082
        %v1085 = vsel %vm564, %v1084, 0
        %1087 = vmatprep.subr.mxu0 0.0
        %1088 = vmatpush1.msra.mxu0 0.0
        %1089 = vmatprep.subr.mxu0 0.0
        %1090 = vmatpush1.msra.mxu0 0.0
        %1091 = vmatprep.subr.mxu0 0.0
        %1092 = vmatpush1.msra.mxu0 0.0
        %1093 = vmatprep.subr.mxu0 0.0
        %1094 = vmatpush1.msra.mxu0 0.0
        %1095 = vmatprep.subr.mxu0 0.0
        %1096 = vmatpush1.msra.mxu0 0.0
        %1097 = vmatprep.subr.mxu0 0.0
        %1098 = vmatpush1.msra.mxu0 0.0
        %1099 = vmatprep.subr.mxu0 0.0
        %1100 = vmatpush1.msra.mxu0 0.0
        %1101 = vmatprep.subr.mxu0 0.0
        %1102 = vmatpush1.msra.mxu0 0.0
        %1103 = vmatprep.subr.mxu0 0.0
        %1104 = vmatpush1.msra.mxu0 0.0
        %1105 = vmatprep.subr.mxu0 0.0
        %1106 = vmatpush1.msra.mxu0 0.0
        %1107 = vmatprep.subr.mxu0 0.0
        %1108 = vmatpush1.msra.mxu0 0.0
        %1109 = vmatprep.subr.mxu0 0.0
        %1110 = vmatpush1.msra.mxu0 0.0
        %1111 = vmatprep.subr.mxu0 0.0
        %1112 = vmatpush1.msra.mxu0 0.0
        %1113 = vmatprep.subr.mxu0 0.0
        %1114 = vmatpush1.msra.mxu0 %v569
        %1115 = vmatprep.subr.mxu0 0.0
        %1116 = vmatpush1.msra.mxu0 %v541
        %1117 = vmatprep.subr.mxu0 0.0
        %1118 = vmatpush1.msra.mxu0 %v540
        %1119 = vmatprep.subr.mxu0 0.0
        %1120 = vmatpush2.msra.mxu0 0.0
        %1121 = vmatprep.subr.mxu0 0.0
        %1122 = vmatpush2.msra.mxu0 0.0
        %1123 = vmatprep.subr.mxu0 0.0
        %1124 = vmatpush2.msra.mxu0 0.0
        %1125 = vmatprep.subr.mxu0 0.0
        %1126 = vmatpush2.msra.mxu0 0.0
        %1127 = vmatprep.subr.mxu0 0.0
        %1128 = vmatpush2.msra.mxu0 0.0
        %1129 = vmatprep.subr.mxu0 0.0
        %1130 = vmatpush2.msra.mxu0 0.0
        %1131 = vmatprep.subr.mxu0 0.0
        %1132 = vmatpush2.msra.mxu0 0.0
        %1133 = vmatprep.subr.mxu0 0.0
        %1134 = vmatpush2.msra.mxu0 0.0
        %1135 = vmatprep.subr.mxu0 0.0
        %1136 = vmatpush2.msra.mxu0 0.0
        %1137 = vmatprep.subr.mxu0 0.0
        %1138 = vmatpush2.msra.mxu0 0.0
        %1139 = vmatprep.subr.mxu0 0.0
        %1140 = vmatpush2.msra.mxu0 0.0
        %1141 = vmatprep.subr.mxu0 0.0
        %1142 = vmatpush2.msra.mxu0 0.0
        %1143 = vmatprep.subr.mxu0 0.0
        %1144 = vmatpush2.msra.mxu0 0.0
        %1145 = vmatprep.subr.mxu0 0.0
        %1146 = vmatpush2.msra.mxu0 0.0
        %1147 = vmatprep.subr.mxu0 0.0
        %1148 = vmatpush2.msra.mxu0 0.0
        %1149 = vmatprep.subr.mxu0 0.0
        %1150 = vmatpush2.msra.mxu0 0.0
        %1151 = vmatprep.mubr.f32.mxu0 0.0
        %1152 = vmatmul.mubr.f32.gmra.mxu0 %v1085
        %v1153 = vpop.f32.mrf.mxu0
        %v1154 = vadd.f32 0.0, %v1153
        %v1155 = vpop.f32.mrf.mxu0
        %1156 = vdwg.mxu0
        %v1157 = vld [vmem:[%s456 + $0x7] sm:$0x1]
        %v1158 = vld [vmem:[%s456 + $0x17] sm:$0x1]
        %v1159 = vld [vmem:[%s456 + $0x27] sm:$0x1]
        %v1160 = vld [vmem:[%s456 + $0x37] sm:$0x1]
        %v1165 = vrot.slane %v1158, 7
        %v1166 = vsel %vm556, %v1165, %v1157
        %v1167 = vrot.slane %v1159, 6
        %v1168 = vsel %vm559, %v1167, %v1166
        %v1169 = vrot.slane %v1160, 5
        %v1170 = vsel %vm562, %v1169, %v1168
        %v1171 = vsel %vm564, %v1170, 0
        %1173 = vmatprep.subr.mxu0 0.0
        %1174 = vmatpush1.msra.mxu0 0.0
        %1175 = vmatprep.subr.mxu0 0.0
        %1176 = vmatpush1.msra.mxu0 0.0
        %1177 = vmatprep.subr.mxu0 0.0
        %1178 = vmatpush1.msra.mxu0 0.0
        %1179 = vmatprep.subr.mxu0 0.0
        %1180 = vmatpush1.msra.mxu0 0.0
        %1181 = vmatprep.subr.mxu0 0.0
        %1182 = vmatpush1.msra.mxu0 0.0
        %1183 = vmatprep.subr.mxu0 0.0
        %1184 = vmatpush1.msra.mxu0 0.0
        %1185 = vmatprep.subr.mxu0 0.0
        %1186 = vmatpush1.msra.mxu0 0.0
        %1187 = vmatprep.subr.mxu0 0.0
        %1188 = vmatpush1.msra.mxu0 0.0
        %1189 = vmatprep.subr.mxu0 0.0
        %1190 = vmatpush1.msra.mxu0 0.0
        %1191 = vmatprep.subr.mxu0 0.0
        %1192 = vmatpush1.msra.mxu0 0.0
        %1193 = vmatprep.subr.mxu0 0.0
        %1194 = vmatpush1.msra.mxu0 0.0
        %1195 = vmatprep.subr.mxu0 0.0
        %1196 = vmatpush1.msra.mxu0 0.0
        %1197 = vmatprep.subr.mxu0 0.0
        %1198 = vmatpush1.msra.mxu0 0.0
        %1199 = vmatprep.subr.mxu0 0.0
        %1200 = vmatpush1.msra.mxu0 %v569
        %1201 = vmatprep.subr.mxu0 0.0
        %1202 = vmatpush1.msra.mxu0 %v541
        %1203 = vmatprep.subr.mxu0 0.0
        %1204 = vmatpush1.msra.mxu0 %v540
        %1205 = vmatprep.subr.mxu0 0.0
        %1206 = vmatpush2.msra.mxu0 0.0
        %1207 = vmatprep.subr.mxu0 0.0
        %1208 = vmatpush2.msra.mxu0 0.0
        %1209 = vmatprep.subr.mxu0 0.0
        %1210 = vmatpush2.msra.mxu0 0.0
        %1211 = vmatprep.subr.mxu0 0.0
        %1212 = vmatpush2.msra.mxu0 0.0
        %1213 = vmatprep.subr.mxu0 0.0
        %1214 = vmatpush2.msra.mxu0 0.0
        %1215 = vmatprep.subr.mxu0 0.0
        %1216 = vmatpush2.msra.mxu0 0.0
        %1217 = vmatprep.subr.mxu0 0.0
        %1218 = vmatpush2.msra.mxu0 0.0
        %1219 = vmatprep.subr.mxu0 0.0
        %1220 = vmatpush2.msra.mxu0 0.0
        %1221 = vmatprep.subr.mxu0 0.0
        %1222 = vmatpush2.msra.mxu0 0.0
        %1223 = vmatprep.subr.mxu0 0.0
        %1224 = vmatpush2.msra.mxu0 0.0
        %1225 = vmatprep.subr.mxu0 0.0
        %1226 = vmatpush2.msra.mxu0 0.0
        %1227 = vmatprep.subr.mxu0 0.0
        %1228 = vmatpush2.msra.mxu0 0.0
        %1229 = vmatprep.subr.mxu0 0.0
        %1230 = vmatpush2.msra.mxu0 0.0
        %1231 = vmatprep.subr.mxu0 0.0
        %1232 = vmatpush2.msra.mxu0 0.0
        %1233 = vmatprep.subr.mxu0 0.0
        %1234 = vmatpush2.msra.mxu0 0.0
        %1235 = vmatprep.subr.mxu0 0.0
        %1236 = vmatpush2.msra.mxu0 0.0
        %1237 = vmatprep.mubr.f32.mxu0 0.0
        %1238 = vmatmul.mubr.f32.gmra.mxu0 %v1171
        %v1239 = vpop.f32.mrf.mxu0
        %v1240 = vadd.f32 0.0, %v1239
        %v1241 = vpop.f32.mrf.mxu0
        %1242 = vdwg.mxu0
        %v1243 = vld [vmem:[%s456 + $0x8] sm:$0x1]
        %v1244 = vld [vmem:[%s456 + $0x18] sm:$0x1]
        %v1245 = vld [vmem:[%s456 + $0x28] sm:$0x1]
        %v1246 = vld [vmem:[%s456 + $0x38] sm:$0x1]
        %v1251 = vrot.slane %v1244, 7
        %v1252 = vsel %vm556, %v1251, %v1243
        %v1253 = vrot.slane %v1245, 6
        %v1254 = vsel %vm559, %v1253, %v1252
        %v1255 = vrot.slane %v1246, 5
        %v1256 = vsel %vm562, %v1255, %v1254
        %v1257 = vsel %vm564, %v1256, 0
        %1259 = vmatprep.subr.mxu0 0.0
        %1260 = vmatpush1.msra.mxu0 0.0
        %1261 = vmatprep.subr.mxu0 0.0
        %1262 = vmatpush1.msra.mxu0 0.0
        %1263 = vmatprep.subr.mxu0 0.0
        %1264 = vmatpush1.msra.mxu0 0.0
        %1265 = vmatprep.subr.mxu0 0.0
        %1266 = vmatpush1.msra.mxu0 0.0
        %1267 = vmatprep.subr.mxu0 0.0
        %1268 = vmatpush1.msra.mxu0 0.0
        %1269 = vmatprep.subr.mxu0 0.0
        %1270 = vmatpush1.msra.mxu0 0.0
        %1271 = vmatprep.subr.mxu0 0.0
        %1272 = vmatpush1.msra.mxu0 0.0
        %1273 = vmatprep.subr.mxu0 0.0
        %1274 = vmatpush1.msra.mxu0 0.0
        %1275 = vmatprep.subr.mxu0 0.0
        %1276 = vmatpush1.msra.mxu0 0.0
        %1277 = vmatprep.subr.mxu0 0.0
        %1278 = vmatpush1.msra.mxu0 0.0
        %1279 = vmatprep.subr.mxu0 0.0
        %1280 = vmatpush1.msra.mxu0 0.0
        %1281 = vmatprep.subr.mxu0 0.0
        %1282 = vmatpush1.msra.mxu0 0.0
        %1283 = vmatprep.subr.mxu0 0.0
        %1284 = vmatpush1.msra.mxu0 0.0
        %1285 = vmatprep.subr.mxu0 0.0
        %1286 = vmatpush1.msra.mxu0 %v569
        %1287 = vmatprep.subr.mxu0 0.0
        %1288 = vmatpush1.msra.mxu0 %v541
        %1289 = vmatprep.subr.mxu0 0.0
        %1290 = vmatpush1.msra.mxu0 %v540
        %1291 = vmatprep.subr.mxu0 0.0
        %1292 = vmatpush2.msra.mxu0 0.0
        %1293 = vmatprep.subr.mxu0 0.0
        %1294 = vmatpush2.msra.mxu0 0.0
        %1295 = vmatprep.subr.mxu0 0.0
        %1296 = vmatpush2.msra.mxu0 0.0
        %1297 = vmatprep.subr.mxu0 0.0
        %1298 = vmatpush2.msra.mxu0 0.0
        %1299 = vmatprep.subr.mxu0 0.0
        %1300 = vmatpush2.msra.mxu0 0.0
        %1301 = vmatprep.subr.mxu0 0.0
        %1302 = vmatpush2.msra.mxu0 0.0
        %1303 = vmatprep.subr.mxu0 0.0
        %1304 = vmatpush2.msra.mxu0 0.0
        %1305 = vmatprep.subr.mxu0 0.0
        %1306 = vmatpush2.msra.mxu0 0.0
        %1307 = vmatprep.subr.mxu0 0.0
        %1308 = vmatpush2.msra.mxu0 0.0
        %1309 = vmatprep.subr.mxu0 0.0
        %1310 = vmatpush2.msra.mxu0 0.0
        %1311 = vmatprep.subr.mxu0 0.0
        %1312 = vmatpush2.msra.mxu0 0.0
        %1313 = vmatprep.subr.mxu0 0.0
        %1314 = vmatpush2.msra.mxu0 0.0
        %1315 = vmatprep.subr.mxu0 0.0
        %1316 = vmatpush2.msra.mxu0 0.0
        %1317 = vmatprep.subr.mxu0 0.0
        %1318 = vmatpush2.msra.mxu0 0.0
        %1319 = vmatprep.subr.mxu0 0.0
        %1320 = vmatpush2.msra.mxu0 0.0
        %1321 = vmatprep.subr.mxu0 0.0
        %1322 = vmatpush2.msra.mxu0 0.0
        %1323 = vmatprep.mubr.f32.mxu0 0.0
        %1324 = vmatmul.mubr.f32.gmra.mxu0 %v1257
        %v1325 = vpop.f32.mrf.mxu0
        %v1326 = vadd.f32 0.0, %v1325
        %v1327 = vpop.f32.mrf.mxu0
        %1328 = vdwg.mxu0
        %v1329 = vld [vmem:[%s456 + $0x9] sm:$0x1]
        %v1330 = vld [vmem:[%s456 + $0x19] sm:$0x1]
        %v1331 = vld [vmem:[%s456 + $0x29] sm:$0x1]
        %v1332 = vld [vmem:[%s456 + $0x39] sm:$0x1]
        %v1337 = vrot.slane %v1330, 7
        %v1338 = vsel %vm556, %v1337, %v1329
        %v1339 = vrot.slane %v1331, 6
        %v1340 = vsel %vm559, %v1339, %v1338
        %v1341 = vrot.slane %v1332, 5
        %v1342 = vsel %vm562, %v1341, %v1340
        %v1343 = vsel %vm564, %v1342, 0
        %1345 = vmatprep.subr.mxu0 0.0
        %1346 = vmatpush1.msra.mxu0 0.0
        %1347 = vmatprep.subr.mxu0 0.0
        %1348 = vmatpush1.msra.mxu0 0.0
        %1349 = vmatprep.subr.mxu0 0.0
        %1350 = vmatpush1.msra.mxu0 0.0
        %1351 = vmatprep.subr.mxu0 0.0
        %1352 = vmatpush1.msra.mxu0 0.0
        %1353 = vmatprep.subr.mxu0 0.0
        %1354 = vmatpush1.msra.mxu0 0.0
        %1355 = vmatprep.subr.mxu0 0.0
        %1356 = vmatpush1.msra.mxu0 0.0
        %1357 = vmatprep.subr.mxu0 0.0
        %1358 = vmatpush1.msra.mxu0 0.0
        %1359 = vmatprep.subr.mxu0 0.0
        %1360 = vmatpush1.msra.mxu0 0.0
        %1361 = vmatprep.subr.mxu0 0.0
        %1362 = vmatpush1.msra.mxu0 0.0
        %1363 = vmatprep.subr.mxu0 0.0
        %1364 = vmatpush1.msra.mxu0 0.0
        %1365 = vmatprep.subr.mxu0 0.0
        %1366 = vmatpush1.msra.mxu0 0.0
        %1367 = vmatprep.subr.mxu0 0.0
        %1368 = vmatpush1.msra.mxu0 0.0
        %1369 = vmatprep.subr.mxu0 0.0
        %1370 = vmatpush1.msra.mxu0 0.0
        %1371 = vmatprep.subr.mxu0 0.0
        %1372 = vmatpush1.msra.mxu0 %v569
        %1373 = vmatprep.subr.mxu0 0.0
        %1374 = vmatpush1.msra.mxu0 %v541
        %1375 = vmatprep.subr.mxu0 0.0
        %1376 = vmatpush1.msra.mxu0 %v540
        %1377 = vmatprep.subr.mxu0 0.0
        %1378 = vmatpush2.msra.mxu0 0.0
        %1379 = vmatprep.subr.mxu0 0.0
        %1380 = vmatpush2.msra.mxu0 0.0
        %1381 = vmatprep.subr.mxu0 0.0
        %1382 = vmatpush2.msra.mxu0 0.0
        %1383 = vmatprep.subr.mxu0 0.0
        %1384 = vmatpush2.msra.mxu0 0.0
        %1385 = vmatprep.subr.mxu0 0.0
        %1386 = vmatpush2.msra.mxu0 0.0
        %1387 = vmatprep.subr.mxu0 0.0
        %1388 = vmatpush2.msra.mxu0 0.0
        %1389 = vmatprep.subr.mxu0 0.0
        %1390 = vmatpush2.msra.mxu0 0.0
        %1391 = vmatprep.subr.mxu0 0.0
        %1392 = vmatpush2.msra.mxu0 0.0
        %1393 = vmatprep.subr.mxu0 0.0
        %1394 = vmatpush2.msra.mxu0 0.0
        %1395 = vmatprep.subr.mxu0 0.0
        %1396 = vmatpush2.msra.mxu0 0.0
        %1397 = vmatprep.subr.mxu0 0.0
        %1398 = vmatpush2.msra.mxu0 0.0
        %1399 = vmatprep.subr.mxu0 0.0
        %1400 = vmatpush2.msra.mxu0 0.0
        %1401 = vmatprep.subr.mxu0 0.0
        %1402 = vmatpush2.msra.mxu0 0.0
        %1403 = vmatprep.subr.mxu0 0.0
        %1404 = vmatpush2.msra.mxu0 0.0
        %1405 = vmatprep.subr.mxu0 0.0
        %1406 = vmatpush2.msra.mxu0 0.0
        %1407 = vmatprep.subr.mxu0 0.0
        %1408 = vmatpush2.msra.mxu0 0.0
        %1409 = vmatprep.mubr.f32.mxu0 0.0
        %1410 = vmatmul.mubr.f32.gmra.mxu0 %v1343
        %v1411 = vpop.f32.mrf.mxu0
        %v1412 = vadd.f32 0.0, %v1411
        %v1413 = vpop.f32.mrf.mxu0
        %1414 = vdwg.mxu0
        %v1415 = vld [vmem:[%s456 + $0xa] sm:$0x1]
        %v1416 = vld [vmem:[%s456 + $0x1a] sm:$0x1]
        %v1417 = vld [vmem:[%s456 + $0x2a] sm:$0x1]
        %v1418 = vld [vmem:[%s456 + $0x3a] sm:$0x1]
        %v1423 = vrot.slane %v1416, 7
        %v1424 = vsel %vm556, %v1423, %v1415
        %v1425 = vrot.slane %v1417, 6
        %v1426 = vsel %vm559, %v1425, %v1424
        %v1427 = vrot.slane %v1418, 5
        %v1428 = vsel %vm562, %v1427, %v1426
        %v1429 = vsel %vm564, %v1428, 0
        %1431 = vmatprep.subr.mxu0 0.0
        %1432 = vmatpush1.msra.mxu0 0.0
        %1433 = vmatprep.subr.mxu0 0.0
        %1434 = vmatpush1.msra.mxu0 0.0
        %1435 = vmatprep.subr.mxu0 0.0
        %1436 = vmatpush1.msra.mxu0 0.0
        %1437 = vmatprep.subr.mxu0 0.0
        %1438 = vmatpush1.msra.mxu0 0.0
        %1439 = vmatprep.subr.mxu0 0.0
        %1440 = vmatpush1.msra.mxu0 0.0
        %1441 = vmatprep.subr.mxu0 0.0
        %1442 = vmatpush1.msra.mxu0 0.0
        %1443 = vmatprep.subr.mxu0 0.0
        %1444 = vmatpush1.msra.mxu0 0.0
        %1445 = vmatprep.subr.mxu0 0.0
        %1446 = vmatpush1.msra.mxu0 0.0
        %1447 = vmatprep.subr.mxu0 0.0
        %1448 = vmatpush1.msra.mxu0 0.0
        %1449 = vmatprep.subr.mxu0 0.0
        %1450 = vmatpush1.msra.mxu0 0.0
        %1451 = vmatprep.subr.mxu0 0.0
        %1452 = vmatpush1.msra.mxu0 0.0
        %1453 = vmatprep.subr.mxu0 0.0
        %1454 = vmatpush1.msra.mxu0 0.0
        %1455 = vmatprep.subr.mxu0 0.0
        %1456 = vmatpush1.msra.mxu0 0.0
        %1457 = vmatprep.subr.mxu0 0.0
        %1458 = vmatpush1.msra.mxu0 %v569
        %1459 = vmatprep.subr.mxu0 0.0
        %1460 = vmatpush1.msra.mxu0 %v541
        %1461 = vmatprep.subr.mxu0 0.0
        %1462 = vmatpush1.msra.mxu0 %v540
        %1463 = vmatprep.subr.mxu0 0.0
        %1464 = vmatpush2.msra.mxu0 0.0
        %1465 = vmatprep.subr.mxu0 0.0
        %1466 = vmatpush2.msra.mxu0 0.0
        %1467 = vmatprep.subr.mxu0 0.0
        %1468 = vmatpush2.msra.mxu0 0.0
        %1469 = vmatprep.subr.mxu0 0.0
        %1470 = vmatpush2.msra.mxu0 0.0
        %1471 = vmatprep.subr.mxu0 0.0
        %1472 = vmatpush2.msra.mxu0 0.0
        %1473 = vmatprep.subr.mxu0 0.0
        %1474 = vmatpush2.msra.mxu0 0.0
        %1475 = vmatprep.subr.mxu0 0.0
        %1476 = vmatpush2.msra.mxu0 0.0
        %1477 = vmatprep.subr.mxu0 0.0
        %1478 = vmatpush2.msra.mxu0 0.0
        %1479 = vmatprep.subr.mxu0 0.0
        %1480 = vmatpush2.msra.mxu0 0.0
        %1481 = vmatprep.subr.mxu0 0.0
        %1482 = vmatpush2.msra.mxu0 0.0
        %1483 = vmatprep.subr.mxu0 0.0
        %1484 = vmatpush2.msra.mxu0 0.0
        %1485 = vmatprep.subr.mxu0 0.0
        %1486 = vmatpush2.msra.mxu0 0.0
        %1487 = vmatprep.subr.mxu0 0.0
        %1488 = vmatpush2.msra.mxu0 0.0
        %1489 = vmatprep.subr.mxu0 0.0
        %1490 = vmatpush2.msra.mxu0 0.0
        %1491 = vmatprep.subr.mxu0 0.0
        %1492 = vmatpush2.msra.mxu0 0.0
        %1493 = vmatprep.subr.mxu0 0.0
        %1494 = vmatpush2.msra.mxu0 0.0
        %1495 = vmatprep.mubr.f32.mxu0 0.0
        %1496 = vmatmul.mubr.f32.gmra.mxu0 %v1429
        %v1497 = vpop.f32.mrf.mxu0
        %v1498 = vadd.f32 0.0, %v1497
        %v1499 = vpop.f32.mrf.mxu0
        %1500 = vdwg.mxu0
        %v1501 = vld [vmem:[%s456 + $0xb] sm:$0x1]
        %v1502 = vld [vmem:[%s456 + $0x1b] sm:$0x1]
        %v1503 = vld [vmem:[%s456 + $0x2b] sm:$0x1]
        %v1504 = vld [vmem:[%s456 + $0x3b] sm:$0x1]
        %v1509 = vrot.slane %v1502, 7
        %v1510 = vsel %vm556, %v1509, %v1501
        %v1511 = vrot.slane %v1503, 6
        %v1512 = vsel %vm559, %v1511, %v1510
        %v1513 = vrot.slane %v1504, 5
        %v1514 = vsel %vm562, %v1513, %v1512
        %v1515 = vsel %vm564, %v1514, 0
        %1517 = vmatprep.subr.mxu0 0.0
        %1518 = vmatpush1.msra.mxu0 0.0
        %1519 = vmatprep.subr.mxu0 0.0
        %1520 = vmatpush1.msra.mxu0 0.0
        %1521 = vmatprep.subr.mxu0 0.0
        %1522 = vmatpush1.msra.mxu0 0.0
        %1523 = vmatprep.subr.mxu0 0.0
        %1524 = vmatpush1.msra.mxu0 0.0
        %1525 = vmatprep.subr.mxu0 0.0
        %1526 = vmatpush1.msra.mxu0 0.0
        %1527 = vmatprep.subr.mxu0 0.0
        %1528 = vmatpush1.msra.mxu0 0.0
        %1529 = vmatprep.subr.mxu0 0.0
        %1530 = vmatpush1.msra.mxu0 0.0
        %1531 = vmatprep.subr.mxu0 0.0
        %1532 = vmatpush1.msra.mxu0 0.0
        %1533 = vmatprep.subr.mxu0 0.0
        %1534 = vmatpush1.msra.mxu0 0.0
        %1535 = vmatprep.subr.mxu0 0.0
        %1536 = vmatpush1.msra.mxu0 0.0
        %1537 = vmatprep.subr.mxu0 0.0
        %1538 = vmatpush1.msra.mxu0 0.0
        %1539 = vmatprep.subr.mxu0 0.0
        %1540 = vmatpush1.msra.mxu0 0.0
        %1541 = vmatprep.subr.mxu0 0.0
        %1542 = vmatpush1.msra.mxu0 0.0
        %1543 = vmatprep.subr.mxu0 0.0
        %1544 = vmatpush1.msra.mxu0 %v569
        %1545 = vmatprep.subr.mxu0 0.0
        %1546 = vmatpush1.msra.mxu0 %v541
        %1547 = vmatprep.subr.mxu0 0.0
        %1548 = vmatpush1.msra.mxu0 %v540
        %1549 = vmatprep.subr.mxu0 0.0
        %1550 = vmatpush2.msra.mxu0 0.0
        %1551 = vmatprep.subr.mxu0 0.0
        %1552 = vmatpush2.msra.mxu0 0.0
        %1553 = vmatprep.subr.mxu0 0.0
        %1554 = vmatpush2.msra.mxu0 0.0
        %1555 = vmatprep.subr.mxu0 0.0
        %1556 = vmatpush2.msra.mxu0 0.0
        %1557 = vmatprep.subr.mxu0 0.0
        %1558 = vmatpush2.msra.mxu0 0.0
        %1559 = vmatprep.subr.mxu0 0.0
        %1560 = vmatpush2.msra.mxu0 0.0
        %1561 = vmatprep.subr.mxu0 0.0
        %1562 = vmatpush2.msra.mxu0 0.0
        %1563 = vmatprep.subr.mxu0 0.0
        %1564 = vmatpush2.msra.mxu0 0.0
        %1565 = vmatprep.subr.mxu0 0.0
        %1566 = vmatpush2.msra.mxu0 0.0
        %1567 = vmatprep.subr.mxu0 0.0
        %1568 = vmatpush2.msra.mxu0 0.0
        %1569 = vmatprep.subr.mxu0 0.0
        %1570 = vmatpush2.msra.mxu0 0.0
        %1571 = vmatprep.subr.mxu0 0.0
        %1572 = vmatpush2.msra.mxu0 0.0
        %1573 = vmatprep.subr.mxu0 0.0
        %1574 = vmatpush2.msra.mxu0 0.0
        %1575 = vmatprep.subr.mxu0 0.0
        %1576 = vmatpush2.msra.mxu0 0.0
        %1577 = vmatprep.subr.mxu0 0.0
        %1578 = vmatpush2.msra.mxu0 0.0
        %1579 = vmatprep.subr.mxu0 0.0
        %1580 = vmatpush2.msra.mxu0 0.0
        %1581 = vmatprep.mubr.f32.mxu0 0.0
        %1582 = vmatmul.mubr.f32.gmra.mxu0 %v1515
        %v1583 = vpop.f32.mrf.mxu0
        %v1584 = vadd.f32 0.0, %v1583
        %v1585 = vpop.f32.mrf.mxu0
        %1586 = vdwg.mxu0
        %v1587 = vld [vmem:[%s456 + $0xc] sm:$0x1]
        %v1588 = vld [vmem:[%s456 + $0x1c] sm:$0x1]
        %v1589 = vld [vmem:[%s456 + $0x2c] sm:$0x1]
        %v1590 = vld [vmem:[%s456 + $0x3c] sm:$0x1]
        %v1595 = vrot.slane %v1588, 7
        %v1596 = vsel %vm556, %v1595, %v1587
        %v1597 = vrot.slane %v1589, 6
        %v1598 = vsel %vm559, %v1597, %v1596
        %v1599 = vrot.slane %v1590, 5
        %v1600 = vsel %vm562, %v1599, %v1598
        %v1601 = vsel %vm564, %v1600, 0
        %1603 = vmatprep.subr.mxu0 0.0
        %1604 = vmatpush1.msra.mxu0 0.0
        %1605 = vmatprep.subr.mxu0 0.0
        %1606 = vmatpush1.msra.mxu0 0.0
        %1607 = vmatprep.subr.mxu0 0.0
        %1608 = vmatpush1.msra.mxu0 0.0
        %1609 = vmatprep.subr.mxu0 0.0
        %1610 = vmatpush1.msra.mxu0 0.0
        %1611 = vmatprep.subr.mxu0 0.0
        %1612 = vmatpush1.msra.mxu0 0.0
        %1613 = vmatprep.subr.mxu0 0.0
        %1614 = vmatpush1.msra.mxu0 0.0
        %1615 = vmatprep.subr.mxu0 0.0
        %1616 = vmatpush1.msra.mxu0 0.0
        %1617 = vmatprep.subr.mxu0 0.0
        %1618 = vmatpush1.msra.mxu0 0.0
        %1619 = vmatprep.subr.mxu0 0.0
        %1620 = vmatpush1.msra.mxu0 0.0
        %1621 = vmatprep.subr.mxu0 0.0
        %1622 = vmatpush1.msra.mxu0 0.0
        %1623 = vmatprep.subr.mxu0 0.0
        %1624 = vmatpush1.msra.mxu0 0.0
        %1625 = vmatprep.subr.mxu0 0.0
        %1626 = vmatpush1.msra.mxu0 0.0
        %1627 = vmatprep.subr.mxu0 0.0
        %1628 = vmatpush1.msra.mxu0 0.0
        %1629 = vmatprep.subr.mxu0 0.0
        %1630 = vmatpush1.msra.mxu0 %v569
        %1631 = vmatprep.subr.mxu0 0.0
        %1632 = vmatpush1.msra.mxu0 %v541
        %1633 = vmatprep.subr.mxu0 0.0
        %1634 = vmatpush1.msra.mxu0 %v540
        %1635 = vmatprep.subr.mxu0 0.0
        %1636 = vmatpush2.msra.mxu0 0.0
        %1637 = vmatprep.subr.mxu0 0.0
        %1638 = vmatpush2.msra.mxu0 0.0
        %1639 = vmatprep.subr.mxu0 0.0
        %1640 = vmatpush2.msra.mxu0 0.0
        %1641 = vmatprep.subr.mxu0 0.0
        %1642 = vmatpush2.msra.mxu0 0.0
        %1643 = vmatprep.subr.mxu0 0.0
        %1644 = vmatpush2.msra.mxu0 0.0
        %1645 = vmatprep.subr.mxu0 0.0
        %1646 = vmatpush2.msra.mxu0 0.0
        %1647 = vmatprep.subr.mxu0 0.0
        %1648 = vmatpush2.msra.mxu0 0.0
        %1649 = vmatprep.subr.mxu0 0.0
        %1650 = vmatpush2.msra.mxu0 0.0
        %1651 = vmatprep.subr.mxu0 0.0
        %1652 = vmatpush2.msra.mxu0 0.0
        %1653 = vmatprep.subr.mxu0 0.0
        %1654 = vmatpush2.msra.mxu0 0.0
        %1655 = vmatprep.subr.mxu0 0.0
        %1656 = vmatpush2.msra.mxu0 0.0
        %1657 = vmatprep.subr.mxu0 0.0
        %1658 = vmatpush2.msra.mxu0 0.0
        %1659 = vmatprep.subr.mxu0 0.0
        %1660 = vmatpush2.msra.mxu0 0.0
        %1661 = vmatprep.subr.mxu0 0.0
        %1662 = vmatpush2.msra.mxu0 0.0
        %1663 = vmatprep.subr.mxu0 0.0
        %1664 = vmatpush2.msra.mxu0 0.0
        %1665 = vmatprep.subr.mxu0 0.0
        %1666 = vmatpush2.msra.mxu0 0.0
        %1667 = vmatprep.mubr.f32.mxu0 0.0
        %1668 = vmatmul.mubr.f32.gmra.mxu0 %v1601
        %v1669 = vpop.f32.mrf.mxu0
        %v1670 = vadd.f32 0.0, %v1669
        %v1671 = vpop.f32.mrf.mxu0
        %1672 = vdwg.mxu0
        %v1673 = vld [vmem:[%s456 + $0xd] sm:$0x1]
        %v1674 = vld [vmem:[%s456 + $0x1d] sm:$0x1]
        %v1675 = vld [vmem:[%s456 + $0x2d] sm:$0x1]
        %v1676 = vld [vmem:[%s456 + $0x3d] sm:$0x1]
        %v1681 = vrot.slane %v1674, 7
        %v1682 = vsel %vm556, %v1681, %v1673
        %v1683 = vrot.slane %v1675, 6
        %v1684 = vsel %vm559, %v1683, %v1682
        %v1685 = vrot.slane %v1676, 5
        %v1686 = vsel %vm562, %v1685, %v1684
        %v1687 = vsel %vm564, %v1686, 0
        %1689 = vmatprep.subr.mxu0 0.0
        %1690 = vmatpush1.msra.mxu0 0.0
        %1691 = vmatprep.subr.mxu0 0.0
        %1692 = vmatpush1.msra.mxu0 0.0
        %1693 = vmatprep.subr.mxu0 0.0
        %1694 = vmatpush1.msra.mxu0 0.0
        %1695 = vmatprep.subr.mxu0 0.0
        %1696 = vmatpush1.msra.mxu0 0.0
        %1697 = vmatprep.subr.mxu0 0.0
        %1698 = vmatpush1.msra.mxu0 0.0
        %1699 = vmatprep.subr.mxu0 0.0
        %1700 = vmatpush1.msra.mxu0 0.0
        %1701 = vmatprep.subr.mxu0 0.0
        %1702 = vmatpush1.msra.mxu0 0.0
        %1703 = vmatprep.subr.mxu0 0.0
        %1704 = vmatpush1.msra.mxu0 0.0
        %1705 = vmatprep.subr.mxu0 0.0
        %1706 = vmatpush1.msra.mxu0 0.0
        %1707 = vmatprep.subr.mxu0 0.0
        %1708 = vmatpush1.msra.mxu0 0.0
        %1709 = vmatprep.subr.mxu0 0.0
        %1710 = vmatpush1.msra.mxu0 0.0
        %1711 = vmatprep.subr.mxu0 0.0
        %1712 = vmatpush1.msra.mxu0 0.0
        %1713 = vmatprep.subr.mxu0 0.0
        %1714 = vmatpush1.msra.mxu0 0.0
        %1715 = vmatprep.subr.mxu0 0.0
        %1716 = vmatpush1.msra.mxu0 %v569
        %1717 = vmatprep.subr.mxu0 0.0
        %1718 = vmatpush1.msra.mxu0 %v541
        %1719 = vmatprep.subr.mxu0 0.0
        %1720 = vmatpush1.msra.mxu0 %v540
        %1721 = vmatprep.subr.mxu0 0.0
        %1722 = vmatpush2.msra.mxu0 0.0
        %1723 = vmatprep.subr.mxu0 0.0
        %1724 = vmatpush2.msra.mxu0 0.0
        %1725 = vmatprep.subr.mxu0 0.0
        %1726 = vmatpush2.msra.mxu0 0.0
        %1727 = vmatprep.subr.mxu0 0.0
        %1728 = vmatpush2.msra.mxu0 0.0
        %1729 = vmatprep.subr.mxu0 0.0
        %1730 = vmatpush2.msra.mxu0 0.0
        %1731 = vmatprep.subr.mxu0 0.0
        %1732 = vmatpush2.msra.mxu0 0.0
        %1733 = vmatprep.subr.mxu0 0.0
        %1734 = vmatpush2.msra.mxu0 0.0
        %1735 = vmatprep.subr.mxu0 0.0
        %1736 = vmatpush2.msra.mxu0 0.0
        %1737 = vmatprep.subr.mxu0 0.0
        %1738 = vmatpush2.msra.mxu0 0.0
        %1739 = vmatprep.subr.mxu0 0.0
        %1740 = vmatpush2.msra.mxu0 0.0
        %1741 = vmatprep.subr.mxu0 0.0
        %1742 = vmatpush2.msra.mxu0 0.0
        %1743 = vmatprep.subr.mxu0 0.0
        %1744 = vmatpush2.msra.mxu0 0.0
        %1745 = vmatprep.subr.mxu0 0.0
        %1746 = vmatpush2.msra.mxu0 0.0
        %1747 = vmatprep.subr.mxu0 0.0
        %1748 = vmatpush2.msra.mxu0 0.0
        %1749 = vmatprep.subr.mxu0 0.0
        %1750 = vmatpush2.msra.mxu0 0.0
        %1751 = vmatprep.subr.mxu0 0.0
        %1752 = vmatpush2.msra.mxu0 0.0
        %1753 = vmatprep.mubr.f32.mxu0 0.0
        %1754 = vmatmul.mubr.f32.gmra.mxu0 %v1687
        %v1755 = vpop.f32.mrf.mxu0
        %v1756 = vadd.f32 0.0, %v1755
        %v1757 = vpop.f32.mrf.mxu0
        %1758 = vdwg.mxu0
        %v1759 = vld [vmem:[%s456 + $0xe] sm:$0x1]
        %v1760 = vld [vmem:[%s456 + $0x1e] sm:$0x1]
        %v1761 = vld [vmem:[%s456 + $0x2e] sm:$0x1]
        %v1762 = vld [vmem:[%s456 + $0x3e] sm:$0x1]
        %v1767 = vrot.slane %v1760, 7
        %v1768 = vsel %vm556, %v1767, %v1759
        %v1769 = vrot.slane %v1761, 6
        %v1770 = vsel %vm559, %v1769, %v1768
        %v1771 = vrot.slane %v1762, 5
        %v1772 = vsel %vm562, %v1771, %v1770
        %v1773 = vsel %vm564, %v1772, 0
        %1775 = vmatprep.subr.mxu0 0.0
        %1776 = vmatpush1.msra.mxu0 0.0
        %1777 = vmatprep.subr.mxu0 0.0
        %1778 = vmatpush1.msra.mxu0 0.0
        %1779 = vmatprep.subr.mxu0 0.0
        %1780 = vmatpush1.msra.mxu0 0.0
        %1781 = vmatprep.subr.mxu0 0.0
        %1782 = vmatpush1.msra.mxu0 0.0
        %1783 = vmatprep.subr.mxu0 0.0
        %1784 = vmatpush1.msra.mxu0 0.0
        %1785 = vmatprep.subr.mxu0 0.0
        %1786 = vmatpush1.msra.mxu0 0.0
        %1787 = vmatprep.subr.mxu0 0.0
        %1788 = vmatpush1.msra.mxu0 0.0
        %1789 = vmatprep.subr.mxu0 0.0
        %1790 = vmatpush1.msra.mxu0 0.0
        %1791 = vmatprep.subr.mxu0 0.0
        %1792 = vmatpush1.msra.mxu0 0.0
        %1793 = vmatprep.subr.mxu0 0.0
        %1794 = vmatpush1.msra.mxu0 0.0
        %1795 = vmatprep.subr.mxu0 0.0
        %1796 = vmatpush1.msra.mxu0 0.0
        %1797 = vmatprep.subr.mxu0 0.0
        %1798 = vmatpush1.msra.mxu0 0.0
        %1799 = vmatprep.subr.mxu0 0.0
        %1800 = vmatpush1.msra.mxu0 0.0
        %1801 = vmatprep.subr.mxu0 0.0
        %1802 = vmatpush1.msra.mxu0 %v569
        %1803 = vmatprep.subr.mxu0 0.0
        %1804 = vmatpush1.msra.mxu0 %v541
        %1805 = vmatprep.subr.mxu0 0.0
        %1806 = vmatpush1.msra.mxu0 %v540
        %1807 = vmatprep.subr.mxu0 0.0
        %1808 = vmatpush2.msra.mxu0 0.0
        %1809 = vmatprep.subr.mxu0 0.0
        %1810 = vmatpush2.msra.mxu0 0.0
        %1811 = vmatprep.subr.mxu0 0.0
        %1812 = vmatpush2.msra.mxu0 0.0
        %1813 = vmatprep.subr.mxu0 0.0
        %1814 = vmatpush2.msra.mxu0 0.0
        %1815 = vmatprep.subr.mxu0 0.0
        %1816 = vmatpush2.msra.mxu0 0.0
        %1817 = vmatprep.subr.mxu0 0.0
        %1818 = vmatpush2.msra.mxu0 0.0
        %1819 = vmatprep.subr.mxu0 0.0
        %1820 = vmatpush2.msra.mxu0 0.0
        %1821 = vmatprep.subr.mxu0 0.0
        %1822 = vmatpush2.msra.mxu0 0.0
        %1823 = vmatprep.subr.mxu0 0.0
        %1824 = vmatpush2.msra.mxu0 0.0
        %1825 = vmatprep.subr.mxu0 0.0
        %1826 = vmatpush2.msra.mxu0 0.0
        %1827 = vmatprep.subr.mxu0 0.0
        %1828 = vmatpush2.msra.mxu0 0.0
        %1829 = vmatprep.subr.mxu0 0.0
        %1830 = vmatpush2.msra.mxu0 0.0
        %1831 = vmatprep.subr.mxu0 0.0
        %1832 = vmatpush2.msra.mxu0 0.0
        %1833 = vmatprep.subr.mxu0 0.0
        %1834 = vmatpush2.msra.mxu0 0.0
        %1835 = vmatprep.subr.mxu0 0.0
        %1836 = vmatpush2.msra.mxu0 0.0
        %1837 = vmatprep.subr.mxu0 0.0
        %1838 = vmatpush2.msra.mxu0 0.0
        %1839 = vmatprep.mubr.f32.mxu0 0.0
        %1840 = vmatmul.mubr.f32.gmra.mxu0 %v1773
        %v1841 = vpop.f32.mrf.mxu0
        %v1842 = vadd.f32 0.0, %v1841
        %v1843 = vpop.f32.mrf.mxu0
        %1844 = vdwg.mxu0
        %v1845 = vld [vmem:[%s456 + $0xf] sm:$0x1]
        %v1846 = vld [vmem:[%s456 + $0x1f] sm:$0x1]
        %v1847 = vld [vmem:[%s456 + $0x2f] sm:$0x1]
        %v1848 = vld [vmem:[%s456 + $0x3f] sm:$0x1]
        %v1853 = vrot.slane %v1846, 7
        %v1854 = vsel %vm556, %v1853, %v1845
        %v1855 = vrot.slane %v1847, 6
        %v1856 = vsel %vm559, %v1855, %v1854
        %v1857 = vrot.slane %v1848, 5
        %v1858 = vsel %vm562, %v1857, %v1856
        %v1859 = vsel %vm564, %v1858, 0
        %1861 = vmatprep.subr.mxu0 0.0
        %1862 = vmatpush1.msra.mxu0 0.0
        %1863 = vmatprep.subr.mxu0 0.0
        %1864 = vmatpush1.msra.mxu0 0.0
        %1865 = vmatprep.subr.mxu0 0.0
        %1866 = vmatpush1.msra.mxu0 0.0
        %1867 = vmatprep.subr.mxu0 0.0
        %1868 = vmatpush1.msra.mxu0 0.0
        %1869 = vmatprep.subr.mxu0 0.0
        %1870 = vmatpush1.msra.mxu0 0.0
        %1871 = vmatprep.subr.mxu0 0.0
        %1872 = vmatpush1.msra.mxu0 0.0
        %1873 = vmatprep.subr.mxu0 0.0
        %1874 = vmatpush1.msra.mxu0 0.0
        %1875 = vmatprep.subr.mxu0 0.0
        %1876 = vmatpush1.msra.mxu0 0.0
        %1877 = vmatprep.subr.mxu0 0.0
        %1878 = vmatpush1.msra.mxu0 0.0
        %1879 = vmatprep.subr.mxu0 0.0
        %1880 = vmatpush1.msra.mxu0 0.0
        %1881 = vmatprep.subr.mxu0 0.0
        %1882 = vmatpush1.msra.mxu0 0.0
        %1883 = vmatprep.subr.mxu0 0.0
        %1884 = vmatpush1.msra.mxu0 0.0
        %1885 = vmatprep.subr.mxu0 0.0
        %1886 = vmatpush1.msra.mxu0 0.0
        %1887 = vmatprep.subr.mxu0 0.0
        %1888 = vmatpush1.msra.mxu0 %v569
        %1889 = vmatprep.subr.mxu0 0.0
        %1890 = vmatpush1.msra.mxu0 %v541
        %1891 = vmatprep.subr.mxu0 0.0
        %1892 = vmatpush1.msra.mxu0 %v540
        %1893 = vmatprep.subr.mxu0 0.0
        %1894 = vmatpush2.msra.mxu0 0.0
        %1895 = vmatprep.subr.mxu0 0.0
        %1896 = vmatpush2.msra.mxu0 0.0
        %1897 = vmatprep.subr.mxu0 0.0
        %1898 = vmatpush2.msra.mxu0 0.0
        %1899 = vmatprep.subr.mxu0 0.0
        %1900 = vmatpush2.msra.mxu0 0.0
        %1901 = vmatprep.subr.mxu0 0.0
        %1902 = vmatpush2.msra.mxu0 0.0
        %1903 = vmatprep.subr.mxu0 0.0
        %1904 = vmatpush2.msra.mxu0 0.0
        %1905 = vmatprep.subr.mxu0 0.0
        %1906 = vmatpush2.msra.mxu0 0.0
        %1907 = vmatprep.subr.mxu0 0.0
        %1908 = vmatpush2.msra.mxu0 0.0
        %1909 = vmatprep.subr.mxu0 0.0
        %1910 = vmatpush2.msra.mxu0 0.0
        %1911 = vmatprep.subr.mxu0 0.0
        %1912 = vmatpush2.msra.mxu0 0.0
        %1913 = vmatprep.subr.mxu0 0.0
        %1914 = vmatpush2.msra.mxu0 0.0
        %1915 = vmatprep.subr.mxu0 0.0
        %1916 = vmatpush2.msra.mxu0 0.0
        %1917 = vmatprep.subr.mxu0 0.0
        %1918 = vmatpush2.msra.mxu0 0.0
        %1919 = vmatprep.subr.mxu0 0.0
        %1920 = vmatpush2.msra.mxu0 0.0
        %1921 = vmatprep.subr.mxu0 0.0
        %1922 = vmatpush2.msra.mxu0 0.0
        %1923 = vmatprep.subr.mxu0 0.0
        %1924 = vmatpush2.msra.mxu0 0.0
        %1925 = vmatprep.mubr.f32.mxu0 0.0
        %1926 = vmatmul.mubr.f32.gmra.mxu0 %v1859
        %v1927 = vpop.f32.mrf.mxu0
        %v1928 = vadd.f32 0.0, %v1927
        %v1929 = vpop.f32.mrf.mxu0
        %1930 = vdwg.mxu0
        %v1931 = vld [vmem:[%s463] sm:$0x1]
        %v1932 = vld [vmem:[%s463 + $0x8] sm:$0x1]
        %v1933 = vld [vmem:[%s463 + $0x10] sm:$0x1]
        %v1934 = vld [vmem:[%s463 + $0x18] sm:$0x1]
        %v1939 = vrot.slane %v1932, 7
        %v1940 = vsel %vm556, %v1939, %v1931
        %v1941 = vrot.slane %v1933, 6
        %v1942 = vsel %vm559, %v1941, %v1940
        %v1943 = vrot.slane %v1934, 5
        %v1944 = vsel %vm562, %v1943, %v1942
        %v1945 = vsel %vm564, %v1944, 0
        %1947 = vmatprep.subr.mxu0 0.0
        %1948 = vmatpush1.msra.mxu0 0.0
        %1949 = vmatprep.subr.mxu0 0.0
        %1950 = vmatpush1.msra.mxu0 0.0
        %1951 = vmatprep.subr.mxu0 0.0
        %1952 = vmatpush1.msra.mxu0 0.0
        %1953 = vmatprep.subr.mxu0 0.0
        %1954 = vmatpush1.msra.mxu0 0.0
        %1955 = vmatprep.subr.mxu0 0.0
        %1956 = vmatpush1.msra.mxu0 0.0
        %1957 = vmatprep.subr.mxu0 0.0
        %1958 = vmatpush1.msra.mxu0 0.0
        %1959 = vmatprep.subr.mxu0 0.0
        %1960 = vmatpush1.msra.mxu0 0.0
        %1961 = vmatprep.subr.mxu0 0.0
        %1962 = vmatpush1.msra.mxu0 0.0
        %1963 = vmatprep.subr.mxu0 0.0
        %1964 = vmatpush1.msra.mxu0 0.0
        %1965 = vmatprep.subr.mxu0 0.0
        %1966 = vmatpush1.msra.mxu0 0.0
        %1967 = vmatprep.subr.mxu0 0.0
        %1968 = vmatpush1.msra.mxu0 0.0
        %1969 = vmatprep.subr.mxu0 0.0
        %1970 = vmatpush1.msra.mxu0 0.0
        %1971 = vmatprep.subr.mxu0 0.0
        %1972 = vmatpush1.msra.mxu0 0.0
        %1973 = vmatprep.subr.mxu0 0.0
        %1974 = vmatpush1.msra.mxu0 %v569
        %1975 = vmatprep.subr.mxu0 0.0
        %1976 = vmatpush1.msra.mxu0 %v541
        %1977 = vmatprep.subr.mxu0 0.0
        %1978 = vmatpush1.msra.mxu0 %v540
        %1979 = vmatprep.subr.mxu0 0.0
        %1980 = vmatpush2.msra.mxu0 0.0
        %1981 = vmatprep.subr.mxu0 0.0
        %1982 = vmatpush2.msra.mxu0 0.0
        %1983 = vmatprep.subr.mxu0 0.0
        %1984 = vmatpush2.msra.mxu0 0.0
        %1985 = vmatprep.subr.mxu0 0.0
        %1986 = vmatpush2.msra.mxu0 0.0
        %1987 = vmatprep.subr.mxu0 0.0
        %1988 = vmatpush2.msra.mxu0 0.0
        %1989 = vmatprep.subr.mxu0 0.0
        %1990 = vmatpush2.msra.mxu0 0.0
        %1991 = vmatprep.subr.mxu0 0.0
        %1992 = vmatpush2.msra.mxu0 0.0
        %1993 = vmatprep.subr.mxu0 0.0
        %1994 = vmatpush2.msra.mxu0 0.0
        %1995 = vmatprep.subr.mxu0 0.0
        %1996 = vmatpush2.msra.mxu0 0.0
        %1997 = vmatprep.subr.mxu0 0.0
        %1998 = vmatpush2.msra.mxu0 0.0
        %1999 = vmatprep.subr.mxu0 0.0
        %2000 = vmatpush2.msra.mxu0 0.0
        %2001 = vmatprep.subr.mxu0 0.0
        %2002 = vmatpush2.msra.mxu0 0.0
        %2003 = vmatprep.subr.mxu0 0.0
        %2004 = vmatpush2.msra.mxu0 0.0
        %2005 = vmatprep.subr.mxu0 0.0
        %2006 = vmatpush2.msra.mxu0 0.0
        %2007 = vmatprep.subr.mxu0 0.0
        %2008 = vmatpush2.msra.mxu0 0.0
        %2009 = vmatprep.subr.mxu0 0.0
        %2010 = vmatpush2.msra.mxu0 0.0
        %2011 = vmatprep.mubr.f32.mxu0 0.0
        %2012 = vmatmul.mubr.f32.gmra.mxu0 %v1945
        %v2013 = vpop.f32.mrf.mxu0
        %v2014 = vadd.f32 0.0, %v2013
        %v2015 = vpop.f32.mrf.mxu0
        %2016 = vdwg.mxu0
        %v2017 = vld [vmem:[%s463 + $0x1] sm:$0x1]
        %v2018 = vld [vmem:[%s463 + $0x9] sm:$0x1]
        %v2019 = vld [vmem:[%s463 + $0x11] sm:$0x1]
        %v2020 = vld [vmem:[%s463 + $0x19] sm:$0x1]
        %v2025 = vrot.slane %v2018, 7
        %v2026 = vsel %vm556, %v2025, %v2017
        %v2027 = vrot.slane %v2019, 6
        %v2028 = vsel %vm559, %v2027, %v2026
        %v2029 = vrot.slane %v2020, 5
        %v2030 = vsel %vm562, %v2029, %v2028
        %v2031 = vsel %vm564, %v2030, 0
        %2033 = vmatprep.subr.mxu0 0.0
        %2034 = vmatpush1.msra.mxu0 0.0
        %2035 = vmatprep.subr.mxu0 0.0
        %2036 = vmatpush1.msra.mxu0 0.0
        %2037 = vmatprep.subr.mxu0 0.0
        %2038 = vmatpush1.msra.mxu0 0.0
        %2039 = vmatprep.subr.mxu0 0.0
        %2040 = vmatpush1.msra.mxu0 0.0
        %2041 = vmatprep.subr.mxu0 0.0
        %2042 = vmatpush1.msra.mxu0 0.0
        %2043 = vmatprep.subr.mxu0 0.0
        %2044 = vmatpush1.msra.mxu0 0.0
        %2045 = vmatprep.subr.mxu0 0.0
        %2046 = vmatpush1.msra.mxu0 0.0
        %2047 = vmatprep.subr.mxu0 0.0
        %2048 = vmatpush1.msra.mxu0 0.0
        %2049 = vmatprep.subr.mxu0 0.0
        %2050 = vmatpush1.msra.mxu0 0.0
        %2051 = vmatprep.subr.mxu0 0.0
        %2052 = vmatpush1.msra.mxu0 0.0
        %2053 = vmatprep.subr.mxu0 0.0
        %2054 = vmatpush1.msra.mxu0 0.0
        %2055 = vmatprep.subr.mxu0 0.0
        %2056 = vmatpush1.msra.mxu0 0.0
        %2057 = vmatprep.subr.mxu0 0.0
        %2058 = vmatpush1.msra.mxu0 0.0
        %2059 = vmatprep.subr.mxu0 0.0
        %2060 = vmatpush1.msra.mxu0 %v569
        %2061 = vmatprep.subr.mxu0 0.0
        %2062 = vmatpush1.msra.mxu0 %v541
        %2063 = vmatprep.subr.mxu0 0.0
        %2064 = vmatpush1.msra.mxu0 %v540
        %2065 = vmatprep.subr.mxu0 0.0
        %2066 = vmatpush2.msra.mxu0 0.0
        %2067 = vmatprep.subr.mxu0 0.0
        %2068 = vmatpush2.msra.mxu0 0.0
        %2069 = vmatprep.subr.mxu0 0.0
        %2070 = vmatpush2.msra.mxu0 0.0
        %2071 = vmatprep.subr.mxu0 0.0
        %2072 = vmatpush2.msra.mxu0 0.0
        %2073 = vmatprep.subr.mxu0 0.0
        %2074 = vmatpush2.msra.mxu0 0.0
        %2075 = vmatprep.subr.mxu0 0.0
        %2076 = vmatpush2.msra.mxu0 0.0
        %2077 = vmatprep.subr.mxu0 0.0
        %2078 = vmatpush2.msra.mxu0 0.0
        %2079 = vmatprep.subr.mxu0 0.0
        %2080 = vmatpush2.msra.mxu0 0.0
        %2081 = vmatprep.subr.mxu0 0.0
        %2082 = vmatpush2.msra.mxu0 0.0
        %2083 = vmatprep.subr.mxu0 0.0
        %2084 = vmatpush2.msra.mxu0 0.0
        %2085 = vmatprep.subr.mxu0 0.0
        %2086 = vmatpush2.msra.mxu0 0.0
        %2087 = vmatprep.subr.mxu0 0.0
        %2088 = vmatpush2.msra.mxu0 0.0
        %2089 = vmatprep.subr.mxu0 0.0
        %2090 = vmatpush2.msra.mxu0 0.0
        %2091 = vmatprep.subr.mxu0 0.0
        %2092 = vmatpush2.msra.mxu0 0.0
        %2093 = vmatprep.subr.mxu0 0.0
        %2094 = vmatpush2.msra.mxu0 0.0
        %2095 = vmatprep.subr.mxu0 0.0
        %2096 = vmatpush2.msra.mxu0 0.0
        %2097 = vmatprep.mubr.f32.mxu0 0.0
        %2098 = vmatmul.mubr.f32.gmra.mxu0 %v2031
        %v2099 = vpop.f32.mrf.mxu0
        %v2100 = vadd.f32 0.0, %v2099
        %v2101 = vpop.f32.mrf.mxu0
        %2102 = vdwg.mxu0
        %v2104 = vrot.slane %v638, 4
        %2105 = vrot.lane.b32.xlu0 %v2104, 127
        %v2106 = vpop.permute.xlu0 %2105
        %2108 = vrot.lane.b32.xlu0 %v638, 126
        %v2109 = vpop.permute.xlu0 %2108
        %vm2111 = vcmask 1043456
        %v2112 = vsel %vm2111, %v638, %v2106
        %v2114 = vrot.slane %v724, 4
        %2115 = vrot.lane.b32.xlu0 %v2114, 127
        %v2116 = vpop.permute.xlu0 %2115
        %2118 = vrot.lane.b32.xlu0 %v724, 126
        %v2119 = vpop.permute.xlu0 %2118
        %v2121 = vsel %vm2111, %v724, %v2116
        %v2123 = vrot.slane %v810, 4
        %2124 = vrot.lane.b32.xlu0 %v2123, 127
        %v2125 = vpop.permute.xlu0 %2124
        %2127 = vrot.lane.b32.xlu0 %v810, 126
        %v2128 = vpop.permute.xlu0 %2127
        %v2130 = vsel %vm2111, %v810, %v2125
        %v2132 = vrot.slane %v896, 4
        %2133 = vrot.lane.b32.xlu0 %v2132, 127
        %v2134 = vpop.permute.xlu0 %2133
        %2136 = vrot.lane.b32.xlu0 %v896, 126
        %v2137 = vpop.permute.xlu0 %2136
        %v2139 = vsel %vm2111, %v896, %v2134
        %v2141 = vrot.slane %v982, 4
        %2142 = vrot.lane.b32.xlu0 %v2141, 127
        %v2143 = vpop.permute.xlu0 %2142
        %2145 = vrot.lane.b32.xlu0 %v982, 126
        %v2146 = vpop.permute.xlu0 %2145
        %v2148 = vsel %vm2111, %v982, %v2143
        %v2150 = vrot.slane %v1068, 4
        %2151 = vrot.lane.b32.xlu0 %v2150, 127
        %v2152 = vpop.permute.xlu0 %2151
        %2154 = vrot.lane.b32.xlu0 %v1068, 126
        %v2155 = vpop.permute.xlu0 %2154
        %v2157 = vsel %vm2111, %v1068, %v2152
        %v2159 = vrot.slane %v1154, 4
        %2160 = vrot.lane.b32.xlu0 %v2159, 127
        %v2161 = vpop.permute.xlu0 %2160
        %2163 = vrot.lane.b32.xlu0 %v1154, 126
        %v2164 = vpop.permute.xlu0 %2163
        %v2166 = vsel %vm2111, %v1154, %v2161
        %v2168 = vrot.slane %v1240, 4
        %2169 = vrot.lane.b32.xlu0 %v2168, 127
        %v2170 = vpop.permute.xlu0 %2169
        %2172 = vrot.lane.b32.xlu0 %v1240, 126
        %v2173 = vpop.permute.xlu0 %2172
        %v2175 = vsel %vm2111, %v1240, %v2170
        %v2177 = vrot.slane %v1326, 4
        %2178 = vrot.lane.b32.xlu0 %v2177, 127
        %v2179 = vpop.permute.xlu0 %2178
        %2181 = vrot.lane.b32.xlu0 %v1326, 126
        %v2182 = vpop.permute.xlu0 %2181
        %v2184 = vsel %vm2111, %v1326, %v2179
        %v2186 = vrot.slane %v1412, 4
        %2187 = vrot.lane.b32.xlu0 %v2186, 127
        %v2188 = vpop.permute.xlu0 %2187
        %2190 = vrot.lane.b32.xlu0 %v1412, 126
        %v2191 = vpop.permute.xlu0 %2190
        %v2193 = vsel %vm2111, %v1412, %v2188
        %v2195 = vrot.slane %v1498, 4
        %2196 = vrot.lane.b32.xlu0 %v2195, 127
        %v2197 = vpop.permute.xlu0 %2196
        %2199 = vrot.lane.b32.xlu0 %v1498, 126
        %v2200 = vpop.permute.xlu0 %2199
        %v2202 = vsel %vm2111, %v1498, %v2197
        %v2204 = vrot.slane %v1584, 4
        %2205 = vrot.lane.b32.xlu0 %v2204, 127
        %v2206 = vpop.permute.xlu0 %2205
        %2208 = vrot.lane.b32.xlu0 %v1584, 126
        %v2209 = vpop.permute.xlu0 %2208
        %v2211 = vsel %vm2111, %v1584, %v2206
        %v2213 = vrot.slane %v1670, 4
        %2214 = vrot.lane.b32.xlu0 %v2213, 127
        %v2215 = vpop.permute.xlu0 %2214
        %2217 = vrot.lane.b32.xlu0 %v1670, 126
        %v2218 = vpop.permute.xlu0 %2217
        %v2220 = vsel %vm2111, %v1670, %v2215
        %v2222 = vrot.slane %v1756, 4
        %2223 = vrot.lane.b32.xlu0 %v2222, 127
        %v2224 = vpop.permute.xlu0 %2223
        %2226 = vrot.lane.b32.xlu0 %v1756, 126
        %v2227 = vpop.permute.xlu0 %2226
        %v2229 = vsel %vm2111, %v1756, %v2224
        %v2231 = vrot.slane %v1842, 4
        %2232 = vrot.lane.b32.xlu0 %v2231, 127
        %v2233 = vpop.permute.xlu0 %2232
        %2235 = vrot.lane.b32.xlu0 %v1842, 126
        %v2236 = vpop.permute.xlu0 %2235
        %v2238 = vsel %vm2111, %v1842, %v2233
        %v2240 = vrot.slane %v1928, 4
        %2241 = vrot.lane.b32.xlu0 %v2240, 127
        %v2242 = vpop.permute.xlu0 %2241
        %2244 = vrot.lane.b32.xlu0 %v1928, 126
        %v2245 = vpop.permute.xlu0 %2244
        %v2247 = vsel %vm2111, %v1928, %v2242
        %v2249 = vrot.slane %v2014, 4
        %2250 = vrot.lane.b32.xlu0 %v2249, 127
        %v2251 = vpop.permute.xlu0 %2250
        %2253 = vrot.lane.b32.xlu0 %v2014, 126
        %v2254 = vpop.permute.xlu0 %2253
        %v2256 = vsel %vm2111, %v2014, %v2251
        %v2258 = vrot.slane %v2100, 4
        %2259 = vrot.lane.b32.xlu0 %v2258, 127
        %v2260 = vpop.permute.xlu0 %2259
        %2262 = vrot.lane.b32.xlu0 %v2100, 126
        %v2263 = vpop.permute.xlu0 %2262
        %v2264 = vsel %vm2111, %v2100, %v2260
        %v2266 = vrot.slane %v2121, 4
        %v2267 = vrot.slane %v2119, 4
        %v2268 = vsel %vm2111, %v2266, %v2267
        %v2271 = vsel %vm2111, %v2109, %v2266
        %v2273 = vrot.slane %v2130, 4
        %v2274 = vrot.slane %v2128, 4
        %v2275 = vsel %vm2111, %v2273, %v2274
        %v2278 = vsel %vm2111, %v2119, %v2273
        %v2280 = vrot.slane %v2139, 4
        %v2281 = vrot.slane %v2137, 4
        %v2282 = vsel %vm2111, %v2280, %v2281
        %v2285 = vsel %vm2111, %v2128, %v2280
        %v2287 = vrot.slane %v2148, 4
        %v2288 = vrot.slane %v2146, 4
        %v2289 = vsel %vm2111, %v2287, %v2288
        %v2292 = vsel %vm2111, %v2137, %v2287
        %v2294 = vrot.slane %v2157, 4
        %v2295 = vrot.slane %v2155, 4
        %v2296 = vsel %vm2111, %v2294, %v2295
        %v2299 = vsel %vm2111, %v2146, %v2294
        %v2301 = vrot.slane %v2166, 4
        %v2302 = vrot.slane %v2164, 4
        %v2303 = vsel %vm2111, %v2301, %v2302
        %v2306 = vsel %vm2111, %v2155, %v2301
        %v2308 = vrot.slane %v2175, 4
        %v2309 = vrot.slane %v2173, 4
        %v2310 = vsel %vm2111, %v2308, %v2309
        %v2313 = vsel %vm2111, %v2164, %v2308
        %v2315 = vrot.slane %v2184, 4
        %v2316 = vrot.slane %v2182, 4
        %v2317 = vsel %vm2111, %v2315, %v2316
        %v2320 = vsel %vm2111, %v2173, %v2315
        %v2322 = vrot.slane %v2193, 4
        %v2323 = vrot.slane %v2191, 4
        %v2324 = vsel %vm2111, %v2322, %v2323
        %v2327 = vsel %vm2111, %v2182, %v2322
        %v2329 = vrot.slane %v2202, 4
        %v2330 = vrot.slane %v2200, 4
        %v2331 = vsel %vm2111, %v2329, %v2330
        %v2334 = vsel %vm2111, %v2191, %v2329
        %v2336 = vrot.slane %v2211, 4
        %v2337 = vrot.slane %v2209, 4
        %v2338 = vsel %vm2111, %v2336, %v2337
        %v2341 = vsel %vm2111, %v2200, %v2336
        %v2343 = vrot.slane %v2220, 4
        %v2344 = vrot.slane %v2218, 4
        %v2345 = vsel %vm2111, %v2343, %v2344
        %v2348 = vsel %vm2111, %v2209, %v2343
        %v2350 = vrot.slane %v2229, 4
        %v2351 = vrot.slane %v2227, 4
        %v2352 = vsel %vm2111, %v2350, %v2351
        %v2355 = vsel %vm2111, %v2218, %v2350
        %v2357 = vrot.slane %v2238, 4
        %v2358 = vrot.slane %v2236, 4
        %v2359 = vsel %vm2111, %v2357, %v2358
        %v2362 = vsel %vm2111, %v2227, %v2357
        %v2364 = vrot.slane %v2247, 4
        %v2365 = vrot.slane %v2245, 4
        %v2366 = vsel %vm2111, %v2364, %v2365
        %v2369 = vsel %vm2111, %v2236, %v2364
        %v2371 = vrot.slane %v2256, 4
        %v2372 = vrot.slane %v2254, 4
        %v2373 = vsel %vm2111, %v2371, %v2372
        %v2376 = vsel %vm2111, %v2245, %v2371
        %v2378 = vrot.slane %v2264, 4
        %v2379 = vrot.slane %v2263, 4
        %v2380 = vsel %vm2111, %v2378, %v2379
        %v2383 = vsel %vm2111, %v2254, %v2378
        %2385 = vset.pattern.permute.xlu0 0
        %2386 = vperm.xlu0 %2385, %v543
        %v2387 = vpop.permute.xlu0 %2386
        %vm2389 = vcmask 195584
        %v2391 = vsel %vm2389, %v544, 0
        %2393 = vmatprep.subr.mxu0 0.0
        %2394 = vmatpush1.msra.mxu0 0.0
        %2395 = vmatprep.subr.mxu0 0.0
        %2396 = vmatpush1.msra.mxu0 0.0
        %2397 = vmatprep.subr.mxu0 0.0
        %2398 = vmatpush1.msra.mxu0 0.0
        %2399 = vmatprep.subr.mxu0 0.0
        %2400 = vmatpush1.msra.mxu0 0.0
        %2401 = vmatprep.subr.mxu0 0.0
        %2402 = vmatpush1.msra.mxu0 0.0
        %2403 = vmatprep.subr.mxu0 0.0
        %2404 = vmatpush1.msra.mxu0 0.0
        %2405 = vmatprep.subr.mxu0 0.0
        %2406 = vmatpush1.msra.mxu0 0.0
        %2407 = vmatprep.subr.mxu0 0.0
        %2408 = vmatpush1.msra.mxu0 0.0
        %2409 = vmatprep.subr.mxu0 0.0
        %2410 = vmatpush1.msra.mxu0 0.0
        %2411 = vmatprep.subr.mxu0 0.0
        %2412 = vmatpush1.msra.mxu0 0.0
        %2413 = vmatprep.subr.mxu0 0.0
        %2414 = vmatpush1.msra.mxu0 0.0
        %2415 = vmatprep.subr.mxu0 0.0
        %2416 = vmatpush1.msra.mxu0 0.0
        %2417 = vmatprep.subr.mxu0 0.0
        %2418 = vmatpush1.msra.mxu0 0.0
        %2419 = vmatprep.subr.mxu0 0.0
        %2420 = vmatpush1.msra.mxu0 %v2268
        %2421 = vmatprep.subr.mxu0 0.0
        %2422 = vmatpush1.msra.mxu0 %v2271
        %2423 = vmatprep.subr.mxu0 0.0
        %2424 = vmatpush1.msra.mxu0 %v2112
        %2425 = vmatprep.subr.mxu0 0.0
        %2426 = vmatpush2.msra.mxu0 0.0
        %2427 = vmatprep.subr.mxu0 0.0
        %2428 = vmatpush2.msra.mxu0 0.0
        %2429 = vmatprep.subr.mxu0 0.0
        %2430 = vmatpush2.msra.mxu0 0.0
        %2431 = vmatprep.subr.mxu0 0.0
        %2432 = vmatpush2.msra.mxu0 0.0
        %2433 = vmatprep.subr.mxu0 0.0
        %2434 = vmatpush2.msra.mxu0 0.0
        %2435 = vmatprep.subr.mxu0 0.0
        %2436 = vmatpush2.msra.mxu0 0.0
        %2437 = vmatprep.subr.mxu0 0.0
        %2438 = vmatpush2.msra.mxu0 0.0
        %2439 = vmatprep.subr.mxu0 0.0
        %2440 = vmatpush2.msra.mxu0 0.0
        %2441 = vmatprep.subr.mxu0 0.0
        %2442 = vmatpush2.msra.mxu0 0.0
        %2443 = vmatprep.subr.mxu0 0.0
        %2444 = vmatpush2.msra.mxu0 0.0
        %2445 = vmatprep.subr.mxu0 0.0
        %2446 = vmatpush2.msra.mxu0 0.0
        %2447 = vmatprep.subr.mxu0 0.0
        %2448 = vmatpush2.msra.mxu0 0.0
        %2449 = vmatprep.subr.mxu0 0.0
        %2450 = vmatpush2.msra.mxu0 0.0
        %2451 = vmatprep.subr.mxu0 0.0
        %2452 = vmatpush2.msra.mxu0 0.0
        %2453 = vmatprep.subr.mxu0 0.0
        %2454 = vmatpush2.msra.mxu0 0.0
        %2455 = vmatprep.subr.mxu0 0.0
        %2456 = vmatpush2.msra.mxu0 0.0
        %2457 = vmatprep.mubr.f32.mxu0 0.0
        %2458 = vmatmul.mubr.f32.gmra.mxu0 %v2391
        %v2459 = vpop.f32.mrf.mxu0
        %v2460 = vadd.f32 %v2387, %v2459
        %v2461 = vpop.f32.mrf.mxu0
        %2462 = vdwg.mxu0
        %v2464 = vsel %vm2389, %v546, 0
        %2466 = vmatprep.subr.mxu0 0.0
        %2467 = vmatpush1.msra.mxu0 0.0
        %2468 = vmatprep.subr.mxu0 0.0
        %2469 = vmatpush1.msra.mxu0 0.0
        %2470 = vmatprep.subr.mxu0 0.0
        %2471 = vmatpush1.msra.mxu0 0.0
        %2472 = vmatprep.subr.mxu0 0.0
        %2473 = vmatpush1.msra.mxu0 0.0
        %2474 = vmatprep.subr.mxu0 0.0
        %2475 = vmatpush1.msra.mxu0 0.0
        %2476 = vmatprep.subr.mxu0 0.0
        %2477 = vmatpush1.msra.mxu0 0.0
        %2478 = vmatprep.subr.mxu0 0.0
        %2479 = vmatpush1.msra.mxu0 0.0
        %2480 = vmatprep.subr.mxu0 0.0
        %2481 = vmatpush1.msra.mxu0 0.0
        %2482 = vmatprep.subr.mxu0 0.0
        %2483 = vmatpush1.msra.mxu0 0.0
        %2484 = vmatprep.subr.mxu0 0.0
        %2485 = vmatpush1.msra.mxu0 0.0
        %2486 = vmatprep.subr.mxu0 0.0
        %2487 = vmatpush1.msra.mxu0 0.0
        %2488 = vmatprep.subr.mxu0 0.0
        %2489 = vmatpush1.msra.mxu0 0.0
        %2490 = vmatprep.subr.mxu0 0.0
        %2491 = vmatpush1.msra.mxu0 0.0
        %2492 = vmatprep.subr.mxu0 0.0
        %2493 = vmatpush1.msra.mxu0 %v2275
        %2494 = vmatprep.subr.mxu0 0.0
        %2495 = vmatpush1.msra.mxu0 %v2278
        %2496 = vmatprep.subr.mxu0 0.0
        %2497 = vmatpush1.msra.mxu0 %v2121
        %2498 = vmatprep.subr.mxu0 0.0
        %2499 = vmatpush2.msra.mxu0 0.0
        %2500 = vmatprep.subr.mxu0 0.0
        %2501 = vmatpush2.msra.mxu0 0.0
        %2502 = vmatprep.subr.mxu0 0.0
        %2503 = vmatpush2.msra.mxu0 0.0
        %2504 = vmatprep.subr.mxu0 0.0
        %2505 = vmatpush2.msra.mxu0 0.0
        %2506 = vmatprep.subr.mxu0 0.0
        %2507 = vmatpush2.msra.mxu0 0.0
        %2508 = vmatprep.subr.mxu0 0.0
        %2509 = vmatpush2.msra.mxu0 0.0
        %2510 = vmatprep.subr.mxu0 0.0
        %2511 = vmatpush2.msra.mxu0 0.0
        %2512 = vmatprep.subr.mxu0 0.0
        %2513 = vmatpush2.msra.mxu0 0.0
        %2514 = vmatprep.subr.mxu0 0.0
        %2515 = vmatpush2.msra.mxu0 0.0
        %2516 = vmatprep.subr.mxu0 0.0
        %2517 = vmatpush2.msra.mxu0 0.0
        %2518 = vmatprep.subr.mxu0 0.0
        %2519 = vmatpush2.msra.mxu0 0.0
        %2520 = vmatprep.subr.mxu0 0.0
        %2521 = vmatpush2.msra.mxu0 0.0
        %2522 = vmatprep.subr.mxu0 0.0
        %2523 = vmatpush2.msra.mxu0 0.0
        %2524 = vmatprep.subr.mxu0 0.0
        %2525 = vmatpush2.msra.mxu0 0.0
        %2526 = vmatprep.subr.mxu0 0.0
        %2527 = vmatpush2.msra.mxu0 0.0
        %2528 = vmatprep.subr.mxu0 0.0
        %2529 = vmatpush2.msra.mxu0 0.0
        %2530 = vmatprep.mubr.f32.mxu0 0.0
        %2531 = vmatmul.mubr.f32.gmra.mxu0 %v2464
        %v2532 = vpop.f32.mrf.mxu0
        %v2533 = vadd.f32 %v2387, %v2532
        %v2534 = vpop.f32.mrf.mxu0
        %2535 = vdwg.mxu0
        %2537 = vrot.lane.b32.xlu0 %v2533, 32
        %v2538 = vpop.permute.xlu0 %2537
        %vm2540 = vcmask 261120
        %v2541 = vsel %vm2540, %v2460, %v2538
        %v2544 = vunpack.c.l.s4 1966171168
        %v2545 = vunpack.c.0.s8 %v2544
        %v2546 = vlaneseq
        %v2547 = vshrl.u32 %v2546, 7
        %v2548 = vsub.s32 %v2545, %v2547
        %v2549 = vrot.slane %v2541, %v2548
        %v2550 = vcombine.high %v2549, %v2549
        %v2552 = vunpack.c.l.s4 1966171168
        %v2553 = vunpack.c.0.s8 %v2552
        %v2554 = vlaneseq
        %v2555 = vshrl.u32 %v2554, 7
        %v2556 = vsub.s32 %v2553, %v2555
        %v2557 = vrot.slane %v2549, %v2556
        %v2559 = vunpack.c.l.s4 1966171168
        %v2560 = vunpack.c.0.s8 %v2559
        %v2561 = vlaneseq
        %v2562 = vshrl.u32 %v2561, 7
        %v2563 = vsub.s32 %v2560, %v2562
        %v2564 = vrot.slane %v2550, %v2563
        %v2565 = vcombine.high %v2557, %v2557
        %v2566 = vcombine.high %v2564, %v2564
        %vm2571 = vcmask 516096
        %2572 = vst.msk [vmem:[%s537] sm:$0x1] %vm2571, %v2557
        %2573 = vst.msk [vmem:[%s537 + $0x10] sm:$0x1] %vm2571, %v2564
        %2574 = vst.msk [vmem:[%s537 + $0x20] sm:$0x1] %vm2571, %v2565
        %2575 = vst.msk [vmem:[%s537 + $0x30] sm:$0x1] %vm2571, %v2566
        %2576 = vmatprep.subr.mxu0 0.0
        %2577 = vmatpush1.msra.mxu0 0.0
        %2578 = vmatprep.subr.mxu0 0.0
        %2579 = vmatpush1.msra.mxu0 0.0
        %2580 = vmatprep.subr.mxu0 0.0
        %2581 = vmatpush1.msra.mxu0 0.0
        %2582 = vmatprep.subr.mxu0 0.0
        %2583 = vmatpush1.msra.mxu0 0.0
        %2584 = vmatprep.subr.mxu0 0.0
        %2585 = vmatpush1.msra.mxu0 0.0
        %2586 = vmatprep.subr.mxu0 0.0
        %2587 = vmatpush1.msra.mxu0 0.0
        %2588 = vmatprep.subr.mxu0 0.0
        %2589 = vmatpush1.msra.mxu0 0.0
        %2590 = vmatprep.subr.mxu0 0.0
        %2591 = vmatpush1.msra.mxu0 0.0
        %2592 = vmatprep.subr.mxu0 0.0
        %2593 = vmatpush1.msra.mxu0 0.0
        %2594 = vmatprep.subr.mxu0 0.0
        %2595 = vmatpush1.msra.mxu0 0.0
        %2596 = vmatprep.subr.mxu0 0.0
        %2597 = vmatpush1.msra.mxu0 0.0
        %2598 = vmatprep.subr.mxu0 0.0
        %2599 = vmatpush1.msra.mxu0 0.0
        %2600 = vmatprep.subr.mxu0 0.0
        %2601 = vmatpush1.msra.mxu0 0.0
        %2602 = vmatprep.subr.mxu0 0.0
        %2603 = vmatpush1.msra.mxu0 %v2275
        %2604 = vmatprep.subr.mxu0 0.0
        %2605 = vmatpush1.msra.mxu0 %v2278
        %2606 = vmatprep.subr.mxu0 0.0
        %2607 = vmatpush1.msra.mxu0 %v2121
        %2608 = vmatprep.subr.mxu0 0.0
        %2609 = vmatpush2.msra.mxu0 0.0
        %2610 = vmatprep.subr.mxu0 0.0
        %2611 = vmatpush2.msra.mxu0 0.0
        %2612 = vmatprep.subr.mxu0 0.0
        %2613 = vmatpush2.msra.mxu0 0.0
        %2614 = vmatprep.subr.mxu0 0.0
        %2615 = vmatpush2.msra.mxu0 0.0
        %2616 = vmatprep.subr.mxu0 0.0
        %2617 = vmatpush2.msra.mxu0 0.0
        %2618 = vmatprep.subr.mxu0 0.0
        %2619 = vmatpush2.msra.mxu0 0.0
        %2620 = vmatprep.subr.mxu0 0.0
        %2621 = vmatpush2.msra.mxu0 0.0
        %2622 = vmatprep.subr.mxu0 0.0
        %2623 = vmatpush2.msra.mxu0 0.0
        %2624 = vmatprep.subr.mxu0 0.0
        %2625 = vmatpush2.msra.mxu0 0.0
        %2626 = vmatprep.subr.mxu0 0.0
        %2627 = vmatpush2.msra.mxu0 0.0
        %2628 = vmatprep.subr.mxu0 0.0
        %2629 = vmatpush2.msra.mxu0 0.0
        %2630 = vmatprep.subr.mxu0 0.0
        %2631 = vmatpush2.msra.mxu0 0.0
        %2632 = vmatprep.subr.mxu0 0.0
        %2633 = vmatpush2.msra.mxu0 0.0
        %2634 = vmatprep.subr.mxu0 0.0
        %2635 = vmatpush2.msra.mxu0 0.0
        %2636 = vmatprep.subr.mxu0 0.0
        %2637 = vmatpush2.msra.mxu0 0.0
        %2638 = vmatprep.subr.mxu0 0.0
        %2639 = vmatpush2.msra.mxu0 0.0
        %2640 = vmatprep.mubr.f32.mxu0 0.0
        %2641 = vmatmul.mubr.f32.gmra.mxu0 %v2391
        %v2642 = vpop.f32.mrf.mxu0
        %v2643 = vadd.f32 %v2387, %v2642
        %v2644 = vpop.f32.mrf.mxu0
        %2645 = vdwg.mxu0
        %2646 = vmatprep.subr.mxu0 0.0
        %2647 = vmatpush1.msra.mxu0 0.0
        %2648 = vmatprep.subr.mxu0 0.0
        %2649 = vmatpush1.msra.mxu0 0.0
        %2650 = vmatprep.subr.mxu0 0.0
        %2651 = vmatpush1.msra.mxu0 0.0
        %2652 = vmatprep.subr.mxu0 0.0
        %2653 = vmatpush1.msra.mxu0 0.0
        %2654 = vmatprep.subr.mxu0 0.0
        %2655 = vmatpush1.msra.mxu0 0.0
        %2656 = vmatprep.subr.mxu0 0.0
        %2657 = vmatpush1.msra.mxu0 0.0
        %2658 = vmatprep.subr.mxu0 0.0
        %2659 = vmatpush1.msra.mxu0 0.0
        %2660 = vmatprep.subr.mxu0 0.0
        %2661 = vmatpush1.msra.mxu0 0.0
        %2662 = vmatprep.subr.mxu0 0.0
        %2663 = vmatpush1.msra.mxu0 0.0
        %2664 = vmatprep.subr.mxu0 0.0
        %2665 = vmatpush1.msra.mxu0 0.0
        %2666 = vmatprep.subr.mxu0 0.0
        %2667 = vmatpush1.msra.mxu0 0.0
        %2668 = vmatprep.subr.mxu0 0.0
        %2669 = vmatpush1.msra.mxu0 0.0
        %2670 = vmatprep.subr.mxu0 0.0
        %2671 = vmatpush1.msra.mxu0 0.0
        %2672 = vmatprep.subr.mxu0 0.0
        %2673 = vmatpush1.msra.mxu0 %v2282
        %2674 = vmatprep.subr.mxu0 0.0
        %2675 = vmatpush1.msra.mxu0 %v2285
        %2676 = vmatprep.subr.mxu0 0.0
        %2677 = vmatpush1.msra.mxu0 %v2130
        %2678 = vmatprep.subr.mxu0 0.0
        %2679 = vmatpush2.msra.mxu0 0.0
        %2680 = vmatprep.subr.mxu0 0.0
        %2681 = vmatpush2.msra.mxu0 0.0
        %2682 = vmatprep.subr.mxu0 0.0
        %2683 = vmatpush2.msra.mxu0 0.0
        %2684 = vmatprep.subr.mxu0 0.0
        %2685 = vmatpush2.msra.mxu0 0.0
        %2686 = vmatprep.subr.mxu0 0.0
        %2687 = vmatpush2.msra.mxu0 0.0
        %2688 = vmatprep.subr.mxu0 0.0
        %2689 = vmatpush2.msra.mxu0 0.0
        %2690 = vmatprep.subr.mxu0 0.0
        %2691 = vmatpush2.msra.mxu0 0.0
        %2692 = vmatprep.subr.mxu0 0.0
        %2693 = vmatpush2.msra.mxu0 0.0
        %2694 = vmatprep.subr.mxu0 0.0
        %2695 = vmatpush2.msra.mxu0 0.0
        %2696 = vmatprep.subr.mxu0 0.0
        %2697 = vmatpush2.msra.mxu0 0.0
        %2698 = vmatprep.subr.mxu0 0.0
        %2699 = vmatpush2.msra.mxu0 0.0
        %2700 = vmatprep.subr.mxu0 0.0
        %2701 = vmatpush2.msra.mxu0 0.0
        %2702 = vmatprep.subr.mxu0 0.0
        %2703 = vmatpush2.msra.mxu0 0.0
        %2704 = vmatprep.subr.mxu0 0.0
        %2705 = vmatpush2.msra.mxu0 0.0
        %2706 = vmatprep.subr.mxu0 0.0
        %2707 = vmatpush2.msra.mxu0 0.0
        %2708 = vmatprep.subr.mxu0 0.0
        %2709 = vmatpush2.msra.mxu0 0.0
        %2710 = vmatprep.mubr.f32.mxu0 0.0
        %2711 = vmatmul.mubr.f32.gmra.mxu0 %v2464
        %v2712 = vpop.f32.mrf.mxu0
        %v2713 = vadd.f32 %v2387, %v2712
        %v2714 = vpop.f32.mrf.mxu0
        %2715 = vdwg.mxu0
        %2717 = vrot.lane.b32.xlu0 %v2713, 32
        %v2718 = vpop.permute.xlu0 %2717
        %v2720 = vsel %vm2540, %v2643, %v2718
        %v2723 = vunpack.c.l.s4 1966171168
        %v2724 = vunpack.c.0.s8 %v2723
        %v2725 = vlaneseq
        %v2726 = vshrl.u32 %v2725, 7
        %v2727 = vsub.s32 %v2724, %v2726
        %v2728 = vrot.slane %v2720, %v2727
        %v2729 = vcombine.high %v2728, %v2728
        %v2731 = vunpack.c.l.s4 1966171168
        %v2732 = vunpack.c.0.s8 %v2731
        %v2733 = vlaneseq
        %v2734 = vshrl.u32 %v2733, 7
        %v2735 = vsub.s32 %v2732, %v2734
        %v2736 = vrot.slane %v2728, %v2735
        %v2738 = vunpack.c.l.s4 1966171168
        %v2739 = vunpack.c.0.s8 %v2738
        %v2740 = vlaneseq
        %v2741 = vshrl.u32 %v2740, 7
        %v2742 = vsub.s32 %v2739, %v2741
        %v2743 = vrot.slane %v2729, %v2742
        %v2744 = vcombine.high %v2736, %v2736
        %v2745 = vcombine.high %v2743, %v2743
        %2750 = vst.msk [vmem:[%s537 + $0x1] sm:$0x1] %vm2571, %v2736
        %2751 = vst.msk [vmem:[%s537 + $0x11] sm:$0x1] %vm2571, %v2743
        %2752 = vst.msk [vmem:[%s537 + $0x21] sm:$0x1] %vm2571, %v2744
        %2753 = vst.msk [vmem:[%s537 + $0x31] sm:$0x1] %vm2571, %v2745
        %2754 = vmatprep.subr.mxu0 0.0
        %2755 = vmatpush1.msra.mxu0 0.0
        %2756 = vmatprep.subr.mxu0 0.0
        %2757 = vmatpush1.msra.mxu0 0.0
        %2758 = vmatprep.subr.mxu0 0.0
        %2759 = vmatpush1.msra.mxu0 0.0
        %2760 = vmatprep.subr.mxu0 0.0
        %2761 = vmatpush1.msra.mxu0 0.0
        %2762 = vmatprep.subr.mxu0 0.0
        %2763 = vmatpush1.msra.mxu0 0.0
        %2764 = vmatprep.subr.mxu0 0.0
        %2765 = vmatpush1.msra.mxu0 0.0
        %2766 = vmatprep.subr.mxu0 0.0
        %2767 = vmatpush1.msra.mxu0 0.0
        %2768 = vmatprep.subr.mxu0 0.0
        %2769 = vmatpush1.msra.mxu0 0.0
        %2770 = vmatprep.subr.mxu0 0.0
        %2771 = vmatpush1.msra.mxu0 0.0
        %2772 = vmatprep.subr.mxu0 0.0
        %2773 = vmatpush1.msra.mxu0 0.0
        %2774 = vmatprep.subr.mxu0 0.0
        %2775 = vmatpush1.msra.mxu0 0.0
        %2776 = vmatprep.subr.mxu0 0.0
        %2777 = vmatpush1.msra.mxu0 0.0
        %2778 = vmatprep.subr.mxu0 0.0
        %2779 = vmatpush1.msra.mxu0 0.0
        %2780 = vmatprep.subr.mxu0 0.0
        %2781 = vmatpush1.msra.mxu0 %v2282
        %2782 = vmatprep.subr.mxu0 0.0
        %2783 = vmatpush1.msra.mxu0 %v2285
        %2784 = vmatprep.subr.mxu0 0.0
        %2785 = vmatpush1.msra.mxu0 %v2130
        %2786 = vmatprep.subr.mxu0 0.0
        %2787 = vmatpush2.msra.mxu0 0.0
        %2788 = vmatprep.subr.mxu0 0.0
        %2789 = vmatpush2.msra.mxu0 0.0
        %2790 = vmatprep.subr.mxu0 0.0
        %2791 = vmatpush2.msra.mxu0 0.0
        %2792 = vmatprep.subr.mxu0 0.0
        %2793 = vmatpush2.msra.mxu0 0.0
        %2794 = vmatprep.subr.mxu0 0.0
        %2795 = vmatpush2.msra.mxu0 0.0
        %2796 = vmatprep.subr.mxu0 0.0
        %2797 = vmatpush2.msra.mxu0 0.0
        %2798 = vmatprep.subr.mxu0 0.0
        %2799 = vmatpush2.msra.mxu0 0.0
        %2800 = vmatprep.subr.mxu0 0.0
        %2801 = vmatpush2.msra.mxu0 0.0
        %2802 = vmatprep.subr.mxu0 0.0
        %2803 = vmatpush2.msra.mxu0 0.0
        %2804 = vmatprep.subr.mxu0 0.0
        %2805 = vmatpush2.msra.mxu0 0.0
        %2806 = vmatprep.subr.mxu0 0.0
        %2807 = vmatpush2.msra.mxu0 0.0
        %2808 = vmatprep.subr.mxu0 0.0
        %2809 = vmatpush2.msra.mxu0 0.0
        %2810 = vmatprep.subr.mxu0 0.0
        %2811 = vmatpush2.msra.mxu0 0.0
        %2812 = vmatprep.subr.mxu0 0.0
        %2813 = vmatpush2.msra.mxu0 0.0
        %2814 = vmatprep.subr.mxu0 0.0
        %2815 = vmatpush2.msra.mxu0 0.0
        %2816 = vmatprep.subr.mxu0 0.0
        %2817 = vmatpush2.msra.mxu0 0.0
        %2818 = vmatprep.mubr.f32.mxu0 0.0
        %2819 = vmatmul.mubr.f32.gmra.mxu0 %v2391
        %v2820 = vpop.f32.mrf.mxu0
        %v2821 = vadd.f32 %v2387, %v2820
        %v2822 = vpop.f32.mrf.mxu0
        %2823 = vdwg.mxu0
        %2824 = vmatprep.subr.mxu0 0.0
        %2825 = vmatpush1.msra.mxu0 0.0
        %2826 = vmatprep.subr.mxu0 0.0
        %2827 = vmatpush1.msra.mxu0 0.0
        %2828 = vmatprep.subr.mxu0 0.0
        %2829 = vmatpush1.msra.mxu0 0.0
        %2830 = vmatprep.subr.mxu0 0.0
        %2831 = vmatpush1.msra.mxu0 0.0
        %2832 = vmatprep.subr.mxu0 0.0
        %2833 = vmatpush1.msra.mxu0 0.0
        %2834 = vmatprep.subr.mxu0 0.0
        %2835 = vmatpush1.msra.mxu0 0.0
        %2836 = vmatprep.subr.mxu0 0.0
        %2837 = vmatpush1.msra.mxu0 0.0
        %2838 = vmatprep.subr.mxu0 0.0
        %2839 = vmatpush1.msra.mxu0 0.0
        %2840 = vmatprep.subr.mxu0 0.0
        %2841 = vmatpush1.msra.mxu0 0.0
        %2842 = vmatprep.subr.mxu0 0.0
        %2843 = vmatpush1.msra.mxu0 0.0
        %2844 = vmatprep.subr.mxu0 0.0
        %2845 = vmatpush1.msra.mxu0 0.0
        %2846 = vmatprep.subr.mxu0 0.0
        %2847 = vmatpush1.msra.mxu0 0.0
        %2848 = vmatprep.subr.mxu0 0.0
        %2849 = vmatpush1.msra.mxu0 0.0
        %2850 = vmatprep.subr.mxu0 0.0
        %2851 = vmatpush1.msra.mxu0 %v2289
        %2852 = vmatprep.subr.mxu0 0.0
        %2853 = vmatpush1.msra.mxu0 %v2292
        %2854 = vmatprep.subr.mxu0 0.0
        %2855 = vmatpush1.msra.mxu0 %v2139
        %2856 = vmatprep.subr.mxu0 0.0
        %2857 = vmatpush2.msra.mxu0 0.0
        %2858 = vmatprep.subr.mxu0 0.0
        %2859 = vmatpush2.msra.mxu0 0.0
        %2860 = vmatprep.subr.mxu0 0.0
        %2861 = vmatpush2.msra.mxu0 0.0
        %2862 = vmatprep.subr.mxu0 0.0
        %2863 = vmatpush2.msra.mxu0 0.0
        %2864 = vmatprep.subr.mxu0 0.0
        %2865 = vmatpush2.msra.mxu0 0.0
        %2866 = vmatprep.subr.mxu0 0.0
        %2867 = vmatpush2.msra.mxu0 0.0
        %2868 = vmatprep.subr.mxu0 0.0
        %2869 = vmatpush2.msra.mxu0 0.0
        %2870 = vmatprep.subr.mxu0 0.0
        %2871 = vmatpush2.msra.mxu0 0.0
        %2872 = vmatprep.subr.mxu0 0.0
        %2873 = vmatpush2.msra.mxu0 0.0
        %2874 = vmatprep.subr.mxu0 0.0
        %2875 = vmatpush2.msra.mxu0 0.0
        %2876 = vmatprep.subr.mxu0 0.0
        %2877 = vmatpush2.msra.mxu0 0.0
        %2878 = vmatprep.subr.mxu0 0.0
        %2879 = vmatpush2.msra.mxu0 0.0
        %2880 = vmatprep.subr.mxu0 0.0
        %2881 = vmatpush2.msra.mxu0 0.0
        %2882 = vmatprep.subr.mxu0 0.0
        %2883 = vmatpush2.msra.mxu0 0.0
        %2884 = vmatprep.subr.mxu0 0.0
        %2885 = vmatpush2.msra.mxu0 0.0
        %2886 = vmatprep.subr.mxu0 0.0
        %2887 = vmatpush2.msra.mxu0 0.0
        %2888 = vmatprep.mubr.f32.mxu0 0.0
        %2889 = vmatmul.mubr.f32.gmra.mxu0 %v2464
        %v2890 = vpop.f32.mrf.mxu0
        %v2891 = vadd.f32 %v2387, %v2890
        %v2892 = vpop.f32.mrf.mxu0
        %2893 = vdwg.mxu0
        %2895 = vrot.lane.b32.xlu0 %v2891, 32
        %v2896 = vpop.permute.xlu0 %2895
        %v2898 = vsel %vm2540, %v2821, %v2896
        %v2901 = vunpack.c.l.s4 1966171168
        %v2902 = vunpack.c.0.s8 %v2901
        %v2903 = vlaneseq
        %v2904 = vshrl.u32 %v2903, 7
        %v2905 = vsub.s32 %v2902, %v2904
        %v2906 = vrot.slane %v2898, %v2905
        %v2907 = vcombine.high %v2906, %v2906
        %v2909 = vunpack.c.l.s4 1966171168
        %v2910 = vunpack.c.0.s8 %v2909
        %v2911 = vlaneseq
        %v2912 = vshrl.u32 %v2911, 7
        %v2913 = vsub.s32 %v2910, %v2912
        %v2914 = vrot.slane %v2906, %v2913
        %v2916 = vunpack.c.l.s4 1966171168
        %v2917 = vunpack.c.0.s8 %v2916
        %v2918 = vlaneseq
        %v2919 = vshrl.u32 %v2918, 7
        %v2920 = vsub.s32 %v2917, %v2919
        %v2921 = vrot.slane %v2907, %v2920
        %v2922 = vcombine.high %v2914, %v2914
        %v2923 = vcombine.high %v2921, %v2921
        %2928 = vst.msk [vmem:[%s537 + $0x2] sm:$0x1] %vm2571, %v2914
        %2929 = vst.msk [vmem:[%s537 + $0x12] sm:$0x1] %vm2571, %v2921
        %2930 = vst.msk [vmem:[%s537 + $0x22] sm:$0x1] %vm2571, %v2922
        %2931 = vst.msk [vmem:[%s537 + $0x32] sm:$0x1] %vm2571, %v2923
        %2932 = vmatprep.subr.mxu0 0.0
        %2933 = vmatpush1.msra.mxu0 0.0
        %2934 = vmatprep.subr.mxu0 0.0
        %2935 = vmatpush1.msra.mxu0 0.0
        %2936 = vmatprep.subr.mxu0 0.0
        %2937 = vmatpush1.msra.mxu0 0.0
        %2938 = vmatprep.subr.mxu0 0.0
        %2939 = vmatpush1.msra.mxu0 0.0
        %2940 = vmatprep.subr.mxu0 0.0
        %2941 = vmatpush1.msra.mxu0 0.0
        %2942 = vmatprep.subr.mxu0 0.0
        %2943 = vmatpush1.msra.mxu0 0.0
        %2944 = vmatprep.subr.mxu0 0.0
        %2945 = vmatpush1.msra.mxu0 0.0
        %2946 = vmatprep.subr.mxu0 0.0
        %2947 = vmatpush1.msra.mxu0 0.0
        %2948 = vmatprep.subr.mxu0 0.0
        %2949 = vmatpush1.msra.mxu0 0.0
        %2950 = vmatprep.subr.mxu0 0.0
        %2951 = vmatpush1.msra.mxu0 0.0
        %2952 = vmatprep.subr.mxu0 0.0
        %2953 = vmatpush1.msra.mxu0 0.0
        %2954 = vmatprep.subr.mxu0 0.0
        %2955 = vmatpush1.msra.mxu0 0.0
        %2956 = vmatprep.subr.mxu0 0.0
        %2957 = vmatpush1.msra.mxu0 0.0
        %2958 = vmatprep.subr.mxu0 0.0
        %2959 = vmatpush1.msra.mxu0 %v2289
        %2960 = vmatprep.subr.mxu0 0.0
        %2961 = vmatpush1.msra.mxu0 %v2292
        %2962 = vmatprep.subr.mxu0 0.0
        %2963 = vmatpush1.msra.mxu0 %v2139
        %2964 = vmatprep.subr.mxu0 0.0
        %2965 = vmatpush2.msra.mxu0 0.0
        %2966 = vmatprep.subr.mxu0 0.0
        %2967 = vmatpush2.msra.mxu0 0.0
        %2968 = vmatprep.subr.mxu0 0.0
        %2969 = vmatpush2.msra.mxu0 0.0
        %2970 = vmatprep.subr.mxu0 0.0
        %2971 = vmatpush2.msra.mxu0 0.0
        %2972 = vmatprep.subr.mxu0 0.0
        %2973 = vmatpush2.msra.mxu0 0.0
        %2974 = vmatprep.subr.mxu0 0.0
        %2975 = vmatpush2.msra.mxu0 0.0
        %2976 = vmatprep.subr.mxu0 0.0
        %2977 = vmatpush2.msra.mxu0 0.0
        %2978 = vmatprep.subr.mxu0 0.0
        %2979 = vmatpush2.msra.mxu0 0.0
        %2980 = vmatprep.subr.mxu0 0.0
        %2981 = vmatpush2.msra.mxu0 0.0
        %2982 = vmatprep.subr.mxu0 0.0
        %2983 = vmatpush2.msra.mxu0 0.0
        %2984 = vmatprep.subr.mxu0 0.0
        %2985 = vmatpush2.msra.mxu0 0.0
        %2986 = vmatprep.subr.mxu0 0.0
        %2987 = vmatpush2.msra.mxu0 0.0
        %2988 = vmatprep.subr.mxu0 0.0
        %2989 = vmatpush2.msra.mxu0 0.0
        %2990 = vmatprep.subr.mxu0 0.0
        %2991 = vmatpush2.msra.mxu0 0.0
        %2992 = vmatprep.subr.mxu0 0.0
        %2993 = vmatpush2.msra.mxu0 0.0
        %2994 = vmatprep.subr.mxu0 0.0
        %2995 = vmatpush2.msra.mxu0 0.0
        %2996 = vmatprep.mubr.f32.mxu0 0.0
        %2997 = vmatmul.mubr.f32.gmra.mxu0 %v2391
        %v2998 = vpop.f32.mrf.mxu0
        %v2999 = vadd.f32 %v2387, %v2998
        %v3000 = vpop.f32.mrf.mxu0
        %3001 = vdwg.mxu0
        %3002 = vmatprep.subr.mxu0 0.0
        %3003 = vmatpush1.msra.mxu0 0.0
        %3004 = vmatprep.subr.mxu0 0.0
        %3005 = vmatpush1.msra.mxu0 0.0
        %3006 = vmatprep.subr.mxu0 0.0
        %3007 = vmatpush1.msra.mxu0 0.0
        %3008 = vmatprep.subr.mxu0 0.0
        %3009 = vmatpush1.msra.mxu0 0.0
        %3010 = vmatprep.subr.mxu0 0.0
        %3011 = vmatpush1.msra.mxu0 0.0
        %3012 = vmatprep.subr.mxu0 0.0
        %3013 = vmatpush1.msra.mxu0 0.0
        %3014 = vmatprep.subr.mxu0 0.0
        %3015 = vmatpush1.msra.mxu0 0.0
        %3016 = vmatprep.subr.mxu0 0.0
        %3017 = vmatpush1.msra.mxu0 0.0
        %3018 = vmatprep.subr.mxu0 0.0
        %3019 = vmatpush1.msra.mxu0 0.0
        %3020 = vmatprep.subr.mxu0 0.0
        %3021 = vmatpush1.msra.mxu0 0.0
        %3022 = vmatprep.subr.mxu0 0.0
        %3023 = vmatpush1.msra.mxu0 0.0
        %3024 = vmatprep.subr.mxu0 0.0
        %3025 = vmatpush1.msra.mxu0 0.0
        %3026 = vmatprep.subr.mxu0 0.0
        %3027 = vmatpush1.msra.mxu0 0.0
        %3028 = vmatprep.subr.mxu0 0.0
        %3029 = vmatpush1.msra.mxu0 %v2296
        %3030 = vmatprep.subr.mxu0 0.0
        %3031 = vmatpush1.msra.mxu0 %v2299
        %3032 = vmatprep.subr.mxu0 0.0
        %3033 = vmatpush1.msra.mxu0 %v2148
        %3034 = vmatprep.subr.mxu0 0.0
        %3035 = vmatpush2.msra.mxu0 0.0
        %3036 = vmatprep.subr.mxu0 0.0
        %3037 = vmatpush2.msra.mxu0 0.0
        %3038 = vmatprep.subr.mxu0 0.0
        %3039 = vmatpush2.msra.mxu0 0.0
        %3040 = vmatprep.subr.mxu0 0.0
        %3041 = vmatpush2.msra.mxu0 0.0
        %3042 = vmatprep.subr.mxu0 0.0
        %3043 = vmatpush2.msra.mxu0 0.0
        %3044 = vmatprep.subr.mxu0 0.0
        %3045 = vmatpush2.msra.mxu0 0.0
        %3046 = vmatprep.subr.mxu0 0.0
        %3047 = vmatpush2.msra.mxu0 0.0
        %3048 = vmatprep.subr.mxu0 0.0
        %3049 = vmatpush2.msra.mxu0 0.0
        %3050 = vmatprep.subr.mxu0 0.0
        %3051 = vmatpush2.msra.mxu0 0.0
        %3052 = vmatprep.subr.mxu0 0.0
        %3053 = vmatpush2.msra.mxu0 0.0
        %3054 = vmatprep.subr.mxu0 0.0
        %3055 = vmatpush2.msra.mxu0 0.0
        %3056 = vmatprep.subr.mxu0 0.0
        %3057 = vmatpush2.msra.mxu0 0.0
        %3058 = vmatprep.subr.mxu0 0.0
        %3059 = vmatpush2.msra.mxu0 0.0
        %3060 = vmatprep.subr.mxu0 0.0
        %3061 = vmatpush2.msra.mxu0 0.0
        %3062 = vmatprep.subr.mxu0 0.0
        %3063 = vmatpush2.msra.mxu0 0.0
        %3064 = vmatprep.subr.mxu0 0.0
        %3065 = vmatpush2.msra.mxu0 0.0
        %3066 = vmatprep.mubr.f32.mxu0 0.0
        %3067 = vmatmul.mubr.f32.gmra.mxu0 %v2464
        %v3068 = vpop.f32.mrf.mxu0
        %v3069 = vadd.f32 %v2387, %v3068
        %v3070 = vpop.f32.mrf.mxu0
        %3071 = vdwg.mxu0
        %3073 = vrot.lane.b32.xlu0 %v3069, 32
        %v3074 = vpop.permute.xlu0 %3073
        %v3076 = vsel %vm2540, %v2999, %v3074
        %v3079 = vunpack.c.l.s4 1966171168
        %v3080 = vunpack.c.0.s8 %v3079
        %v3081 = vlaneseq
        %v3082 = vshrl.u32 %v3081, 7
        %v3083 = vsub.s32 %v3080, %v3082
        %v3084 = vrot.slane %v3076, %v3083
        %v3085 = vcombine.high %v3084, %v3084
        %v3087 = vunpack.c.l.s4 1966171168
        %v3088 = vunpack.c.0.s8 %v3087
        %v3089 = vlaneseq
        %v3090 = vshrl.u32 %v3089, 7
        %v3091 = vsub.s32 %v3088, %v3090
        %v3092 = vrot.slane %v3084, %v3091
        %v3094 = vunpack.c.l.s4 1966171168
        %v3095 = vunpack.c.0.s8 %v3094
        %v3096 = vlaneseq
        %v3097 = vshrl.u32 %v3096, 7
        %v3098 = vsub.s32 %v3095, %v3097
        %v3099 = vrot.slane %v3085, %v3098
        %v3100 = vcombine.high %v3092, %v3092
        %v3101 = vcombine.high %v3099, %v3099
        %3106 = vst.msk [vmem:[%s537 + $0x3] sm:$0x1] %vm2571, %v3092
        %3107 = vst.msk [vmem:[%s537 + $0x13] sm:$0x1] %vm2571, %v3099
        %3108 = vst.msk [vmem:[%s537 + $0x23] sm:$0x1] %vm2571, %v3100
        %3109 = vst.msk [vmem:[%s537 + $0x33] sm:$0x1] %vm2571, %v3101
        %3110 = vmatprep.subr.mxu0 0.0
        %3111 = vmatpush1.msra.mxu0 0.0
        %3112 = vmatprep.subr.mxu0 0.0
        %3113 = vmatpush1.msra.mxu0 0.0
        %3114 = vmatprep.subr.mxu0 0.0
        %3115 = vmatpush1.msra.mxu0 0.0
        %3116 = vmatprep.subr.mxu0 0.0
        %3117 = vmatpush1.msra.mxu0 0.0
        %3118 = vmatprep.subr.mxu0 0.0
        %3119 = vmatpush1.msra.mxu0 0.0
        %3120 = vmatprep.subr.mxu0 0.0
        %3121 = vmatpush1.msra.mxu0 0.0
        %3122 = vmatprep.subr.mxu0 0.0
        %3123 = vmatpush1.msra.mxu0 0.0
        %3124 = vmatprep.subr.mxu0 0.0
        %3125 = vmatpush1.msra.mxu0 0.0
        %3126 = vmatprep.subr.mxu0 0.0
        %3127 = vmatpush1.msra.mxu0 0.0
        %3128 = vmatprep.subr.mxu0 0.0
        %3129 = vmatpush1.msra.mxu0 0.0
        %3130 = vmatprep.subr.mxu0 0.0
        %3131 = vmatpush1.msra.mxu0 0.0
        %3132 = vmatprep.subr.mxu0 0.0
        %3133 = vmatpush1.msra.mxu0 0.0
        %3134 = vmatprep.subr.mxu0 0.0
        %3135 = vmatpush1.msra.mxu0 0.0
        %3136 = vmatprep.subr.mxu0 0.0
        %3137 = vmatpush1.msra.mxu0 %v2296
        %3138 = vmatprep.subr.mxu0 0.0
        %3139 = vmatpush1.msra.mxu0 %v2299
        %3140 = vmatprep.subr.mxu0 0.0
        %3141 = vmatpush1.msra.mxu0 %v2148
        %3142 = vmatprep.subr.mxu0 0.0
        %3143 = vmatpush2.msra.mxu0 0.0
        %3144 = vmatprep.subr.mxu0 0.0
        %3145 = vmatpush2.msra.mxu0 0.0
        %3146 = vmatprep.subr.mxu0 0.0
        %3147 = vmatpush2.msra.mxu0 0.0
        %3148 = vmatprep.subr.mxu0 0.0
        %3149 = vmatpush2.msra.mxu0 0.0
        %3150 = vmatprep.subr.mxu0 0.0
        %3151 = vmatpush2.msra.mxu0 0.0
        %3152 = vmatprep.subr.mxu0 0.0
        %3153 = vmatpush2.msra.mxu0 0.0
        %3154 = vmatprep.subr.mxu0 0.0
        %3155 = vmatpush2.msra.mxu0 0.0
        %3156 = vmatprep.subr.mxu0 0.0
        %3157 = vmatpush2.msra.mxu0 0.0
        %3158 = vmatprep.subr.mxu0 0.0
        %3159 = vmatpush2.msra.mxu0 0.0
        %3160 = vmatprep.subr.mxu0 0.0
        %3161 = vmatpush2.msra.mxu0 0.0
        %3162 = vmatprep.subr.mxu0 0.0
        %3163 = vmatpush2.msra.mxu0 0.0
        %3164 = vmatprep.subr.mxu0 0.0
        %3165 = vmatpush2.msra.mxu0 0.0
        %3166 = vmatprep.subr.mxu0 0.0
        %3167 = vmatpush2.msra.mxu0 0.0
        %3168 = vmatprep.subr.mxu0 0.0
        %3169 = vmatpush2.msra.mxu0 0.0
        %3170 = vmatprep.subr.mxu0 0.0
        %3171 = vmatpush2.msra.mxu0 0.0
        %3172 = vmatprep.subr.mxu0 0.0
        %3173 = vmatpush2.msra.mxu0 0.0
        %3174 = vmatprep.mubr.f32.mxu0 0.0
        %3175 = vmatmul.mubr.f32.gmra.mxu0 %v2391
        %v3176 = vpop.f32.mrf.mxu0
        %v3177 = vadd.f32 %v2387, %v3176
        %v3178 = vpop.f32.mrf.mxu0
        %3179 = vdwg.mxu0
        %3180 = vmatprep.subr.mxu0 0.0
        %3181 = vmatpush1.msra.mxu0 0.0
        %3182 = vmatprep.subr.mxu0 0.0
        %3183 = vmatpush1.msra.mxu0 0.0
        %3184 = vmatprep.subr.mxu0 0.0
        %3185 = vmatpush1.msra.mxu0 0.0
        %3186 = vmatprep.subr.mxu0 0.0
        %3187 = vmatpush1.msra.mxu0 0.0
        %3188 = vmatprep.subr.mxu0 0.0
        %3189 = vmatpush1.msra.mxu0 0.0
        %3190 = vmatprep.subr.mxu0 0.0
        %3191 = vmatpush1.msra.mxu0 0.0
        %3192 = vmatprep.subr.mxu0 0.0
        %3193 = vmatpush1.msra.mxu0 0.0
        %3194 = vmatprep.subr.mxu0 0.0
        %3195 = vmatpush1.msra.mxu0 0.0
        %3196 = vmatprep.subr.mxu0 0.0
        %3197 = vmatpush1.msra.mxu0 0.0
        %3198 = vmatprep.subr.mxu0 0.0
        %3199 = vmatpush1.msra.mxu0 0.0
        %3200 = vmatprep.subr.mxu0 0.0
        %3201 = vmatpush1.msra.mxu0 0.0
        %3202 = vmatprep.subr.mxu0 0.0
        %3203 = vmatpush1.msra.mxu0 0.0
        %3204 = vmatprep.subr.mxu0 0.0
        %3205 = vmatpush1.msra.mxu0 0.0
        %3206 = vmatprep.subr.mxu0 0.0
        %3207 = vmatpush1.msra.mxu0 %v2303
        %3208 = vmatprep.subr.mxu0 0.0
        %3209 = vmatpush1.msra.mxu0 %v2306
        %3210 = vmatprep.subr.mxu0 0.0
        %3211 = vmatpush1.msra.mxu0 %v2157
        %3212 = vmatprep.subr.mxu0 0.0
        %3213 = vmatpush2.msra.mxu0 0.0
        %3214 = vmatprep.subr.mxu0 0.0
        %3215 = vmatpush2.msra.mxu0 0.0
        %3216 = vmatprep.subr.mxu0 0.0
        %3217 = vmatpush2.msra.mxu0 0.0
        %3218 = vmatprep.subr.mxu0 0.0
        %3219 = vmatpush2.msra.mxu0 0.0
        %3220 = vmatprep.subr.mxu0 0.0
        %3221 = vmatpush2.msra.mxu0 0.0
        %3222 = vmatprep.subr.mxu0 0.0
        %3223 = vmatpush2.msra.mxu0 0.0
        %3224 = vmatprep.subr.mxu0 0.0
        %3225 = vmatpush2.msra.mxu0 0.0
        %3226 = vmatprep.subr.mxu0 0.0
        %3227 = vmatpush2.msra.mxu0 0.0
        %3228 = vmatprep.subr.mxu0 0.0
        %3229 = vmatpush2.msra.mxu0 0.0
        %3230 = vmatprep.subr.mxu0 0.0
        %3231 = vmatpush2.msra.mxu0 0.0
        %3232 = vmatprep.subr.mxu0 0.0
        %3233 = vmatpush2.msra.mxu0 0.0
        %3234 = vmatprep.subr.mxu0 0.0
        %3235 = vmatpush2.msra.mxu0 0.0
        %3236 = vmatprep.subr.mxu0 0.0
        %3237 = vmatpush2.msra.mxu0 0.0
        %3238 = vmatprep.subr.mxu0 0.0
        %3239 = vmatpush2.msra.mxu0 0.0
        %3240 = vmatprep.subr.mxu0 0.0
        %3241 = vmatpush2.msra.mxu0 0.0
        %3242 = vmatprep.subr.mxu0 0.0
        %3243 = vmatpush2.msra.mxu0 0.0
        %3244 = vmatprep.mubr.f32.mxu0 0.0
        %3245 = vmatmul.mubr.f32.gmra.mxu0 %v2464
        %v3246 = vpop.f32.mrf.mxu0
        %v3247 = vadd.f32 %v2387, %v3246
        %v3248 = vpop.f32.mrf.mxu0
        %3249 = vdwg.mxu0
        %3251 = vrot.lane.b32.xlu0 %v3247, 32
        %v3252 = vpop.permute.xlu0 %3251
        %v3254 = vsel %vm2540, %v3177, %v3252
        %v3257 = vunpack.c.l.s4 1966171168
        %v3258 = vunpack.c.0.s8 %v3257
        %v3259 = vlaneseq
        %v3260 = vshrl.u32 %v3259, 7
        %v3261 = vsub.s32 %v3258, %v3260
        %v3262 = vrot.slane %v3254, %v3261
        %v3263 = vcombine.high %v3262, %v3262
        %v3265 = vunpack.c.l.s4 1966171168
        %v3266 = vunpack.c.0.s8 %v3265
        %v3267 = vlaneseq
        %v3268 = vshrl.u32 %v3267, 7
        %v3269 = vsub.s32 %v3266, %v3268
        %v3270 = vrot.slane %v3262, %v3269
        %v3272 = vunpack.c.l.s4 1966171168
        %v3273 = vunpack.c.0.s8 %v3272
        %v3274 = vlaneseq
        %v3275 = vshrl.u32 %v3274, 7
        %v3276 = vsub.s32 %v3273, %v3275
        %v3277 = vrot.slane %v3263, %v3276
        %v3278 = vcombine.high %v3270, %v3270
        %v3279 = vcombine.high %v3277, %v3277
        %3284 = vst.msk [vmem:[%s537 + $0x4] sm:$0x1] %vm2571, %v3270
        %3285 = vst.msk [vmem:[%s537 + $0x14] sm:$0x1] %vm2571, %v3277
        %3286 = vst.msk [vmem:[%s537 + $0x24] sm:$0x1] %vm2571, %v3278
        %3287 = vst.msk [vmem:[%s537 + $0x34] sm:$0x1] %vm2571, %v3279
        %3288 = vmatprep.subr.mxu0 0.0
        %3289 = vmatpush1.msra.mxu0 0.0
        %3290 = vmatprep.subr.mxu0 0.0
        %3291 = vmatpush1.msra.mxu0 0.0
        %3292 = vmatprep.subr.mxu0 0.0
        %3293 = vmatpush1.msra.mxu0 0.0
        %3294 = vmatprep.subr.mxu0 0.0
        %3295 = vmatpush1.msra.mxu0 0.0
        %3296 = vmatprep.subr.mxu0 0.0
        %3297 = vmatpush1.msra.mxu0 0.0
        %3298 = vmatprep.subr.mxu0 0.0
        %3299 = vmatpush1.msra.mxu0 0.0
        %3300 = vmatprep.subr.mxu0 0.0
        %3301 = vmatpush1.msra.mxu0 0.0
        %3302 = vmatprep.subr.mxu0 0.0
        %3303 = vmatpush1.msra.mxu0 0.0
        %3304 = vmatprep.subr.mxu0 0.0
        %3305 = vmatpush1.msra.mxu0 0.0
        %3306 = vmatprep.subr.mxu0 0.0
        %3307 = vmatpush1.msra.mxu0 0.0
        %3308 = vmatprep.subr.mxu0 0.0
        %3309 = vmatpush1.msra.mxu0 0.0
        %3310 = vmatprep.subr.mxu0 0.0
        %3311 = vmatpush1.msra.mxu0 0.0
        %3312 = vmatprep.subr.mxu0 0.0
        %3313 = vmatpush1.msra.mxu0 0.0
        %3314 = vmatprep.subr.mxu0 0.0
        %3315 = vmatpush1.msra.mxu0 %v2303
        %3316 = vmatprep.subr.mxu0 0.0
        %3317 = vmatpush1.msra.mxu0 %v2306
        %3318 = vmatprep.subr.mxu0 0.0
        %3319 = vmatpush1.msra.mxu0 %v2157
        %3320 = vmatprep.subr.mxu0 0.0
        %3321 = vmatpush2.msra.mxu0 0.0
        %3322 = vmatprep.subr.mxu0 0.0
        %3323 = vmatpush2.msra.mxu0 0.0
        %3324 = vmatprep.subr.mxu0 0.0
        %3325 = vmatpush2.msra.mxu0 0.0
        %3326 = vmatprep.subr.mxu0 0.0
        %3327 = vmatpush2.msra.mxu0 0.0
        %3328 = vmatprep.subr.mxu0 0.0
        %3329 = vmatpush2.msra.mxu0 0.0
        %3330 = vmatprep.subr.mxu0 0.0
        %3331 = vmatpush2.msra.mxu0 0.0
        %3332 = vmatprep.subr.mxu0 0.0
        %3333 = vmatpush2.msra.mxu0 0.0
        %3334 = vmatprep.subr.mxu0 0.0
        %3335 = vmatpush2.msra.mxu0 0.0
        %3336 = vmatprep.subr.mxu0 0.0
        %3337 = vmatpush2.msra.mxu0 0.0
        %3338 = vmatprep.subr.mxu0 0.0
        %3339 = vmatpush2.msra.mxu0 0.0
        %3340 = vmatprep.subr.mxu0 0.0
        %3341 = vmatpush2.msra.mxu0 0.0
        %3342 = vmatprep.subr.mxu0 0.0
        %3343 = vmatpush2.msra.mxu0 0.0
        %3344 = vmatprep.subr.mxu0 0.0
        %3345 = vmatpush2.msra.mxu0 0.0
        %3346 = vmatprep.subr.mxu0 0.0
        %3347 = vmatpush2.msra.mxu0 0.0
        %3348 = vmatprep.subr.mxu0 0.0
        %3349 = vmatpush2.msra.mxu0 0.0
        %3350 = vmatprep.subr.mxu0 0.0
        %3351 = vmatpush2.msra.mxu0 0.0
        %3352 = vmatprep.mubr.f32.mxu0 0.0
        %3353 = vmatmul.mubr.f32.gmra.mxu0 %v2391
        %v3354 = vpop.f32.mrf.mxu0
        %v3355 = vadd.f32 %v2387, %v3354
        %v3356 = vpop.f32.mrf.mxu0
        %3357 = vdwg.mxu0
        %3358 = vmatprep.subr.mxu0 0.0
        %3359 = vmatpush1.msra.mxu0 0.0
        %3360 = vmatprep.subr.mxu0 0.0
        %3361 = vmatpush1.msra.mxu0 0.0
        %3362 = vmatprep.subr.mxu0 0.0
        %3363 = vmatpush1.msra.mxu0 0.0
        %3364 = vmatprep.subr.mxu0 0.0
        %3365 = vmatpush1.msra.mxu0 0.0
        %3366 = vmatprep.subr.mxu0 0.0
        %3367 = vmatpush1.msra.mxu0 0.0
        %3368 = vmatprep.subr.mxu0 0.0
        %3369 = vmatpush1.msra.mxu0 0.0
        %3370 = vmatprep.subr.mxu0 0.0
        %3371 = vmatpush1.msra.mxu0 0.0
        %3372 = vmatprep.subr.mxu0 0.0
        %3373 = vmatpush1.msra.mxu0 0.0
        %3374 = vmatprep.subr.mxu0 0.0
        %3375 = vmatpush1.msra.mxu0 0.0
        %3376 = vmatprep.subr.mxu0 0.0
        %3377 = vmatpush1.msra.mxu0 0.0
        %3378 = vmatprep.subr.mxu0 0.0
        %3379 = vmatpush1.msra.mxu0 0.0
        %3380 = vmatprep.subr.mxu0 0.0
        %3381 = vmatpush1.msra.mxu0 0.0
        %3382 = vmatprep.subr.mxu0 0.0
        %3383 = vmatpush1.msra.mxu0 0.0
        %3384 = vmatprep.subr.mxu0 0.0
        %3385 = vmatpush1.msra.mxu0 %v2310
        %3386 = vmatprep.subr.mxu0 0.0
        %3387 = vmatpush1.msra.mxu0 %v2313
        %3388 = vmatprep.subr.mxu0 0.0
        %3389 = vmatpush1.msra.mxu0 %v2166
        %3390 = vmatprep.subr.mxu0 0.0
        %3391 = vmatpush2.msra.mxu0 0.0
        %3392 = vmatprep.subr.mxu0 0.0
        %3393 = vmatpush2.msra.mxu0 0.0
        %3394 = vmatprep.subr.mxu0 0.0
        %3395 = vmatpush2.msra.mxu0 0.0
        %3396 = vmatprep.subr.mxu0 0.0
        %3397 = vmatpush2.msra.mxu0 0.0
        %3398 = vmatprep.subr.mxu0 0.0
        %3399 = vmatpush2.msra.mxu0 0.0
        %3400 = vmatprep.subr.mxu0 0.0
        %3401 = vmatpush2.msra.mxu0 0.0
        %3402 = vmatprep.subr.mxu0 0.0
        %3403 = vmatpush2.msra.mxu0 0.0
        %3404 = vmatprep.subr.mxu0 0.0
        %3405 = vmatpush2.msra.mxu0 0.0
        %3406 = vmatprep.subr.mxu0 0.0
        %3407 = vmatpush2.msra.mxu0 0.0
        %3408 = vmatprep.subr.mxu0 0.0
        %3409 = vmatpush2.msra.mxu0 0.0
        %3410 = vmatprep.subr.mxu0 0.0
        %3411 = vmatpush2.msra.mxu0 0.0
        %3412 = vmatprep.subr.mxu0 0.0
        %3413 = vmatpush2.msra.mxu0 0.0
        %3414 = vmatprep.subr.mxu0 0.0
        %3415 = vmatpush2.msra.mxu0 0.0
        %3416 = vmatprep.subr.mxu0 0.0
        %3417 = vmatpush2.msra.mxu0 0.0
        %3418 = vmatprep.subr.mxu0 0.0
        %3419 = vmatpush2.msra.mxu0 0.0
        %3420 = vmatprep.subr.mxu0 0.0
        %3421 = vmatpush2.msra.mxu0 0.0
        %3422 = vmatprep.mubr.f32.mxu0 0.0
        %3423 = vmatmul.mubr.f32.gmra.mxu0 %v2464
        %v3424 = vpop.f32.mrf.mxu0
        %v3425 = vadd.f32 %v2387, %v3424
        %v3426 = vpop.f32.mrf.mxu0
        %3427 = vdwg.mxu0
        %3429 = vrot.lane.b32.xlu0 %v3425, 32
        %v3430 = vpop.permute.xlu0 %3429
        %v3432 = vsel %vm2540, %v3355, %v3430
        %v3435 = vunpack.c.l.s4 1966171168
        %v3436 = vunpack.c.0.s8 %v3435
        %v3437 = vlaneseq
        %v3438 = vshrl.u32 %v3437, 7
        %v3439 = vsub.s32 %v3436, %v3438
        %v3440 = vrot.slane %v3432, %v3439
        %v3441 = vcombine.high %v3440, %v3440
        %v3443 = vunpack.c.l.s4 1966171168
        %v3444 = vunpack.c.0.s8 %v3443
        %v3445 = vlaneseq
        %v3446 = vshrl.u32 %v3445, 7
        %v3447 = vsub.s32 %v3444, %v3446
        %v3448 = vrot.slane %v3440, %v3447
        %v3450 = vunpack.c.l.s4 1966171168
        %v3451 = vunpack.c.0.s8 %v3450
        %v3452 = vlaneseq
        %v3453 = vshrl.u32 %v3452, 7
        %v3454 = vsub.s32 %v3451, %v3453
        %v3455 = vrot.slane %v3441, %v3454
        %v3456 = vcombine.high %v3448, %v3448
        %v3457 = vcombine.high %v3455, %v3455
        %3462 = vst.msk [vmem:[%s537 + $0x5] sm:$0x1] %vm2571, %v3448
        %3463 = vst.msk [vmem:[%s537 + $0x15] sm:$0x1] %vm2571, %v3455
        %3464 = vst.msk [vmem:[%s537 + $0x25] sm:$0x1] %vm2571, %v3456
        %3465 = vst.msk [vmem:[%s537 + $0x35] sm:$0x1] %vm2571, %v3457
        %3466 = vmatprep.subr.mxu0 0.0
        %3467 = vmatpush1.msra.mxu0 0.0
        %3468 = vmatprep.subr.mxu0 0.0
        %3469 = vmatpush1.msra.mxu0 0.0
        %3470 = vmatprep.subr.mxu0 0.0
        %3471 = vmatpush1.msra.mxu0 0.0
        %3472 = vmatprep.subr.mxu0 0.0
        %3473 = vmatpush1.msra.mxu0 0.0
        %3474 = vmatprep.subr.mxu0 0.0
        %3475 = vmatpush1.msra.mxu0 0.0
        %3476 = vmatprep.subr.mxu0 0.0
        %3477 = vmatpush1.msra.mxu0 0.0
        %3478 = vmatprep.subr.mxu0 0.0
        %3479 = vmatpush1.msra.mxu0 0.0
        %3480 = vmatprep.subr.mxu0 0.0
        %3481 = vmatpush1.msra.mxu0 0.0
        %3482 = vmatprep.subr.mxu0 0.0
        %3483 = vmatpush1.msra.mxu0 0.0
        %3484 = vmatprep.subr.mxu0 0.0
        %3485 = vmatpush1.msra.mxu0 0.0
        %3486 = vmatprep.subr.mxu0 0.0
        %3487 = vmatpush1.msra.mxu0 0.0
        %3488 = vmatprep.subr.mxu0 0.0
        %3489 = vmatpush1.msra.mxu0 0.0
        %3490 = vmatprep.subr.mxu0 0.0
        %3491 = vmatpush1.msra.mxu0 0.0
        %3492 = vmatprep.subr.mxu0 0.0
        %3493 = vmatpush1.msra.mxu0 %v2310
        %3494 = vmatprep.subr.mxu0 0.0
        %3495 = vmatpush1.msra.mxu0 %v2313
        %3496 = vmatprep.subr.mxu0 0.0
        %3497 = vmatpush1.msra.mxu0 %v2166
        %3498 = vmatprep.subr.mxu0 0.0
        %3499 = vmatpush2.msra.mxu0 0.0
        %3500 = vmatprep.subr.mxu0 0.0
        %3501 = vmatpush2.msra.mxu0 0.0
        %3502 = vmatprep.subr.mxu0 0.0
        %3503 = vmatpush2.msra.mxu0 0.0
        %3504 = vmatprep.subr.mxu0 0.0
        %3505 = vmatpush2.msra.mxu0 0.0
        %3506 = vmatprep.subr.mxu0 0.0
        %3507 = vmatpush2.msra.mxu0 0.0
        %3508 = vmatprep.subr.mxu0 0.0
        %3509 = vmatpush2.msra.mxu0 0.0
        %3510 = vmatprep.subr.mxu0 0.0
        %3511 = vmatpush2.msra.mxu0 0.0
        %3512 = vmatprep.subr.mxu0 0.0
        %3513 = vmatpush2.msra.mxu0 0.0
        %3514 = vmatprep.subr.mxu0 0.0
        %3515 = vmatpush2.msra.mxu0 0.0
        %3516 = vmatprep.subr.mxu0 0.0
        %3517 = vmatpush2.msra.mxu0 0.0
        %3518 = vmatprep.subr.mxu0 0.0
        %3519 = vmatpush2.msra.mxu0 0.0
        %3520 = vmatprep.subr.mxu0 0.0
        %3521 = vmatpush2.msra.mxu0 0.0
        %3522 = vmatprep.subr.mxu0 0.0
        %3523 = vmatpush2.msra.mxu0 0.0
        %3524 = vmatprep.subr.mxu0 0.0
        %3525 = vmatpush2.msra.mxu0 0.0
        %3526 = vmatprep.subr.mxu0 0.0
        %3527 = vmatpush2.msra.mxu0 0.0
        %3528 = vmatprep.subr.mxu0 0.0
        %3529 = vmatpush2.msra.mxu0 0.0
        %3530 = vmatprep.mubr.f32.mxu0 0.0
        %3531 = vmatmul.mubr.f32.gmra.mxu0 %v2391
        %v3532 = vpop.f32.mrf.mxu0
        %v3533 = vadd.f32 %v2387, %v3532
        %v3534 = vpop.f32.mrf.mxu0
        %3535 = vdwg.mxu0
        %3536 = vmatprep.subr.mxu0 0.0
        %3537 = vmatpush1.msra.mxu0 0.0
        %3538 = vmatprep.subr.mxu0 0.0
        %3539 = vmatpush1.msra.mxu0 0.0
        %3540 = vmatprep.subr.mxu0 0.0
        %3541 = vmatpush1.msra.mxu0 0.0
        %3542 = vmatprep.subr.mxu0 0.0
        %3543 = vmatpush1.msra.mxu0 0.0
        %3544 = vmatprep.subr.mxu0 0.0
        %3545 = vmatpush1.msra.mxu0 0.0
        %3546 = vmatprep.subr.mxu0 0.0
        %3547 = vmatpush1.msra.mxu0 0.0
        %3548 = vmatprep.subr.mxu0 0.0
        %3549 = vmatpush1.msra.mxu0 0.0
        %3550 = vmatprep.subr.mxu0 0.0
        %3551 = vmatpush1.msra.mxu0 0.0
        %3552 = vmatprep.subr.mxu0 0.0
        %3553 = vmatpush1.msra.mxu0 0.0
        %3554 = vmatprep.subr.mxu0 0.0
        %3555 = vmatpush1.msra.mxu0 0.0
        %3556 = vmatprep.subr.mxu0 0.0
        %3557 = vmatpush1.msra.mxu0 0.0
        %3558 = vmatprep.subr.mxu0 0.0
        %3559 = vmatpush1.msra.mxu0 0.0
        %3560 = vmatprep.subr.mxu0 0.0
        %3561 = vmatpush1.msra.mxu0 0.0
        %3562 = vmatprep.subr.mxu0 0.0
        %3563 = vmatpush1.msra.mxu0 %v2317
        %3564 = vmatprep.subr.mxu0 0.0
        %3565 = vmatpush1.msra.mxu0 %v2320
        %3566 = vmatprep.subr.mxu0 0.0
        %3567 = vmatpush1.msra.mxu0 %v2175
        %3568 = vmatprep.subr.mxu0 0.0
        %3569 = vmatpush2.msra.mxu0 0.0
        %3570 = vmatprep.subr.mxu0 0.0
        %3571 = vmatpush2.msra.mxu0 0.0
        %3572 = vmatprep.subr.mxu0 0.0
        %3573 = vmatpush2.msra.mxu0 0.0
        %3574 = vmatprep.subr.mxu0 0.0
        %3575 = vmatpush2.msra.mxu0 0.0
        %3576 = vmatprep.subr.mxu0 0.0
        %3577 = vmatpush2.msra.mxu0 0.0
        %3578 = vmatprep.subr.mxu0 0.0
        %3579 = vmatpush2.msra.mxu0 0.0
        %3580 = vmatprep.subr.mxu0 0.0
        %3581 = vmatpush2.msra.mxu0 0.0
        %3582 = vmatprep.subr.mxu0 0.0
        %3583 = vmatpush2.msra.mxu0 0.0
        %3584 = vmatprep.subr.mxu0 0.0
        %3585 = vmatpush2.msra.mxu0 0.0
        %3586 = vmatprep.subr.mxu0 0.0
        %3587 = vmatpush2.msra.mxu0 0.0
        %3588 = vmatprep.subr.mxu0 0.0
        %3589 = vmatpush2.msra.mxu0 0.0
        %3590 = vmatprep.subr.mxu0 0.0
        %3591 = vmatpush2.msra.mxu0 0.0
        %3592 = vmatprep.subr.mxu0 0.0
        %3593 = vmatpush2.msra.mxu0 0.0
        %3594 = vmatprep.subr.mxu0 0.0
        %3595 = vmatpush2.msra.mxu0 0.0
        %3596 = vmatprep.subr.mxu0 0.0
        %3597 = vmatpush2.msra.mxu0 0.0
        %3598 = vmatprep.subr.mxu0 0.0
        %3599 = vmatpush2.msra.mxu0 0.0
        %3600 = vmatprep.mubr.f32.mxu0 0.0
        %3601 = vmatmul.mubr.f32.gmra.mxu0 %v2464
        %v3602 = vpop.f32.mrf.mxu0
        %v3603 = vadd.f32 %v2387, %v3602
        %v3604 = vpop.f32.mrf.mxu0
        %3605 = vdwg.mxu0
        %3607 = vrot.lane.b32.xlu0 %v3603, 32
        %v3608 = vpop.permute.xlu0 %3607
        %v3610 = vsel %vm2540, %v3533, %v3608
        %v3613 = vunpack.c.l.s4 1966171168
        %v3614 = vunpack.c.0.s8 %v3613
        %v3615 = vlaneseq
        %v3616 = vshrl.u32 %v3615, 7
        %v3617 = vsub.s32 %v3614, %v3616
        %v3618 = vrot.slane %v3610, %v3617
        %v3619 = vcombine.high %v3618, %v3618
        %v3621 = vunpack.c.l.s4 1966171168
        %v3622 = vunpack.c.0.s8 %v3621
        %v3623 = vlaneseq
        %v3624 = vshrl.u32 %v3623, 7
        %v3625 = vsub.s32 %v3622, %v3624
        %v3626 = vrot.slane %v3618, %v3625
        %v3628 = vunpack.c.l.s4 1966171168
        %v3629 = vunpack.c.0.s8 %v3628
        %v3630 = vlaneseq
        %v3631 = vshrl.u32 %v3630, 7
        %v3632 = vsub.s32 %v3629, %v3631
        %v3633 = vrot.slane %v3619, %v3632
        %v3634 = vcombine.high %v3626, %v3626
        %v3635 = vcombine.high %v3633, %v3633
        %3640 = vst.msk [vmem:[%s537 + $0x6] sm:$0x1] %vm2571, %v3626
        %3641 = vst.msk [vmem:[%s537 + $0x16] sm:$0x1] %vm2571, %v3633
        %3642 = vst.msk [vmem:[%s537 + $0x26] sm:$0x1] %vm2571, %v3634
        %3643 = vst.msk [vmem:[%s537 + $0x36] sm:$0x1] %vm2571, %v3635
        %3644 = vmatprep.subr.mxu0 0.0
        %3645 = vmatpush1.msra.mxu0 0.0
        %3646 = vmatprep.subr.mxu0 0.0
        %3647 = vmatpush1.msra.mxu0 0.0
        %3648 = vmatprep.subr.mxu0 0.0
        %3649 = vmatpush1.msra.mxu0 0.0
        %3650 = vmatprep.subr.mxu0 0.0
        %3651 = vmatpush1.msra.mxu0 0.0
        %3652 = vmatprep.subr.mxu0 0.0
        %3653 = vmatpush1.msra.mxu0 0.0
        %3654 = vmatprep.subr.mxu0 0.0
        %3655 = vmatpush1.msra.mxu0 0.0
        %3656 = vmatprep.subr.mxu0 0.0
        %3657 = vmatpush1.msra.mxu0 0.0
        %3658 = vmatprep.subr.mxu0 0.0
        %3659 = vmatpush1.msra.mxu0 0.0
        %3660 = vmatprep.subr.mxu0 0.0
        %3661 = vmatpush1.msra.mxu0 0.0
        %3662 = vmatprep.subr.mxu0 0.0
        %3663 = vmatpush1.msra.mxu0 0.0
        %3664 = vmatprep.subr.mxu0 0.0
        %3665 = vmatpush1.msra.mxu0 0.0
        %3666 = vmatprep.subr.mxu0 0.0
        %3667 = vmatpush1.msra.mxu0 0.0
        %3668 = vmatprep.subr.mxu0 0.0
        %3669 = vmatpush1.msra.mxu0 0.0
        %3670 = vmatprep.subr.mxu0 0.0
        %3671 = vmatpush1.msra.mxu0 %v2317
        %3672 = vmatprep.subr.mxu0 0.0
        %3673 = vmatpush1.msra.mxu0 %v2320
        %3674 = vmatprep.subr.mxu0 0.0
        %3675 = vmatpush1.msra.mxu0 %v2175
        %3676 = vmatprep.subr.mxu0 0.0
        %3677 = vmatpush2.msra.mxu0 0.0
        %3678 = vmatprep.subr.mxu0 0.0
        %3679 = vmatpush2.msra.mxu0 0.0
        %3680 = vmatprep.subr.mxu0 0.0
        %3681 = vmatpush2.msra.mxu0 0.0
        %3682 = vmatprep.subr.mxu0 0.0
        %3683 = vmatpush2.msra.mxu0 0.0
        %3684 = vmatprep.subr.mxu0 0.0
        %3685 = vmatpush2.msra.mxu0 0.0
        %3686 = vmatprep.subr.mxu0 0.0
        %3687 = vmatpush2.msra.mxu0 0.0
        %3688 = vmatprep.subr.mxu0 0.0
        %3689 = vmatpush2.msra.mxu0 0.0
        %3690 = vmatprep.subr.mxu0 0.0
        %3691 = vmatpush2.msra.mxu0 0.0
        %3692 = vmatprep.subr.mxu0 0.0
        %3693 = vmatpush2.msra.mxu0 0.0
        %3694 = vmatprep.subr.mxu0 0.0
        %3695 = vmatpush2.msra.mxu0 0.0
        %3696 = vmatprep.subr.mxu0 0.0
        %3697 = vmatpush2.msra.mxu0 0.0
        %3698 = vmatprep.subr.mxu0 0.0
        %3699 = vmatpush2.msra.mxu0 0.0
        %3700 = vmatprep.subr.mxu0 0.0
        %3701 = vmatpush2.msra.mxu0 0.0
        %3702 = vmatprep.subr.mxu0 0.0
        %3703 = vmatpush2.msra.mxu0 0.0
        %3704 = vmatprep.subr.mxu0 0.0
        %3705 = vmatpush2.msra.mxu0 0.0
        %3706 = vmatprep.subr.mxu0 0.0
        %3707 = vmatpush2.msra.mxu0 0.0
        %3708 = vmatprep.mubr.f32.mxu0 0.0
        %3709 = vmatmul.mubr.f32.gmra.mxu0 %v2391
        %v3710 = vpop.f32.mrf.mxu0
        %v3711 = vadd.f32 %v2387, %v3710
        %v3712 = vpop.f32.mrf.mxu0
        %3713 = vdwg.mxu0
        %3714 = vmatprep.subr.mxu0 0.0
        %3715 = vmatpush1.msra.mxu0 0.0
        %3716 = vmatprep.subr.mxu0 0.0
        %3717 = vmatpush1.msra.mxu0 0.0
        %3718 = vmatprep.subr.mxu0 0.0
        %3719 = vmatpush1.msra.mxu0 0.0
        %3720 = vmatprep.subr.mxu0 0.0
        %3721 = vmatpush1.msra.mxu0 0.0
        %3722 = vmatprep.subr.mxu0 0.0
        %3723 = vmatpush1.msra.mxu0 0.0
        %3724 = vmatprep.subr.mxu0 0.0
        %3725 = vmatpush1.msra.mxu0 0.0
        %3726 = vmatprep.subr.mxu0 0.0
        %3727 = vmatpush1.msra.mxu0 0.0
        %3728 = vmatprep.subr.mxu0 0.0
        %3729 = vmatpush1.msra.mxu0 0.0
        %3730 = vmatprep.subr.mxu0 0.0
        %3731 = vmatpush1.msra.mxu0 0.0
        %3732 = vmatprep.subr.mxu0 0.0
        %3733 = vmatpush1.msra.mxu0 0.0
        %3734 = vmatprep.subr.mxu0 0.0
        %3735 = vmatpush1.msra.mxu0 0.0
        %3736 = vmatprep.subr.mxu0 0.0
        %3737 = vmatpush1.msra.mxu0 0.0
        %3738 = vmatprep.subr.mxu0 0.0
        %3739 = vmatpush1.msra.mxu0 0.0
        %3740 = vmatprep.subr.mxu0 0.0
        %3741 = vmatpush1.msra.mxu0 %v2324
        %3742 = vmatprep.subr.mxu0 0.0
        %3743 = vmatpush1.msra.mxu0 %v2327
        %3744 = vmatprep.subr.mxu0 0.0
        %3745 = vmatpush1.msra.mxu0 %v2184
        %3746 = vmatprep.subr.mxu0 0.0
        %3747 = vmatpush2.msra.mxu0 0.0
        %3748 = vmatprep.subr.mxu0 0.0
        %3749 = vmatpush2.msra.mxu0 0.0
        %3750 = vmatprep.subr.mxu0 0.0
        %3751 = vmatpush2.msra.mxu0 0.0
        %3752 = vmatprep.subr.mxu0 0.0
        %3753 = vmatpush2.msra.mxu0 0.0
        %3754 = vmatprep.subr.mxu0 0.0
        %3755 = vmatpush2.msra.mxu0 0.0
        %3756 = vmatprep.subr.mxu0 0.0
        %3757 = vmatpush2.msra.mxu0 0.0
        %3758 = vmatprep.subr.mxu0 0.0
        %3759 = vmatpush2.msra.mxu0 0.0
        %3760 = vmatprep.subr.mxu0 0.0
        %3761 = vmatpush2.msra.mxu0 0.0
        %3762 = vmatprep.subr.mxu0 0.0
        %3763 = vmatpush2.msra.mxu0 0.0
        %3764 = vmatprep.subr.mxu0 0.0
        %3765 = vmatpush2.msra.mxu0 0.0
        %3766 = vmatprep.subr.mxu0 0.0
        %3767 = vmatpush2.msra.mxu0 0.0
        %3768 = vmatprep.subr.mxu0 0.0
        %3769 = vmatpush2.msra.mxu0 0.0
        %3770 = vmatprep.subr.mxu0 0.0
        %3771 = vmatpush2.msra.mxu0 0.0
        %3772 = vmatprep.subr.mxu0 0.0
        %3773 = vmatpush2.msra.mxu0 0.0
        %3774 = vmatprep.subr.mxu0 0.0
        %3775 = vmatpush2.msra.mxu0 0.0
        %3776 = vmatprep.subr.mxu0 0.0
        %3777 = vmatpush2.msra.mxu0 0.0
        %3778 = vmatprep.mubr.f32.mxu0 0.0
        %3779 = vmatmul.mubr.f32.gmra.mxu0 %v2464
        %v3780 = vpop.f32.mrf.mxu0
        %v3781 = vadd.f32 %v2387, %v3780
        %v3782 = vpop.f32.mrf.mxu0
        %3783 = vdwg.mxu0
        %3785 = vrot.lane.b32.xlu0 %v3781, 32
        %v3786 = vpop.permute.xlu0 %3785
        %v3788 = vsel %vm2540, %v3711, %v3786
        %v3791 = vunpack.c.l.s4 1966171168
        %v3792 = vunpack.c.0.s8 %v3791
        %v3793 = vlaneseq
        %v3794 = vshrl.u32 %v3793, 7
        %v3795 = vsub.s32 %v3792, %v3794
        %v3796 = vrot.slane %v3788, %v3795
        %v3797 = vcombine.high %v3796, %v3796
        %v3799 = vunpack.c.l.s4 1966171168
        %v3800 = vunpack.c.0.s8 %v3799
        %v3801 = vlaneseq
        %v3802 = vshrl.u32 %v3801, 7
        %v3803 = vsub.s32 %v3800, %v3802
        %v3804 = vrot.slane %v3796, %v3803
        %v3806 = vunpack.c.l.s4 1966171168
        %v3807 = vunpack.c.0.s8 %v3806
        %v3808 = vlaneseq
        %v3809 = vshrl.u32 %v3808, 7
        %v3810 = vsub.s32 %v3807, %v3809
        %v3811 = vrot.slane %v3797, %v3810
        %v3812 = vcombine.high %v3804, %v3804
        %v3813 = vcombine.high %v3811, %v3811
        %3818 = vst.msk [vmem:[%s537 + $0x7] sm:$0x1] %vm2571, %v3804
        %3819 = vst.msk [vmem:[%s537 + $0x17] sm:$0x1] %vm2571, %v3811
        %3820 = vst.msk [vmem:[%s537 + $0x27] sm:$0x1] %vm2571, %v3812
        %3821 = vst.msk [vmem:[%s537 + $0x37] sm:$0x1] %vm2571, %v3813
        %3822 = vmatprep.subr.mxu0 0.0
        %3823 = vmatpush1.msra.mxu0 0.0
        %3824 = vmatprep.subr.mxu0 0.0
        %3825 = vmatpush1.msra.mxu0 0.0
        %3826 = vmatprep.subr.mxu0 0.0
        %3827 = vmatpush1.msra.mxu0 0.0
        %3828 = vmatprep.subr.mxu0 0.0
        %3829 = vmatpush1.msra.mxu0 0.0
        %3830 = vmatprep.subr.mxu0 0.0
        %3831 = vmatpush1.msra.mxu0 0.0
        %3832 = vmatprep.subr.mxu0 0.0
        %3833 = vmatpush1.msra.mxu0 0.0
        %3834 = vmatprep.subr.mxu0 0.0
        %3835 = vmatpush1.msra.mxu0 0.0
        %3836 = vmatprep.subr.mxu0 0.0
        %3837 = vmatpush1.msra.mxu0 0.0
        %3838 = vmatprep.subr.mxu0 0.0
        %3839 = vmatpush1.msra.mxu0 0.0
        %3840 = vmatprep.subr.mxu0 0.0
        %3841 = vmatpush1.msra.mxu0 0.0
        %3842 = vmatprep.subr.mxu0 0.0
        %3843 = vmatpush1.msra.mxu0 0.0
        %3844 = vmatprep.subr.mxu0 0.0
        %3845 = vmatpush1.msra.mxu0 0.0
        %3846 = vmatprep.subr.mxu0 0.0
        %3847 = vmatpush1.msra.mxu0 0.0
        %3848 = vmatprep.subr.mxu0 0.0
        %3849 = vmatpush1.msra.mxu0 %v2324
        %3850 = vmatprep.subr.mxu0 0.0
        %3851 = vmatpush1.msra.mxu0 %v2327
        %3852 = vmatprep.subr.mxu0 0.0
        %3853 = vmatpush1.msra.mxu0 %v2184
        %3854 = vmatprep.subr.mxu0 0.0
        %3855 = vmatpush2.msra.mxu0 0.0
        %3856 = vmatprep.subr.mxu0 0.0
        %3857 = vmatpush2.msra.mxu0 0.0
        %3858 = vmatprep.subr.mxu0 0.0
        %3859 = vmatpush2.msra.mxu0 0.0
        %3860 = vmatprep.subr.mxu0 0.0
        %3861 = vmatpush2.msra.mxu0 0.0
        %3862 = vmatprep.subr.mxu0 0.0
        %3863 = vmatpush2.msra.mxu0 0.0
        %3864 = vmatprep.subr.mxu0 0.0
        %3865 = vmatpush2.msra.mxu0 0.0
        %3866 = vmatprep.subr.mxu0 0.0
        %3867 = vmatpush2.msra.mxu0 0.0
        %3868 = vmatprep.subr.mxu0 0.0
        %3869 = vmatpush2.msra.mxu0 0.0
        %3870 = vmatprep.subr.mxu0 0.0
        %3871 = vmatpush2.msra.mxu0 0.0
        %3872 = vmatprep.subr.mxu0 0.0
        %3873 = vmatpush2.msra.mxu0 0.0
        %3874 = vmatprep.subr.mxu0 0.0
        %3875 = vmatpush2.msra.mxu0 0.0
        %3876 = vmatprep.subr.mxu0 0.0
        %3877 = vmatpush2.msra.mxu0 0.0
        %3878 = vmatprep.subr.mxu0 0.0
        %3879 = vmatpush2.msra.mxu0 0.0
        %3880 = vmatprep.subr.mxu0 0.0
        %3881 = vmatpush2.msra.mxu0 0.0
        %3882 = vmatprep.subr.mxu0 0.0
        %3883 = vmatpush2.msra.mxu0 0.0
        %3884 = vmatprep.subr.mxu0 0.0
        %3885 = vmatpush2.msra.mxu0 0.0
        %3886 = vmatprep.mubr.f32.mxu0 0.0
        %3887 = vmatmul.mubr.f32.gmra.mxu0 %v2391
        %v3888 = vpop.f32.mrf.mxu0
        %v3889 = vadd.f32 %v2387, %v3888
        %v3890 = vpop.f32.mrf.mxu0
        %3891 = vdwg.mxu0
        %3892 = vmatprep.subr.mxu0 0.0
        %3893 = vmatpush1.msra.mxu0 0.0
        %3894 = vmatprep.subr.mxu0 0.0
        %3895 = vmatpush1.msra.mxu0 0.0
        %3896 = vmatprep.subr.mxu0 0.0
        %3897 = vmatpush1.msra.mxu0 0.0
        %3898 = vmatprep.subr.mxu0 0.0
        %3899 = vmatpush1.msra.mxu0 0.0
        %3900 = vmatprep.subr.mxu0 0.0
        %3901 = vmatpush1.msra.mxu0 0.0
        %3902 = vmatprep.subr.mxu0 0.0
        %3903 = vmatpush1.msra.mxu0 0.0
        %3904 = vmatprep.subr.mxu0 0.0
        %3905 = vmatpush1.msra.mxu0 0.0
        %3906 = vmatprep.subr.mxu0 0.0
        %3907 = vmatpush1.msra.mxu0 0.0
        %3908 = vmatprep.subr.mxu0 0.0
        %3909 = vmatpush1.msra.mxu0 0.0
        %3910 = vmatprep.subr.mxu0 0.0
        %3911 = vmatpush1.msra.mxu0 0.0
        %3912 = vmatprep.subr.mxu0 0.0
        %3913 = vmatpush1.msra.mxu0 0.0
        %3914 = vmatprep.subr.mxu0 0.0
        %3915 = vmatpush1.msra.mxu0 0.0
        %3916 = vmatprep.subr.mxu0 0.0
        %3917 = vmatpush1.msra.mxu0 0.0
        %3918 = vmatprep.subr.mxu0 0.0
        %3919 = vmatpush1.msra.mxu0 %v2331
        %3920 = vmatprep.subr.mxu0 0.0
        %3921 = vmatpush1.msra.mxu0 %v2334
        %3922 = vmatprep.subr.mxu0 0.0
        %3923 = vmatpush1.msra.mxu0 %v2193
        %3924 = vmatprep.subr.mxu0 0.0
        %3925 = vmatpush2.msra.mxu0 0.0
        %3926 = vmatprep.subr.mxu0 0.0
        %3927 = vmatpush2.msra.mxu0 0.0
        %3928 = vmatprep.subr.mxu0 0.0
        %3929 = vmatpush2.msra.mxu0 0.0
        %3930 = vmatprep.subr.mxu0 0.0
        %3931 = vmatpush2.msra.mxu0 0.0
        %3932 = vmatprep.subr.mxu0 0.0
        %3933 = vmatpush2.msra.mxu0 0.0
        %3934 = vmatprep.subr.mxu0 0.0
        %3935 = vmatpush2.msra.mxu0 0.0
        %3936 = vmatprep.subr.mxu0 0.0
        %3937 = vmatpush2.msra.mxu0 0.0
        %3938 = vmatprep.subr.mxu0 0.0
        %3939 = vmatpush2.msra.mxu0 0.0
        %3940 = vmatprep.subr.mxu0 0.0
        %3941 = vmatpush2.msra.mxu0 0.0
        %3942 = vmatprep.subr.mxu0 0.0
        %3943 = vmatpush2.msra.mxu0 0.0
        %3944 = vmatprep.subr.mxu0 0.0
        %3945 = vmatpush2.msra.mxu0 0.0
        %3946 = vmatprep.subr.mxu0 0.0
        %3947 = vmatpush2.msra.mxu0 0.0
        %3948 = vmatprep.subr.mxu0 0.0
        %3949 = vmatpush2.msra.mxu0 0.0
        %3950 = vmatprep.subr.mxu0 0.0
        %3951 = vmatpush2.msra.mxu0 0.0
        %3952 = vmatprep.subr.mxu0 0.0
        %3953 = vmatpush2.msra.mxu0 0.0
        %3954 = vmatprep.subr.mxu0 0.0
        %3955 = vmatpush2.msra.mxu0 0.0
        %3956 = vmatprep.mubr.f32.mxu0 0.0
        %3957 = vmatmul.mubr.f32.gmra.mxu0 %v2464
        %v3958 = vpop.f32.mrf.mxu0
        %v3959 = vadd.f32 %v2387, %v3958
        %v3960 = vpop.f32.mrf.mxu0
        %3961 = vdwg.mxu0
        %3963 = vrot.lane.b32.xlu0 %v3959, 32
        %v3964 = vpop.permute.xlu0 %3963
        %v3966 = vsel %vm2540, %v3889, %v3964
        %v3969 = vunpack.c.l.s4 1966171168
        %v3970 = vunpack.c.0.s8 %v3969
        %v3971 = vlaneseq
        %v3972 = vshrl.u32 %v3971, 7
        %v3973 = vsub.s32 %v3970, %v3972
        %v3974 = vrot.slane %v3966, %v3973
        %v3975 = vcombine.high %v3974, %v3974
        %v3977 = vunpack.c.l.s4 1966171168
        %v3978 = vunpack.c.0.s8 %v3977
        %v3979 = vlaneseq
        %v3980 = vshrl.u32 %v3979, 7
        %v3981 = vsub.s32 %v3978, %v3980
        %v3982 = vrot.slane %v3974, %v3981
        %v3984 = vunpack.c.l.s4 1966171168
        %v3985 = vunpack.c.0.s8 %v3984
        %v3986 = vlaneseq
        %v3987 = vshrl.u32 %v3986, 7
        %v3988 = vsub.s32 %v3985, %v3987
        %v3989 = vrot.slane %v3975, %v3988
        %v3990 = vcombine.high %v3982, %v3982
        %v3991 = vcombine.high %v3989, %v3989
        %3996 = vst.msk [vmem:[%s537 + $0x8] sm:$0x1] %vm2571, %v3982
        %3997 = vst.msk [vmem:[%s537 + $0x18] sm:$0x1] %vm2571, %v3989
        %3998 = vst.msk [vmem:[%s537 + $0x28] sm:$0x1] %vm2571, %v3990
        %3999 = vst.msk [vmem:[%s537 + $0x38] sm:$0x1] %vm2571, %v3991
        %4000 = vmatprep.subr.mxu0 0.0
        %4001 = vmatpush1.msra.mxu0 0.0
        %4002 = vmatprep.subr.mxu0 0.0
        %4003 = vmatpush1.msra.mxu0 0.0
        %4004 = vmatprep.subr.mxu0 0.0
        %4005 = vmatpush1.msra.mxu0 0.0
        %4006 = vmatprep.subr.mxu0 0.0
        %4007 = vmatpush1.msra.mxu0 0.0
        %4008 = vmatprep.subr.mxu0 0.0
        %4009 = vmatpush1.msra.mxu0 0.0
        %4010 = vmatprep.subr.mxu0 0.0
        %4011 = vmatpush1.msra.mxu0 0.0
        %4012 = vmatprep.subr.mxu0 0.0
        %4013 = vmatpush1.msra.mxu0 0.0
        %4014 = vmatprep.subr.mxu0 0.0
        %4015 = vmatpush1.msra.mxu0 0.0
        %4016 = vmatprep.subr.mxu0 0.0
        %4017 = vmatpush1.msra.mxu0 0.0
        %4018 = vmatprep.subr.mxu0 0.0
        %4019 = vmatpush1.msra.mxu0 0.0
        %4020 = vmatprep.subr.mxu0 0.0
        %4021 = vmatpush1.msra.mxu0 0.0
        %4022 = vmatprep.subr.mxu0 0.0
        %4023 = vmatpush1.msra.mxu0 0.0
        %4024 = vmatprep.subr.mxu0 0.0
        %4025 = vmatpush1.msra.mxu0 0.0
        %4026 = vmatprep.subr.mxu0 0.0
        %4027 = vmatpush1.msra.mxu0 %v2331
        %4028 = vmatprep.subr.mxu0 0.0
        %4029 = vmatpush1.msra.mxu0 %v2334
        %4030 = vmatprep.subr.mxu0 0.0
        %4031 = vmatpush1.msra.mxu0 %v2193
        %4032 = vmatprep.subr.mxu0 0.0
        %4033 = vmatpush2.msra.mxu0 0.0
        %4034 = vmatprep.subr.mxu0 0.0
        %4035 = vmatpush2.msra.mxu0 0.0
        %4036 = vmatprep.subr.mxu0 0.0
        %4037 = vmatpush2.msra.mxu0 0.0
        %4038 = vmatprep.subr.mxu0 0.0
        %4039 = vmatpush2.msra.mxu0 0.0
        %4040 = vmatprep.subr.mxu0 0.0
        %4041 = vmatpush2.msra.mxu0 0.0
        %4042 = vmatprep.subr.mxu0 0.0
        %4043 = vmatpush2.msra.mxu0 0.0
        %4044 = vmatprep.subr.mxu0 0.0
        %4045 = vmatpush2.msra.mxu0 0.0
        %4046 = vmatprep.subr.mxu0 0.0
        %4047 = vmatpush2.msra.mxu0 0.0
        %4048 = vmatprep.subr.mxu0 0.0
        %4049 = vmatpush2.msra.mxu0 0.0
        %4050 = vmatprep.subr.mxu0 0.0
        %4051 = vmatpush2.msra.mxu0 0.0
        %4052 = vmatprep.subr.mxu0 0.0
        %4053 = vmatpush2.msra.mxu0 0.0
        %4054 = vmatprep.subr.mxu0 0.0
        %4055 = vmatpush2.msra.mxu0 0.0
        %4056 = vmatprep.subr.mxu0 0.0
        %4057 = vmatpush2.msra.mxu0 0.0
        %4058 = vmatprep.subr.mxu0 0.0
        %4059 = vmatpush2.msra.mxu0 0.0
        %4060 = vmatprep.subr.mxu0 0.0
        %4061 = vmatpush2.msra.mxu0 0.0
        %4062 = vmatprep.subr.mxu0 0.0
        %4063 = vmatpush2.msra.mxu0 0.0
        %4064 = vmatprep.mubr.f32.mxu0 0.0
        %4065 = vmatmul.mubr.f32.gmra.mxu0 %v2391
        %v4066 = vpop.f32.mrf.mxu0
        %v4067 = vadd.f32 %v2387, %v4066
        %v4068 = vpop.f32.mrf.mxu0
        %4069 = vdwg.mxu0
        %4070 = vmatprep.subr.mxu0 0.0
        %4071 = vmatpush1.msra.mxu0 0.0
        %4072 = vmatprep.subr.mxu0 0.0
        %4073 = vmatpush1.msra.mxu0 0.0
        %4074 = vmatprep.subr.mxu0 0.0
        %4075 = vmatpush1.msra.mxu0 0.0
        %4076 = vmatprep.subr.mxu0 0.0
        %4077 = vmatpush1.msra.mxu0 0.0
        %4078 = vmatprep.subr.mxu0 0.0
        %4079 = vmatpush1.msra.mxu0 0.0
        %4080 = vmatprep.subr.mxu0 0.0
        %4081 = vmatpush1.msra.mxu0 0.0
        %4082 = vmatprep.subr.mxu0 0.0
        %4083 = vmatpush1.msra.mxu0 0.0
        %4084 = vmatprep.subr.mxu0 0.0
        %4085 = vmatpush1.msra.mxu0 0.0
        %4086 = vmatprep.subr.mxu0 0.0
        %4087 = vmatpush1.msra.mxu0 0.0
        %4088 = vmatprep.subr.mxu0 0.0
        %4089 = vmatpush1.msra.mxu0 0.0
        %4090 = vmatprep.subr.mxu0 0.0
        %4091 = vmatpush1.msra.mxu0 0.0
        %4092 = vmatprep.subr.mxu0 0.0
        %4093 = vmatpush1.msra.mxu0 0.0
        %4094 = vmatprep.subr.mxu0 0.0
        %4095 = vmatpush1.msra.mxu0 0.0
        %4096 = vmatprep.subr.mxu0 0.0
        %4097 = vmatpush1.msra.mxu0 %v2338
        %4098 = vmatprep.subr.mxu0 0.0
        %4099 = vmatpush1.msra.mxu0 %v2341
        %4100 = vmatprep.subr.mxu0 0.0
        %4101 = vmatpush1.msra.mxu0 %v2202
        %4102 = vmatprep.subr.mxu0 0.0
        %4103 = vmatpush2.msra.mxu0 0.0
        %4104 = vmatprep.subr.mxu0 0.0
        %4105 = vmatpush2.msra.mxu0 0.0
        %4106 = vmatprep.subr.mxu0 0.0
        %4107 = vmatpush2.msra.mxu0 0.0
        %4108 = vmatprep.subr.mxu0 0.0
        %4109 = vmatpush2.msra.mxu0 0.0
        %4110 = vmatprep.subr.mxu0 0.0
        %4111 = vmatpush2.msra.mxu0 0.0
        %4112 = vmatprep.subr.mxu0 0.0
        %4113 = vmatpush2.msra.mxu0 0.0
        %4114 = vmatprep.subr.mxu0 0.0
        %4115 = vmatpush2.msra.mxu0 0.0
        %4116 = vmatprep.subr.mxu0 0.0
        %4117 = vmatpush2.msra.mxu0 0.0
        %4118 = vmatprep.subr.mxu0 0.0
        %4119 = vmatpush2.msra.mxu0 0.0
        %4120 = vmatprep.subr.mxu0 0.0
        %4121 = vmatpush2.msra.mxu0 0.0
        %4122 = vmatprep.subr.mxu0 0.0
        %4123 = vmatpush2.msra.mxu0 0.0
        %4124 = vmatprep.subr.mxu0 0.0
        %4125 = vmatpush2.msra.mxu0 0.0
        %4126 = vmatprep.subr.mxu0 0.0
        %4127 = vmatpush2.msra.mxu0 0.0
        %4128 = vmatprep.subr.mxu0 0.0
        %4129 = vmatpush2.msra.mxu0 0.0
        %4130 = vmatprep.subr.mxu0 0.0
        %4131 = vmatpush2.msra.mxu0 0.0
        %4132 = vmatprep.subr.mxu0 0.0
        %4133 = vmatpush2.msra.mxu0 0.0
        %4134 = vmatprep.mubr.f32.mxu0 0.0
        %4135 = vmatmul.mubr.f32.gmra.mxu0 %v2464
        %v4136 = vpop.f32.mrf.mxu0
        %v4137 = vadd.f32 %v2387, %v4136
        %v4138 = vpop.f32.mrf.mxu0
        %4139 = vdwg.mxu0
        %4141 = vrot.lane.b32.xlu0 %v4137, 32
        %v4142 = vpop.permute.xlu0 %4141
        %v4144 = vsel %vm2540, %v4067, %v4142
        %v4147 = vunpack.c.l.s4 1966171168
        %v4148 = vunpack.c.0.s8 %v4147
        %v4149 = vlaneseq
        %v4150 = vshrl.u32 %v4149, 7
        %v4151 = vsub.s32 %v4148, %v4150
        %v4152 = vrot.slane %v4144, %v4151
        %v4153 = vcombine.high %v4152, %v4152
        %v4155 = vunpack.c.l.s4 1966171168
        %v4156 = vunpack.c.0.s8 %v4155
        %v4157 = vlaneseq
        %v4158 = vshrl.u32 %v4157, 7
        %v4159 = vsub.s32 %v4156, %v4158
        %v4160 = vrot.slane %v4152, %v4159
        %v4162 = vunpack.c.l.s4 1966171168
        %v4163 = vunpack.c.0.s8 %v4162
        %v4164 = vlaneseq
        %v4165 = vshrl.u32 %v4164, 7
        %v4166 = vsub.s32 %v4163, %v4165
        %v4167 = vrot.slane %v4153, %v4166
        %v4168 = vcombine.high %v4160, %v4160
        %v4169 = vcombine.high %v4167, %v4167
        %4174 = vst.msk [vmem:[%s537 + $0x9] sm:$0x1] %vm2571, %v4160
        %4175 = vst.msk [vmem:[%s537 + $0x19] sm:$0x1] %vm2571, %v4167
        %4176 = vst.msk [vmem:[%s537 + $0x29] sm:$0x1] %vm2571, %v4168
        %4177 = vst.msk [vmem:[%s537 + $0x39] sm:$0x1] %vm2571, %v4169
        %4178 = vmatprep.subr.mxu0 0.0
        %4179 = vmatpush1.msra.mxu0 0.0
        %4180 = vmatprep.subr.mxu0 0.0
        %4181 = vmatpush1.msra.mxu0 0.0
        %4182 = vmatprep.subr.mxu0 0.0
        %4183 = vmatpush1.msra.mxu0 0.0
        %4184 = vmatprep.subr.mxu0 0.0
        %4185 = vmatpush1.msra.mxu0 0.0
        %4186 = vmatprep.subr.mxu0 0.0
        %4187 = vmatpush1.msra.mxu0 0.0
        %4188 = vmatprep.subr.mxu0 0.0
        %4189 = vmatpush1.msra.mxu0 0.0
        %4190 = vmatprep.subr.mxu0 0.0
        %4191 = vmatpush1.msra.mxu0 0.0
        %4192 = vmatprep.subr.mxu0 0.0
        %4193 = vmatpush1.msra.mxu0 0.0
        %4194 = vmatprep.subr.mxu0 0.0
        %4195 = vmatpush1.msra.mxu0 0.0
        %4196 = vmatprep.subr.mxu0 0.0
        %4197 = vmatpush1.msra.mxu0 0.0
        %4198 = vmatprep.subr.mxu0 0.0
        %4199 = vmatpush1.msra.mxu0 0.0
        %4200 = vmatprep.subr.mxu0 0.0
        %4201 = vmatpush1.msra.mxu0 0.0
        %4202 = vmatprep.subr.mxu0 0.0
        %4203 = vmatpush1.msra.mxu0 0.0
        %4204 = vmatprep.subr.mxu0 0.0
        %4205 = vmatpush1.msra.mxu0 %v2338
        %4206 = vmatprep.subr.mxu0 0.0
        %4207 = vmatpush1.msra.mxu0 %v2341
        %4208 = vmatprep.subr.mxu0 0.0
        %4209 = vmatpush1.msra.mxu0 %v2202
        %4210 = vmatprep.subr.mxu0 0.0
        %4211 = vmatpush2.msra.mxu0 0.0
        %4212 = vmatprep.subr.mxu0 0.0
        %4213 = vmatpush2.msra.mxu0 0.0
        %4214 = vmatprep.subr.mxu0 0.0
        %4215 = vmatpush2.msra.mxu0 0.0
        %4216 = vmatprep.subr.mxu0 0.0
        %4217 = vmatpush2.msra.mxu0 0.0
        %4218 = vmatprep.subr.mxu0 0.0
        %4219 = vmatpush2.msra.mxu0 0.0
        %4220 = vmatprep.subr.mxu0 0.0
        %4221 = vmatpush2.msra.mxu0 0.0
        %4222 = vmatprep.subr.mxu0 0.0
        %4223 = vmatpush2.msra.mxu0 0.0
        %4224 = vmatprep.subr.mxu0 0.0
        %4225 = vmatpush2.msra.mxu0 0.0
        %4226 = vmatprep.subr.mxu0 0.0
        %4227 = vmatpush2.msra.mxu0 0.0
        %4228 = vmatprep.subr.mxu0 0.0
        %4229 = vmatpush2.msra.mxu0 0.0
        %4230 = vmatprep.subr.mxu0 0.0
        %4231 = vmatpush2.msra.mxu0 0.0
        %4232 = vmatprep.subr.mxu0 0.0
        %4233 = vmatpush2.msra.mxu0 0.0
        %4234 = vmatprep.subr.mxu0 0.0
        %4235 = vmatpush2.msra.mxu0 0.0
        %4236 = vmatprep.subr.mxu0 0.0
        %4237 = vmatpush2.msra.mxu0 0.0
        %4238 = vmatprep.subr.mxu0 0.0
        %4239 = vmatpush2.msra.mxu0 0.0
        %4240 = vmatprep.subr.mxu0 0.0
        %4241 = vmatpush2.msra.mxu0 0.0
        %4242 = vmatprep.mubr.f32.mxu0 0.0
        %4243 = vmatmul.mubr.f32.gmra.mxu0 %v2391
        %v4244 = vpop.f32.mrf.mxu0
        %v4245 = vadd.f32 %v2387, %v4244
        %v4246 = vpop.f32.mrf.mxu0
        %4247 = vdwg.mxu0
        %4248 = vmatprep.subr.mxu0 0.0
        %4249 = vmatpush1.msra.mxu0 0.0
        %4250 = vmatprep.subr.mxu0 0.0
        %4251 = vmatpush1.msra.mxu0 0.0
        %4252 = vmatprep.subr.mxu0 0.0
        %4253 = vmatpush1.msra.mxu0 0.0
        %4254 = vmatprep.subr.mxu0 0.0
        %4255 = vmatpush1.msra.mxu0 0.0
        %4256 = vmatprep.subr.mxu0 0.0
        %4257 = vmatpush1.msra.mxu0 0.0
        %4258 = vmatprep.subr.mxu0 0.0
        %4259 = vmatpush1.msra.mxu0 0.0
        %4260 = vmatprep.subr.mxu0 0.0
        %4261 = vmatpush1.msra.mxu0 0.0
        %4262 = vmatprep.subr.mxu0 0.0
        %4263 = vmatpush1.msra.mxu0 0.0
        %4264 = vmatprep.subr.mxu0 0.0
        %4265 = vmatpush1.msra.mxu0 0.0
        %4266 = vmatprep.subr.mxu0 0.0
        %4267 = vmatpush1.msra.mxu0 0.0
        %4268 = vmatprep.subr.mxu0 0.0
        %4269 = vmatpush1.msra.mxu0 0.0
        %4270 = vmatprep.subr.mxu0 0.0
        %4271 = vmatpush1.msra.mxu0 0.0
        %4272 = vmatprep.subr.mxu0 0.0
        %4273 = vmatpush1.msra.mxu0 0.0
        %4274 = vmatprep.subr.mxu0 0.0
        %4275 = vmatpush1.msra.mxu0 %v2345
        %4276 = vmatprep.subr.mxu0 0.0
        %4277 = vmatpush1.msra.mxu0 %v2348
        %4278 = vmatprep.subr.mxu0 0.0
        %4279 = vmatpush1.msra.mxu0 %v2211
        %4280 = vmatprep.subr.mxu0 0.0
        %4281 = vmatpush2.msra.mxu0 0.0
        %4282 = vmatprep.subr.mxu0 0.0
        %4283 = vmatpush2.msra.mxu0 0.0
        %4284 = vmatprep.subr.mxu0 0.0
        %4285 = vmatpush2.msra.mxu0 0.0
        %4286 = vmatprep.subr.mxu0 0.0
        %4287 = vmatpush2.msra.mxu0 0.0
        %4288 = vmatprep.subr.mxu0 0.0
        %4289 = vmatpush2.msra.mxu0 0.0
        %4290 = vmatprep.subr.mxu0 0.0
        %4291 = vmatpush2.msra.mxu0 0.0
        %4292 = vmatprep.subr.mxu0 0.0
        %4293 = vmatpush2.msra.mxu0 0.0
        %4294 = vmatprep.subr.mxu0 0.0
        %4295 = vmatpush2.msra.mxu0 0.0
        %4296 = vmatprep.subr.mxu0 0.0
        %4297 = vmatpush2.msra.mxu0 0.0
        %4298 = vmatprep.subr.mxu0 0.0
        %4299 = vmatpush2.msra.mxu0 0.0
        %4300 = vmatprep.subr.mxu0 0.0
        %4301 = vmatpush2.msra.mxu0 0.0
        %4302 = vmatprep.subr.mxu0 0.0
        %4303 = vmatpush2.msra.mxu0 0.0
        %4304 = vmatprep.subr.mxu0 0.0
        %4305 = vmatpush2.msra.mxu0 0.0
        %4306 = vmatprep.subr.mxu0 0.0
        %4307 = vmatpush2.msra.mxu0 0.0
        %4308 = vmatprep.subr.mxu0 0.0
        %4309 = vmatpush2.msra.mxu0 0.0
        %4310 = vmatprep.subr.mxu0 0.0
        %4311 = vmatpush2.msra.mxu0 0.0
        %4312 = vmatprep.mubr.f32.mxu0 0.0
        %4313 = vmatmul.mubr.f32.gmra.mxu0 %v2464
        %v4314 = vpop.f32.mrf.mxu0
        %v4315 = vadd.f32 %v2387, %v4314
        %v4316 = vpop.f32.mrf.mxu0
        %4317 = vdwg.mxu0
        %4319 = vrot.lane.b32.xlu0 %v4315, 32
        %v4320 = vpop.permute.xlu0 %4319
        %v4322 = vsel %vm2540, %v4245, %v4320
        %v4325 = vunpack.c.l.s4 1966171168
        %v4326 = vunpack.c.0.s8 %v4325
        %v4327 = vlaneseq
        %v4328 = vshrl.u32 %v4327, 7
        %v4329 = vsub.s32 %v4326, %v4328
        %v4330 = vrot.slane %v4322, %v4329
        %v4331 = vcombine.high %v4330, %v4330
        %v4333 = vunpack.c.l.s4 1966171168
        %v4334 = vunpack.c.0.s8 %v4333
        %v4335 = vlaneseq
        %v4336 = vshrl.u32 %v4335, 7
        %v4337 = vsub.s32 %v4334, %v4336
        %v4338 = vrot.slane %v4330, %v4337
        %v4340 = vunpack.c.l.s4 1966171168
        %v4341 = vunpack.c.0.s8 %v4340
        %v4342 = vlaneseq
        %v4343 = vshrl.u32 %v4342, 7
        %v4344 = vsub.s32 %v4341, %v4343
        %v4345 = vrot.slane %v4331, %v4344
        %v4346 = vcombine.high %v4338, %v4338
        %v4347 = vcombine.high %v4345, %v4345
        %4352 = vst.msk [vmem:[%s537 + $0xa] sm:$0x1] %vm2571, %v4338
        %4353 = vst.msk [vmem:[%s537 + $0x1a] sm:$0x1] %vm2571, %v4345
        %4354 = vst.msk [vmem:[%s537 + $0x2a] sm:$0x1] %vm2571, %v4346
        %4355 = vst.msk [vmem:[%s537 + $0x3a] sm:$0x1] %vm2571, %v4347
        %4356 = vmatprep.subr.mxu0 0.0
        %4357 = vmatpush1.msra.mxu0 0.0
        %4358 = vmatprep.subr.mxu0 0.0
        %4359 = vmatpush1.msra.mxu0 0.0
        %4360 = vmatprep.subr.mxu0 0.0
        %4361 = vmatpush1.msra.mxu0 0.0
        %4362 = vmatprep.subr.mxu0 0.0
        %4363 = vmatpush1.msra.mxu0 0.0
        %4364 = vmatprep.subr.mxu0 0.0
        %4365 = vmatpush1.msra.mxu0 0.0
        %4366 = vmatprep.subr.mxu0 0.0
        %4367 = vmatpush1.msra.mxu0 0.0
        %4368 = vmatprep.subr.mxu0 0.0
        %4369 = vmatpush1.msra.mxu0 0.0
        %4370 = vmatprep.subr.mxu0 0.0
        %4371 = vmatpush1.msra.mxu0 0.0
        %4372 = vmatprep.subr.mxu0 0.0
        %4373 = vmatpush1.msra.mxu0 0.0
        %4374 = vmatprep.subr.mxu0 0.0
        %4375 = vmatpush1.msra.mxu0 0.0
        %4376 = vmatprep.subr.mxu0 0.0
        %4377 = vmatpush1.msra.mxu0 0.0
        %4378 = vmatprep.subr.mxu0 0.0
        %4379 = vmatpush1.msra.mxu0 0.0
        %4380 = vmatprep.subr.mxu0 0.0
        %4381 = vmatpush1.msra.mxu0 0.0
        %4382 = vmatprep.subr.mxu0 0.0
        %4383 = vmatpush1.msra.mxu0 %v2345
        %4384 = vmatprep.subr.mxu0 0.0
        %4385 = vmatpush1.msra.mxu0 %v2348
        %4386 = vmatprep.subr.mxu0 0.0
        %4387 = vmatpush1.msra.mxu0 %v2211
        %4388 = vmatprep.subr.mxu0 0.0
        %4389 = vmatpush2.msra.mxu0 0.0
        %4390 = vmatprep.subr.mxu0 0.0
        %4391 = vmatpush2.msra.mxu0 0.0
        %4392 = vmatprep.subr.mxu0 0.0
        %4393 = vmatpush2.msra.mxu0 0.0
        %4394 = vmatprep.subr.mxu0 0.0
        %4395 = vmatpush2.msra.mxu0 0.0
        %4396 = vmatprep.subr.mxu0 0.0
        %4397 = vmatpush2.msra.mxu0 0.0
        %4398 = vmatprep.subr.mxu0 0.0
        %4399 = vmatpush2.msra.mxu0 0.0
        %4400 = vmatprep.subr.mxu0 0.0
        %4401 = vmatpush2.msra.mxu0 0.0
        %4402 = vmatprep.subr.mxu0 0.0
        %4403 = vmatpush2.msra.mxu0 0.0
        %4404 = vmatprep.subr.mxu0 0.0
        %4405 = vmatpush2.msra.mxu0 0.0
        %4406 = vmatprep.subr.mxu0 0.0
        %4407 = vmatpush2.msra.mxu0 0.0
        %4408 = vmatprep.subr.mxu0 0.0
        %4409 = vmatpush2.msra.mxu0 0.0
        %4410 = vmatprep.subr.mxu0 0.0
        %4411 = vmatpush2.msra.mxu0 0.0
        %4412 = vmatprep.subr.mxu0 0.0
        %4413 = vmatpush2.msra.mxu0 0.0
        %4414 = vmatprep.subr.mxu0 0.0
        %4415 = vmatpush2.msra.mxu0 0.0
        %4416 = vmatprep.subr.mxu0 0.0
        %4417 = vmatpush2.msra.mxu0 0.0
        %4418 = vmatprep.subr.mxu0 0.0
        %4419 = vmatpush2.msra.mxu0 0.0
        %4420 = vmatprep.mubr.f32.mxu0 0.0
        %4421 = vmatmul.mubr.f32.gmra.mxu0 %v2391
        %v4422 = vpop.f32.mrf.mxu0
        %v4423 = vadd.f32 %v2387, %v4422
        %v4424 = vpop.f32.mrf.mxu0
        %4425 = vdwg.mxu0
        %4426 = vmatprep.subr.mxu0 0.0
        %4427 = vmatpush1.msra.mxu0 0.0
        %4428 = vmatprep.subr.mxu0 0.0
        %4429 = vmatpush1.msra.mxu0 0.0
        %4430 = vmatprep.subr.mxu0 0.0
        %4431 = vmatpush1.msra.mxu0 0.0
        %4432 = vmatprep.subr.mxu0 0.0
        %4433 = vmatpush1.msra.mxu0 0.0
        %4434 = vmatprep.subr.mxu0 0.0
        %4435 = vmatpush1.msra.mxu0 0.0
        %4436 = vmatprep.subr.mxu0 0.0
        %4437 = vmatpush1.msra.mxu0 0.0
        %4438 = vmatprep.subr.mxu0 0.0
        %4439 = vmatpush1.msra.mxu0 0.0
        %4440 = vmatprep.subr.mxu0 0.0
        %4441 = vmatpush1.msra.mxu0 0.0
        %4442 = vmatprep.subr.mxu0 0.0
        %4443 = vmatpush1.msra.mxu0 0.0
        %4444 = vmatprep.subr.mxu0 0.0
        %4445 = vmatpush1.msra.mxu0 0.0
        %4446 = vmatprep.subr.mxu0 0.0
        %4447 = vmatpush1.msra.mxu0 0.0
        %4448 = vmatprep.subr.mxu0 0.0
        %4449 = vmatpush1.msra.mxu0 0.0
        %4450 = vmatprep.subr.mxu0 0.0
        %4451 = vmatpush1.msra.mxu0 0.0
        %4452 = vmatprep.subr.mxu0 0.0
        %4453 = vmatpush1.msra.mxu0 %v2352
        %4454 = vmatprep.subr.mxu0 0.0
        %4455 = vmatpush1.msra.mxu0 %v2355
        %4456 = vmatprep.subr.mxu0 0.0
        %4457 = vmatpush1.msra.mxu0 %v2220
        %4458 = vmatprep.subr.mxu0 0.0
        %4459 = vmatpush2.msra.mxu0 0.0
        %4460 = vmatprep.subr.mxu0 0.0
        %4461 = vmatpush2.msra.mxu0 0.0
        %4462 = vmatprep.subr.mxu0 0.0
        %4463 = vmatpush2.msra.mxu0 0.0
        %4464 = vmatprep.subr.mxu0 0.0
        %4465 = vmatpush2.msra.mxu0 0.0
        %4466 = vmatprep.subr.mxu0 0.0
        %4467 = vmatpush2.msra.mxu0 0.0
        %4468 = vmatprep.subr.mxu0 0.0
        %4469 = vmatpush2.msra.mxu0 0.0
        %4470 = vmatprep.subr.mxu0 0.0
        %4471 = vmatpush2.msra.mxu0 0.0
        %4472 = vmatprep.subr.mxu0 0.0
        %4473 = vmatpush2.msra.mxu0 0.0
        %4474 = vmatprep.subr.mxu0 0.0
        %4475 = vmatpush2.msra.mxu0 0.0
        %4476 = vmatprep.subr.mxu0 0.0
        %4477 = vmatpush2.msra.mxu0 0.0
        %4478 = vmatprep.subr.mxu0 0.0
        %4479 = vmatpush2.msra.mxu0 0.0
        %4480 = vmatprep.subr.mxu0 0.0
        %4481 = vmatpush2.msra.mxu0 0.0
        %4482 = vmatprep.subr.mxu0 0.0
        %4483 = vmatpush2.msra.mxu0 0.0
        %4484 = vmatprep.subr.mxu0 0.0
        %4485 = vmatpush2.msra.mxu0 0.0
        %4486 = vmatprep.subr.mxu0 0.0
        %4487 = vmatpush2.msra.mxu0 0.0
        %4488 = vmatprep.subr.mxu0 0.0
        %4489 = vmatpush2.msra.mxu0 0.0
        %4490 = vmatprep.mubr.f32.mxu0 0.0
        %4491 = vmatmul.mubr.f32.gmra.mxu0 %v2464
        %v4492 = vpop.f32.mrf.mxu0
        %v4493 = vadd.f32 %v2387, %v4492
        %v4494 = vpop.f32.mrf.mxu0
        %4495 = vdwg.mxu0
        %4497 = vrot.lane.b32.xlu0 %v4493, 32
        %v4498 = vpop.permute.xlu0 %4497
        %v4500 = vsel %vm2540, %v4423, %v4498
        %v4503 = vunpack.c.l.s4 1966171168
        %v4504 = vunpack.c.0.s8 %v4503
        %v4505 = vlaneseq
        %v4506 = vshrl.u32 %v4505, 7
        %v4507 = vsub.s32 %v4504, %v4506
        %v4508 = vrot.slane %v4500, %v4507
        %v4509 = vcombine.high %v4508, %v4508
        %v4511 = vunpack.c.l.s4 1966171168
        %v4512 = vunpack.c.0.s8 %v4511
        %v4513 = vlaneseq
        %v4514 = vshrl.u32 %v4513, 7
        %v4515 = vsub.s32 %v4512, %v4514
        %v4516 = vrot.slane %v4508, %v4515
        %v4518 = vunpack.c.l.s4 1966171168
        %v4519 = vunpack.c.0.s8 %v4518
        %v4520 = vlaneseq
        %v4521 = vshrl.u32 %v4520, 7
        %v4522 = vsub.s32 %v4519, %v4521
        %v4523 = vrot.slane %v4509, %v4522
        %v4524 = vcombine.high %v4516, %v4516
        %v4525 = vcombine.high %v4523, %v4523
        %4530 = vst.msk [vmem:[%s537 + $0xb] sm:$0x1] %vm2571, %v4516
        %4531 = vst.msk [vmem:[%s537 + $0x1b] sm:$0x1] %vm2571, %v4523
        %4532 = vst.msk [vmem:[%s537 + $0x2b] sm:$0x1] %vm2571, %v4524
        %4533 = vst.msk [vmem:[%s537 + $0x3b] sm:$0x1] %vm2571, %v4525
        %4534 = vmatprep.subr.mxu0 0.0
        %4535 = vmatpush1.msra.mxu0 0.0
        %4536 = vmatprep.subr.mxu0 0.0
        %4537 = vmatpush1.msra.mxu0 0.0
        %4538 = vmatprep.subr.mxu0 0.0
        %4539 = vmatpush1.msra.mxu0 0.0
        %4540 = vmatprep.subr.mxu0 0.0
        %4541 = vmatpush1.msra.mxu0 0.0
        %4542 = vmatprep.subr.mxu0 0.0
        %4543 = vmatpush1.msra.mxu0 0.0
        %4544 = vmatprep.subr.mxu0 0.0
        %4545 = vmatpush1.msra.mxu0 0.0
        %4546 = vmatprep.subr.mxu0 0.0
        %4547 = vmatpush1.msra.mxu0 0.0
        %4548 = vmatprep.subr.mxu0 0.0
        %4549 = vmatpush1.msra.mxu0 0.0
        %4550 = vmatprep.subr.mxu0 0.0
        %4551 = vmatpush1.msra.mxu0 0.0
        %4552 = vmatprep.subr.mxu0 0.0
        %4553 = vmatpush1.msra.mxu0 0.0
        %4554 = vmatprep.subr.mxu0 0.0
        %4555 = vmatpush1.msra.mxu0 0.0
        %4556 = vmatprep.subr.mxu0 0.0
        %4557 = vmatpush1.msra.mxu0 0.0
        %4558 = vmatprep.subr.mxu0 0.0
        %4559 = vmatpush1.msra.mxu0 0.0
        %4560 = vmatprep.subr.mxu0 0.0
        %4561 = vmatpush1.msra.mxu0 %v2352
        %4562 = vmatprep.subr.mxu0 0.0
        %4563 = vmatpush1.msra.mxu0 %v2355
        %4564 = vmatprep.subr.mxu0 0.0
        %4565 = vmatpush1.msra.mxu0 %v2220
        %4566 = vmatprep.subr.mxu0 0.0
        %4567 = vmatpush2.msra.mxu0 0.0
        %4568 = vmatprep.subr.mxu0 0.0
        %4569 = vmatpush2.msra.mxu0 0.0
        %4570 = vmatprep.subr.mxu0 0.0
        %4571 = vmatpush2.msra.mxu0 0.0
        %4572 = vmatprep.subr.mxu0 0.0
        %4573 = vmatpush2.msra.mxu0 0.0
        %4574 = vmatprep.subr.mxu0 0.0
        %4575 = vmatpush2.msra.mxu0 0.0
        %4576 = vmatprep.subr.mxu0 0.0
        %4577 = vmatpush2.msra.mxu0 0.0
        %4578 = vmatprep.subr.mxu0 0.0
        %4579 = vmatpush2.msra.mxu0 0.0
        %4580 = vmatprep.subr.mxu0 0.0
        %4581 = vmatpush2.msra.mxu0 0.0
        %4582 = vmatprep.subr.mxu0 0.0
        %4583 = vmatpush2.msra.mxu0 0.0
        %4584 = vmatprep.subr.mxu0 0.0
        %4585 = vmatpush2.msra.mxu0 0.0
        %4586 = vmatprep.subr.mxu0 0.0
        %4587 = vmatpush2.msra.mxu0 0.0
        %4588 = vmatprep.subr.mxu0 0.0
        %4589 = vmatpush2.msra.mxu0 0.0
        %4590 = vmatprep.subr.mxu0 0.0
        %4591 = vmatpush2.msra.mxu0 0.0
        %4592 = vmatprep.subr.mxu0 0.0
        %4593 = vmatpush2.msra.mxu0 0.0
        %4594 = vmatprep.subr.mxu0 0.0
        %4595 = vmatpush2.msra.mxu0 0.0
        %4596 = vmatprep.subr.mxu0 0.0
        %4597 = vmatpush2.msra.mxu0 0.0
        %4598 = vmatprep.mubr.f32.mxu0 0.0
        %4599 = vmatmul.mubr.f32.gmra.mxu0 %v2391
        %v4600 = vpop.f32.mrf.mxu0
        %v4601 = vadd.f32 %v2387, %v4600
        %v4602 = vpop.f32.mrf.mxu0
        %4603 = vdwg.mxu0
        %4604 = vmatprep.subr.mxu0 0.0
        %4605 = vmatpush1.msra.mxu0 0.0
        %4606 = vmatprep.subr.mxu0 0.0
        %4607 = vmatpush1.msra.mxu0 0.0
        %4608 = vmatprep.subr.mxu0 0.0
        %4609 = vmatpush1.msra.mxu0 0.0
        %4610 = vmatprep.subr.mxu0 0.0
        %4611 = vmatpush1.msra.mxu0 0.0
        %4612 = vmatprep.subr.mxu0 0.0
        %4613 = vmatpush1.msra.mxu0 0.0
        %4614 = vmatprep.subr.mxu0 0.0
        %4615 = vmatpush1.msra.mxu0 0.0
        %4616 = vmatprep.subr.mxu0 0.0
        %4617 = vmatpush1.msra.mxu0 0.0
        %4618 = vmatprep.subr.mxu0 0.0
        %4619 = vmatpush1.msra.mxu0 0.0
        %4620 = vmatprep.subr.mxu0 0.0
        %4621 = vmatpush1.msra.mxu0 0.0
        %4622 = vmatprep.subr.mxu0 0.0
        %4623 = vmatpush1.msra.mxu0 0.0
        %4624 = vmatprep.subr.mxu0 0.0
        %4625 = vmatpush1.msra.mxu0 0.0
        %4626 = vmatprep.subr.mxu0 0.0
        %4627 = vmatpush1.msra.mxu0 0.0
        %4628 = vmatprep.subr.mxu0 0.0
        %4629 = vmatpush1.msra.mxu0 0.0
        %4630 = vmatprep.subr.mxu0 0.0
        %4631 = vmatpush1.msra.mxu0 %v2359
        %4632 = vmatprep.subr.mxu0 0.0
        %4633 = vmatpush1.msra.mxu0 %v2362
        %4634 = vmatprep.subr.mxu0 0.0
        %4635 = vmatpush1.msra.mxu0 %v2229
        %4636 = vmatprep.subr.mxu0 0.0
        %4637 = vmatpush2.msra.mxu0 0.0
        %4638 = vmatprep.subr.mxu0 0.0
        %4639 = vmatpush2.msra.mxu0 0.0
        %4640 = vmatprep.subr.mxu0 0.0
        %4641 = vmatpush2.msra.mxu0 0.0
        %4642 = vmatprep.subr.mxu0 0.0
        %4643 = vmatpush2.msra.mxu0 0.0
        %4644 = vmatprep.subr.mxu0 0.0
        %4645 = vmatpush2.msra.mxu0 0.0
        %4646 = vmatprep.subr.mxu0 0.0
        %4647 = vmatpush2.msra.mxu0 0.0
        %4648 = vmatprep.subr.mxu0 0.0
        %4649 = vmatpush2.msra.mxu0 0.0
        %4650 = vmatprep.subr.mxu0 0.0
        %4651 = vmatpush2.msra.mxu0 0.0
        %4652 = vmatprep.subr.mxu0 0.0
        %4653 = vmatpush2.msra.mxu0 0.0
        %4654 = vmatprep.subr.mxu0 0.0
        %4655 = vmatpush2.msra.mxu0 0.0
        %4656 = vmatprep.subr.mxu0 0.0
        %4657 = vmatpush2.msra.mxu0 0.0
        %4658 = vmatprep.subr.mxu0 0.0
        %4659 = vmatpush2.msra.mxu0 0.0
        %4660 = vmatprep.subr.mxu0 0.0
        %4661 = vmatpush2.msra.mxu0 0.0
        %4662 = vmatprep.subr.mxu0 0.0
        %4663 = vmatpush2.msra.mxu0 0.0
        %4664 = vmatprep.subr.mxu0 0.0
        %4665 = vmatpush2.msra.mxu0 0.0
        %4666 = vmatprep.subr.mxu0 0.0
        %4667 = vmatpush2.msra.mxu0 0.0
        %4668 = vmatprep.mubr.f32.mxu0 0.0
        %4669 = vmatmul.mubr.f32.gmra.mxu0 %v2464
        %v4670 = vpop.f32.mrf.mxu0
        %v4671 = vadd.f32 %v2387, %v4670
        %v4672 = vpop.f32.mrf.mxu0
        %4673 = vdwg.mxu0
        %4675 = vrot.lane.b32.xlu0 %v4671, 32
        %v4676 = vpop.permute.xlu0 %4675
        %v4678 = vsel %vm2540, %v4601, %v4676
        %v4681 = vunpack.c.l.s4 1966171168
        %v4682 = vunpack.c.0.s8 %v4681
        %v4683 = vlaneseq
        %v4684 = vshrl.u32 %v4683, 7
        %v4685 = vsub.s32 %v4682, %v4684
        %v4686 = vrot.slane %v4678, %v4685
        %v4687 = vcombine.high %v4686, %v4686
        %v4689 = vunpack.c.l.s4 1966171168
        %v4690 = vunpack.c.0.s8 %v4689
        %v4691 = vlaneseq
        %v4692 = vshrl.u32 %v4691, 7
        %v4693 = vsub.s32 %v4690, %v4692
        %v4694 = vrot.slane %v4686, %v4693
        %v4696 = vunpack.c.l.s4 1966171168
        %v4697 = vunpack.c.0.s8 %v4696
        %v4698 = vlaneseq
        %v4699 = vshrl.u32 %v4698, 7
        %v4700 = vsub.s32 %v4697, %v4699
        %v4701 = vrot.slane %v4687, %v4700
        %v4702 = vcombine.high %v4694, %v4694
        %v4703 = vcombine.high %v4701, %v4701
        %4708 = vst.msk [vmem:[%s537 + $0xc] sm:$0x1] %vm2571, %v4694
        %4709 = vst.msk [vmem:[%s537 + $0x1c] sm:$0x1] %vm2571, %v4701
        %4710 = vst.msk [vmem:[%s537 + $0x2c] sm:$0x1] %vm2571, %v4702
        %4711 = vst.msk [vmem:[%s537 + $0x3c] sm:$0x1] %vm2571, %v4703
        %4712 = vmatprep.subr.mxu0 0.0
        %4713 = vmatpush1.msra.mxu0 0.0
        %4714 = vmatprep.subr.mxu0 0.0
        %4715 = vmatpush1.msra.mxu0 0.0
        %4716 = vmatprep.subr.mxu0 0.0
        %4717 = vmatpush1.msra.mxu0 0.0
        %4718 = vmatprep.subr.mxu0 0.0
        %4719 = vmatpush1.msra.mxu0 0.0
        %4720 = vmatprep.subr.mxu0 0.0
        %4721 = vmatpush1.msra.mxu0 0.0
        %4722 = vmatprep.subr.mxu0 0.0
        %4723 = vmatpush1.msra.mxu0 0.0
        %4724 = vmatprep.subr.mxu0 0.0
        %4725 = vmatpush1.msra.mxu0 0.0
        %4726 = vmatprep.subr.mxu0 0.0
        %4727 = vmatpush1.msra.mxu0 0.0
        %4728 = vmatprep.subr.mxu0 0.0
        %4729 = vmatpush1.msra.mxu0 0.0
        %4730 = vmatprep.subr.mxu0 0.0
        %4731 = vmatpush1.msra.mxu0 0.0
        %4732 = vmatprep.subr.mxu0 0.0
        %4733 = vmatpush1.msra.mxu0 0.0
        %4734 = vmatprep.subr.mxu0 0.0
        %4735 = vmatpush1.msra.mxu0 0.0
        %4736 = vmatprep.subr.mxu0 0.0
        %4737 = vmatpush1.msra.mxu0 0.0
        %4738 = vmatprep.subr.mxu0 0.0
        %4739 = vmatpush1.msra.mxu0 %v2359
        %4740 = vmatprep.subr.mxu0 0.0
        %4741 = vmatpush1.msra.mxu0 %v2362
        %4742 = vmatprep.subr.mxu0 0.0
        %4743 = vmatpush1.msra.mxu0 %v2229
        %4744 = vmatprep.subr.mxu0 0.0
        %4745 = vmatpush2.msra.mxu0 0.0
        %4746 = vmatprep.subr.mxu0 0.0
        %4747 = vmatpush2.msra.mxu0 0.0
        %4748 = vmatprep.subr.mxu0 0.0
        %4749 = vmatpush2.msra.mxu0 0.0
        %4750 = vmatprep.subr.mxu0 0.0
        %4751 = vmatpush2.msra.mxu0 0.0
        %4752 = vmatprep.subr.mxu0 0.0
        %4753 = vmatpush2.msra.mxu0 0.0
        %4754 = vmatprep.subr.mxu0 0.0
        %4755 = vmatpush2.msra.mxu0 0.0
        %4756 = vmatprep.subr.mxu0 0.0
        %4757 = vmatpush2.msra.mxu0 0.0
        %4758 = vmatprep.subr.mxu0 0.0
        %4759 = vmatpush2.msra.mxu0 0.0
        %4760 = vmatprep.subr.mxu0 0.0
        %4761 = vmatpush2.msra.mxu0 0.0
        %4762 = vmatprep.subr.mxu0 0.0
        %4763 = vmatpush2.msra.mxu0 0.0
        %4764 = vmatprep.subr.mxu0 0.0
        %4765 = vmatpush2.msra.mxu0 0.0
        %4766 = vmatprep.subr.mxu0 0.0
        %4767 = vmatpush2.msra.mxu0 0.0
        %4768 = vmatprep.subr.mxu0 0.0
        %4769 = vmatpush2.msra.mxu0 0.0
        %4770 = vmatprep.subr.mxu0 0.0
        %4771 = vmatpush2.msra.mxu0 0.0
        %4772 = vmatprep.subr.mxu0 0.0
        %4773 = vmatpush2.msra.mxu0 0.0
        %4774 = vmatprep.subr.mxu0 0.0
        %4775 = vmatpush2.msra.mxu0 0.0
        %4776 = vmatprep.mubr.f32.mxu0 0.0
        %4777 = vmatmul.mubr.f32.gmra.mxu0 %v2391
        %v4778 = vpop.f32.mrf.mxu0
        %v4779 = vadd.f32 %v2387, %v4778
        %v4780 = vpop.f32.mrf.mxu0
        %4781 = vdwg.mxu0
        %4782 = vmatprep.subr.mxu0 0.0
        %4783 = vmatpush1.msra.mxu0 0.0
        %4784 = vmatprep.subr.mxu0 0.0
        %4785 = vmatpush1.msra.mxu0 0.0
        %4786 = vmatprep.subr.mxu0 0.0
        %4787 = vmatpush1.msra.mxu0 0.0
        %4788 = vmatprep.subr.mxu0 0.0
        %4789 = vmatpush1.msra.mxu0 0.0
        %4790 = vmatprep.subr.mxu0 0.0
        %4791 = vmatpush1.msra.mxu0 0.0
        %4792 = vmatprep.subr.mxu0 0.0
        %4793 = vmatpush1.msra.mxu0 0.0
        %4794 = vmatprep.subr.mxu0 0.0
        %4795 = vmatpush1.msra.mxu0 0.0
        %4796 = vmatprep.subr.mxu0 0.0
        %4797 = vmatpush1.msra.mxu0 0.0
        %4798 = vmatprep.subr.mxu0 0.0
        %4799 = vmatpush1.msra.mxu0 0.0
        %4800 = vmatprep.subr.mxu0 0.0
        %4801 = vmatpush1.msra.mxu0 0.0
        %4802 = vmatprep.subr.mxu0 0.0
        %4803 = vmatpush1.msra.mxu0 0.0
        %4804 = vmatprep.subr.mxu0 0.0
        %4805 = vmatpush1.msra.mxu0 0.0
        %4806 = vmatprep.subr.mxu0 0.0
        %4807 = vmatpush1.msra.mxu0 0.0
        %4808 = vmatprep.subr.mxu0 0.0
        %4809 = vmatpush1.msra.mxu0 %v2366
        %4810 = vmatprep.subr.mxu0 0.0
        %4811 = vmatpush1.msra.mxu0 %v2369
        %4812 = vmatprep.subr.mxu0 0.0
        %4813 = vmatpush1.msra.mxu0 %v2238
        %4814 = vmatprep.subr.mxu0 0.0
        %4815 = vmatpush2.msra.mxu0 0.0
        %4816 = vmatprep.subr.mxu0 0.0
        %4817 = vmatpush2.msra.mxu0 0.0
        %4818 = vmatprep.subr.mxu0 0.0
        %4819 = vmatpush2.msra.mxu0 0.0
        %4820 = vmatprep.subr.mxu0 0.0
        %4821 = vmatpush2.msra.mxu0 0.0
        %4822 = vmatprep.subr.mxu0 0.0
        %4823 = vmatpush2.msra.mxu0 0.0
        %4824 = vmatprep.subr.mxu0 0.0
        %4825 = vmatpush2.msra.mxu0 0.0
        %4826 = vmatprep.subr.mxu0 0.0
        %4827 = vmatpush2.msra.mxu0 0.0
        %4828 = vmatprep.subr.mxu0 0.0
        %4829 = vmatpush2.msra.mxu0 0.0
        %4830 = vmatprep.subr.mxu0 0.0
        %4831 = vmatpush2.msra.mxu0 0.0
        %4832 = vmatprep.subr.mxu0 0.0
        %4833 = vmatpush2.msra.mxu0 0.0
        %4834 = vmatprep.subr.mxu0 0.0
        %4835 = vmatpush2.msra.mxu0 0.0
        %4836 = vmatprep.subr.mxu0 0.0
        %4837 = vmatpush2.msra.mxu0 0.0
        %4838 = vmatprep.subr.mxu0 0.0
        %4839 = vmatpush2.msra.mxu0 0.0
        %4840 = vmatprep.subr.mxu0 0.0
        %4841 = vmatpush2.msra.mxu0 0.0
        %4842 = vmatprep.subr.mxu0 0.0
        %4843 = vmatpush2.msra.mxu0 0.0
        %4844 = vmatprep.subr.mxu0 0.0
        %4845 = vmatpush2.msra.mxu0 0.0
        %4846 = vmatprep.mubr.f32.mxu0 0.0
        %4847 = vmatmul.mubr.f32.gmra.mxu0 %v2464
        %v4848 = vpop.f32.mrf.mxu0
        %v4849 = vadd.f32 %v2387, %v4848
        %v4850 = vpop.f32.mrf.mxu0
        %4851 = vdwg.mxu0
        %4853 = vrot.lane.b32.xlu0 %v4849, 32
        %v4854 = vpop.permute.xlu0 %4853
        %v4856 = vsel %vm2540, %v4779, %v4854
        %v4859 = vunpack.c.l.s4 1966171168
        %v4860 = vunpack.c.0.s8 %v4859
        %v4861 = vlaneseq
        %v4862 = vshrl.u32 %v4861, 7
        %v4863 = vsub.s32 %v4860, %v4862
        %v4864 = vrot.slane %v4856, %v4863
        %v4865 = vcombine.high %v4864, %v4864
        %v4867 = vunpack.c.l.s4 1966171168
        %v4868 = vunpack.c.0.s8 %v4867
        %v4869 = vlaneseq
        %v4870 = vshrl.u32 %v4869, 7
        %v4871 = vsub.s32 %v4868, %v4870
        %v4872 = vrot.slane %v4864, %v4871
        %v4874 = vunpack.c.l.s4 1966171168
        %v4875 = vunpack.c.0.s8 %v4874
        %v4876 = vlaneseq
        %v4877 = vshrl.u32 %v4876, 7
        %v4878 = vsub.s32 %v4875, %v4877
        %v4879 = vrot.slane %v4865, %v4878
        %v4880 = vcombine.high %v4872, %v4872
        %v4881 = vcombine.high %v4879, %v4879
        %4886 = vst.msk [vmem:[%s537 + $0xd] sm:$0x1] %vm2571, %v4872
        %4887 = vst.msk [vmem:[%s537 + $0x1d] sm:$0x1] %vm2571, %v4879
        %4888 = vst.msk [vmem:[%s537 + $0x2d] sm:$0x1] %vm2571, %v4880
        %4889 = vst.msk [vmem:[%s537 + $0x3d] sm:$0x1] %vm2571, %v4881
        %4890 = vmatprep.subr.mxu0 0.0
        %4891 = vmatpush1.msra.mxu0 0.0
        %4892 = vmatprep.subr.mxu0 0.0
        %4893 = vmatpush1.msra.mxu0 0.0
        %4894 = vmatprep.subr.mxu0 0.0
        %4895 = vmatpush1.msra.mxu0 0.0
        %4896 = vmatprep.subr.mxu0 0.0
        %4897 = vmatpush1.msra.mxu0 0.0
        %4898 = vmatprep.subr.mxu0 0.0
        %4899 = vmatpush1.msra.mxu0 0.0
        %4900 = vmatprep.subr.mxu0 0.0
        %4901 = vmatpush1.msra.mxu0 0.0
        %4902 = vmatprep.subr.mxu0 0.0
        %4903 = vmatpush1.msra.mxu0 0.0
        %4904 = vmatprep.subr.mxu0 0.0
        %4905 = vmatpush1.msra.mxu0 0.0
        %4906 = vmatprep.subr.mxu0 0.0
        %4907 = vmatpush1.msra.mxu0 0.0
        %4908 = vmatprep.subr.mxu0 0.0
        %4909 = vmatpush1.msra.mxu0 0.0
        %4910 = vmatprep.subr.mxu0 0.0
        %4911 = vmatpush1.msra.mxu0 0.0
        %4912 = vmatprep.subr.mxu0 0.0
        %4913 = vmatpush1.msra.mxu0 0.0
        %4914 = vmatprep.subr.mxu0 0.0
        %4915 = vmatpush1.msra.mxu0 0.0
        %4916 = vmatprep.subr.mxu0 0.0
        %4917 = vmatpush1.msra.mxu0 %v2366
        %4918 = vmatprep.subr.mxu0 0.0
        %4919 = vmatpush1.msra.mxu0 %v2369
        %4920 = vmatprep.subr.mxu0 0.0
        %4921 = vmatpush1.msra.mxu0 %v2238
        %4922 = vmatprep.subr.mxu0 0.0
        %4923 = vmatpush2.msra.mxu0 0.0
        %4924 = vmatprep.subr.mxu0 0.0
        %4925 = vmatpush2.msra.mxu0 0.0
        %4926 = vmatprep.subr.mxu0 0.0
        %4927 = vmatpush2.msra.mxu0 0.0
        %4928 = vmatprep.subr.mxu0 0.0
        %4929 = vmatpush2.msra.mxu0 0.0
        %4930 = vmatprep.subr.mxu0 0.0
        %4931 = vmatpush2.msra.mxu0 0.0
        %4932 = vmatprep.subr.mxu0 0.0
        %4933 = vmatpush2.msra.mxu0 0.0
        %4934 = vmatprep.subr.mxu0 0.0
        %4935 = vmatpush2.msra.mxu0 0.0
        %4936 = vmatprep.subr.mxu0 0.0
        %4937 = vmatpush2.msra.mxu0 0.0
        %4938 = vmatprep.subr.mxu0 0.0
        %4939 = vmatpush2.msra.mxu0 0.0
        %4940 = vmatprep.subr.mxu0 0.0
        %4941 = vmatpush2.msra.mxu0 0.0
        %4942 = vmatprep.subr.mxu0 0.0
        %4943 = vmatpush2.msra.mxu0 0.0
        %4944 = vmatprep.subr.mxu0 0.0
        %4945 = vmatpush2.msra.mxu0 0.0
        %4946 = vmatprep.subr.mxu0 0.0
        %4947 = vmatpush2.msra.mxu0 0.0
        %4948 = vmatprep.subr.mxu0 0.0
        %4949 = vmatpush2.msra.mxu0 0.0
        %4950 = vmatprep.subr.mxu0 0.0
        %4951 = vmatpush2.msra.mxu0 0.0
        %4952 = vmatprep.subr.mxu0 0.0
        %4953 = vmatpush2.msra.mxu0 0.0
        %4954 = vmatprep.mubr.f32.mxu0 0.0
        %4955 = vmatmul.mubr.f32.gmra.mxu0 %v2391
        %v4956 = vpop.f32.mrf.mxu0
        %v4957 = vadd.f32 %v2387, %v4956
        %v4958 = vpop.f32.mrf.mxu0
        %4959 = vdwg.mxu0
        %4960 = vmatprep.subr.mxu0 0.0
        %4961 = vmatpush1.msra.mxu0 0.0
        %4962 = vmatprep.subr.mxu0 0.0
        %4963 = vmatpush1.msra.mxu0 0.0
        %4964 = vmatprep.subr.mxu0 0.0
        %4965 = vmatpush1.msra.mxu0 0.0
        %4966 = vmatprep.subr.mxu0 0.0
        %4967 = vmatpush1.msra.mxu0 0.0
        %4968 = vmatprep.subr.mxu0 0.0
        %4969 = vmatpush1.msra.mxu0 0.0
        %4970 = vmatprep.subr.mxu0 0.0
        %4971 = vmatpush1.msra.mxu0 0.0
        %4972 = vmatprep.subr.mxu0 0.0
        %4973 = vmatpush1.msra.mxu0 0.0
        %4974 = vmatprep.subr.mxu0 0.0
        %4975 = vmatpush1.msra.mxu0 0.0
        %4976 = vmatprep.subr.mxu0 0.0
        %4977 = vmatpush1.msra.mxu0 0.0
        %4978 = vmatprep.subr.mxu0 0.0
        %4979 = vmatpush1.msra.mxu0 0.0
        %4980 = vmatprep.subr.mxu0 0.0
        %4981 = vmatpush1.msra.mxu0 0.0
        %4982 = vmatprep.subr.mxu0 0.0
        %4983 = vmatpush1.msra.mxu0 0.0
        %4984 = vmatprep.subr.mxu0 0.0
        %4985 = vmatpush1.msra.mxu0 0.0
        %4986 = vmatprep.subr.mxu0 0.0
        %4987 = vmatpush1.msra.mxu0 %v2373
        %4988 = vmatprep.subr.mxu0 0.0
        %4989 = vmatpush1.msra.mxu0 %v2376
        %4990 = vmatprep.subr.mxu0 0.0
        %4991 = vmatpush1.msra.mxu0 %v2247
        %4992 = vmatprep.subr.mxu0 0.0
        %4993 = vmatpush2.msra.mxu0 0.0
        %4994 = vmatprep.subr.mxu0 0.0
        %4995 = vmatpush2.msra.mxu0 0.0
        %4996 = vmatprep.subr.mxu0 0.0
        %4997 = vmatpush2.msra.mxu0 0.0
        %4998 = vmatprep.subr.mxu0 0.0
        %4999 = vmatpush2.msra.mxu0 0.0
        %5000 = vmatprep.subr.mxu0 0.0
        %5001 = vmatpush2.msra.mxu0 0.0
        %5002 = vmatprep.subr.mxu0 0.0
        %5003 = vmatpush2.msra.mxu0 0.0
        %5004 = vmatprep.subr.mxu0 0.0
        %5005 = vmatpush2.msra.mxu0 0.0
        %5006 = vmatprep.subr.mxu0 0.0
        %5007 = vmatpush2.msra.mxu0 0.0
        %5008 = vmatprep.subr.mxu0 0.0
        %5009 = vmatpush2.msra.mxu0 0.0
        %5010 = vmatprep.subr.mxu0 0.0
        %5011 = vmatpush2.msra.mxu0 0.0
        %5012 = vmatprep.subr.mxu0 0.0
        %5013 = vmatpush2.msra.mxu0 0.0
        %5014 = vmatprep.subr.mxu0 0.0
        %5015 = vmatpush2.msra.mxu0 0.0
        %5016 = vmatprep.subr.mxu0 0.0
        %5017 = vmatpush2.msra.mxu0 0.0
        %5018 = vmatprep.subr.mxu0 0.0
        %5019 = vmatpush2.msra.mxu0 0.0
        %5020 = vmatprep.subr.mxu0 0.0
        %5021 = vmatpush2.msra.mxu0 0.0
        %5022 = vmatprep.subr.mxu0 0.0
        %5023 = vmatpush2.msra.mxu0 0.0
        %5024 = vmatprep.mubr.f32.mxu0 0.0
        %5025 = vmatmul.mubr.f32.gmra.mxu0 %v2464
        %v5026 = vpop.f32.mrf.mxu0
        %v5027 = vadd.f32 %v2387, %v5026
        %v5028 = vpop.f32.mrf.mxu0
        %5029 = vdwg.mxu0
        %5031 = vrot.lane.b32.xlu0 %v5027, 32
        %v5032 = vpop.permute.xlu0 %5031
        %v5034 = vsel %vm2540, %v4957, %v5032
        %v5037 = vunpack.c.l.s4 1966171168
        %v5038 = vunpack.c.0.s8 %v5037
        %v5039 = vlaneseq
        %v5040 = vshrl.u32 %v5039, 7
        %v5041 = vsub.s32 %v5038, %v5040
        %v5042 = vrot.slane %v5034, %v5041
        %v5043 = vcombine.high %v5042, %v5042
        %v5045 = vunpack.c.l.s4 1966171168
        %v5046 = vunpack.c.0.s8 %v5045
        %v5047 = vlaneseq
        %v5048 = vshrl.u32 %v5047, 7
        %v5049 = vsub.s32 %v5046, %v5048
        %v5050 = vrot.slane %v5042, %v5049
        %v5052 = vunpack.c.l.s4 1966171168
        %v5053 = vunpack.c.0.s8 %v5052
        %v5054 = vlaneseq
        %v5055 = vshrl.u32 %v5054, 7
        %v5056 = vsub.s32 %v5053, %v5055
        %v5057 = vrot.slane %v5043, %v5056
        %v5058 = vcombine.high %v5050, %v5050
        %v5059 = vcombine.high %v5057, %v5057
        %5064 = vst.msk [vmem:[%s537 + $0xe] sm:$0x1] %vm2571, %v5050
        %5065 = vst.msk [vmem:[%s537 + $0x1e] sm:$0x1] %vm2571, %v5057
        %5066 = vst.msk [vmem:[%s537 + $0x2e] sm:$0x1] %vm2571, %v5058
        %5067 = vst.msk [vmem:[%s537 + $0x3e] sm:$0x1] %vm2571, %v5059
        %5068 = vmatprep.subr.mxu0 0.0
        %5069 = vmatpush1.msra.mxu0 0.0
        %5070 = vmatprep.subr.mxu0 0.0
        %5071 = vmatpush1.msra.mxu0 0.0
        %5072 = vmatprep.subr.mxu0 0.0
        %5073 = vmatpush1.msra.mxu0 0.0
        %5074 = vmatprep.subr.mxu0 0.0
        %5075 = vmatpush1.msra.mxu0 0.0
        %5076 = vmatprep.subr.mxu0 0.0
        %5077 = vmatpush1.msra.mxu0 0.0
        %5078 = vmatprep.subr.mxu0 0.0
        %5079 = vmatpush1.msra.mxu0 0.0
        %5080 = vmatprep.subr.mxu0 0.0
        %5081 = vmatpush1.msra.mxu0 0.0
        %5082 = vmatprep.subr.mxu0 0.0
        %5083 = vmatpush1.msra.mxu0 0.0
        %5084 = vmatprep.subr.mxu0 0.0
        %5085 = vmatpush1.msra.mxu0 0.0
        %5086 = vmatprep.subr.mxu0 0.0
        %5087 = vmatpush1.msra.mxu0 0.0
        %5088 = vmatprep.subr.mxu0 0.0
        %5089 = vmatpush1.msra.mxu0 0.0
        %5090 = vmatprep.subr.mxu0 0.0
        %5091 = vmatpush1.msra.mxu0 0.0
        %5092 = vmatprep.subr.mxu0 0.0
        %5093 = vmatpush1.msra.mxu0 0.0
        %5094 = vmatprep.subr.mxu0 0.0
        %5095 = vmatpush1.msra.mxu0 %v2373
        %5096 = vmatprep.subr.mxu0 0.0
        %5097 = vmatpush1.msra.mxu0 %v2376
        %5098 = vmatprep.subr.mxu0 0.0
        %5099 = vmatpush1.msra.mxu0 %v2247
        %5100 = vmatprep.subr.mxu0 0.0
        %5101 = vmatpush2.msra.mxu0 0.0
        %5102 = vmatprep.subr.mxu0 0.0
        %5103 = vmatpush2.msra.mxu0 0.0
        %5104 = vmatprep.subr.mxu0 0.0
        %5105 = vmatpush2.msra.mxu0 0.0
        %5106 = vmatprep.subr.mxu0 0.0
        %5107 = vmatpush2.msra.mxu0 0.0
        %5108 = vmatprep.subr.mxu0 0.0
        %5109 = vmatpush2.msra.mxu0 0.0
        %5110 = vmatprep.subr.mxu0 0.0
        %5111 = vmatpush2.msra.mxu0 0.0
        %5112 = vmatprep.subr.mxu0 0.0
        %5113 = vmatpush2.msra.mxu0 0.0
        %5114 = vmatprep.subr.mxu0 0.0
        %5115 = vmatpush2.msra.mxu0 0.0
        %5116 = vmatprep.subr.mxu0 0.0
        %5117 = vmatpush2.msra.mxu0 0.0
        %5118 = vmatprep.subr.mxu0 0.0
        %5119 = vmatpush2.msra.mxu0 0.0
        %5120 = vmatprep.subr.mxu0 0.0
        %5121 = vmatpush2.msra.mxu0 0.0
        %5122 = vmatprep.subr.mxu0 0.0
        %5123 = vmatpush2.msra.mxu0 0.0
        %5124 = vmatprep.subr.mxu0 0.0
        %5125 = vmatpush2.msra.mxu0 0.0
        %5126 = vmatprep.subr.mxu0 0.0
        %5127 = vmatpush2.msra.mxu0 0.0
        %5128 = vmatprep.subr.mxu0 0.0
        %5129 = vmatpush2.msra.mxu0 0.0
        %5130 = vmatprep.subr.mxu0 0.0
        %5131 = vmatpush2.msra.mxu0 0.0
        %5132 = vmatprep.mubr.f32.mxu0 0.0
        %5133 = vmatmul.mubr.f32.gmra.mxu0 %v2391
        %v5134 = vpop.f32.mrf.mxu0
        %v5135 = vadd.f32 %v2387, %v5134
        %v5136 = vpop.f32.mrf.mxu0
        %5137 = vdwg.mxu0
        %5138 = vmatprep.subr.mxu0 0.0
        %5139 = vmatpush1.msra.mxu0 0.0
        %5140 = vmatprep.subr.mxu0 0.0
        %5141 = vmatpush1.msra.mxu0 0.0
        %5142 = vmatprep.subr.mxu0 0.0
        %5143 = vmatpush1.msra.mxu0 0.0
        %5144 = vmatprep.subr.mxu0 0.0
        %5145 = vmatpush1.msra.mxu0 0.0
        %5146 = vmatprep.subr.mxu0 0.0
        %5147 = vmatpush1.msra.mxu0 0.0
        %5148 = vmatprep.subr.mxu0 0.0
        %5149 = vmatpush1.msra.mxu0 0.0
        %5150 = vmatprep.subr.mxu0 0.0
        %5151 = vmatpush1.msra.mxu0 0.0
        %5152 = vmatprep.subr.mxu0 0.0
        %5153 = vmatpush1.msra.mxu0 0.0
        %5154 = vmatprep.subr.mxu0 0.0
        %5155 = vmatpush1.msra.mxu0 0.0
        %5156 = vmatprep.subr.mxu0 0.0
        %5157 = vmatpush1.msra.mxu0 0.0
        %5158 = vmatprep.subr.mxu0 0.0
        %5159 = vmatpush1.msra.mxu0 0.0
        %5160 = vmatprep.subr.mxu0 0.0
        %5161 = vmatpush1.msra.mxu0 0.0
        %5162 = vmatprep.subr.mxu0 0.0
        %5163 = vmatpush1.msra.mxu0 0.0
        %5164 = vmatprep.subr.mxu0 0.0
        %5165 = vmatpush1.msra.mxu0 %v2380
        %5166 = vmatprep.subr.mxu0 0.0
        %5167 = vmatpush1.msra.mxu0 %v2383
        %5168 = vmatprep.subr.mxu0 0.0
        %5169 = vmatpush1.msra.mxu0 %v2256
        %5170 = vmatprep.subr.mxu0 0.0
        %5171 = vmatpush2.msra.mxu0 0.0
        %5172 = vmatprep.subr.mxu0 0.0
        %5173 = vmatpush2.msra.mxu0 0.0
        %5174 = vmatprep.subr.mxu0 0.0
        %5175 = vmatpush2.msra.mxu0 0.0
        %5176 = vmatprep.subr.mxu0 0.0
        %5177 = vmatpush2.msra.mxu0 0.0
        %5178 = vmatprep.subr.mxu0 0.0
        %5179 = vmatpush2.msra.mxu0 0.0
        %5180 = vmatprep.subr.mxu0 0.0
        %5181 = vmatpush2.msra.mxu0 0.0
        %5182 = vmatprep.subr.mxu0 0.0
        %5183 = vmatpush2.msra.mxu0 0.0
        %5184 = vmatprep.subr.mxu0 0.0
        %5185 = vmatpush2.msra.mxu0 0.0
        %5186 = vmatprep.subr.mxu0 0.0
        %5187 = vmatpush2.msra.mxu0 0.0
        %5188 = vmatprep.subr.mxu0 0.0
        %5189 = vmatpush2.msra.mxu0 0.0
        %5190 = vmatprep.subr.mxu0 0.0
        %5191 = vmatpush2.msra.mxu0 0.0
        %5192 = vmatprep.subr.mxu0 0.0
        %5193 = vmatpush2.msra.mxu0 0.0
        %5194 = vmatprep.subr.mxu0 0.0
        %5195 = vmatpush2.msra.mxu0 0.0
        %5196 = vmatprep.subr.mxu0 0.0
        %5197 = vmatpush2.msra.mxu0 0.0
        %5198 = vmatprep.subr.mxu0 0.0
        %5199 = vmatpush2.msra.mxu0 0.0
        %5200 = vmatprep.subr.mxu0 0.0
        %5201 = vmatpush2.msra.mxu0 0.0
        %5202 = vmatprep.mubr.f32.mxu0 0.0
        %5203 = vmatmul.mubr.f32.gmra.mxu0 %v2464
        %v5204 = vpop.f32.mrf.mxu0
        %v5205 = vadd.f32 %v2387, %v5204
        %v5206 = vpop.f32.mrf.mxu0
        %5207 = vdwg.mxu0
        %5209 = vrot.lane.b32.xlu0 %v5205, 32
        %v5210 = vpop.permute.xlu0 %5209
        %v5212 = vsel %vm2540, %v5135, %v5210
        %v5215 = vunpack.c.l.s4 1966171168
        %v5216 = vunpack.c.0.s8 %v5215
        %v5217 = vlaneseq
        %v5218 = vshrl.u32 %v5217, 7
        %v5219 = vsub.s32 %v5216, %v5218
        %v5220 = vrot.slane %v5212, %v5219
        %v5221 = vcombine.high %v5220, %v5220
        %v5223 = vunpack.c.l.s4 1966171168
        %v5224 = vunpack.c.0.s8 %v5223
        %v5225 = vlaneseq
        %v5226 = vshrl.u32 %v5225, 7
        %v5227 = vsub.s32 %v5224, %v5226
        %v5228 = vrot.slane %v5220, %v5227
        %v5230 = vunpack.c.l.s4 1966171168
        %v5231 = vunpack.c.0.s8 %v5230
        %v5232 = vlaneseq
        %v5233 = vshrl.u32 %v5232, 7
        %v5234 = vsub.s32 %v5231, %v5233
        %v5235 = vrot.slane %v5221, %v5234
        %v5236 = vcombine.high %v5228, %v5228
        %v5237 = vcombine.high %v5235, %v5235
        %5242 = vst.msk [vmem:[%s537 + $0xf] sm:$0x1] %vm2571, %v5228
        %5243 = vst.msk [vmem:[%s537 + $0x1f] sm:$0x1] %vm2571, %v5235
        %5244 = vst.msk [vmem:[%s537 + $0x2f] sm:$0x1] %vm2571, %v5236
        %5245 = vst.msk [vmem:[%s537 + $0x3f] sm:$0x1] %vm2571, %v5237
        %s5246 = smul.u32 4, %s22
        %s5247 = smul.u32 2, %s23
        %p5248 = scmp.lt.s32.totalorder %s21, 1
        %s5249 = scalar_select %p5248, %s21, 1
        %p5250 = scmp.lt.s32.totalorder %s5246, 3
        %s5251 = scalar_select %p5250, %s5246, 3
        %p5252 = scmp.lt.s32.totalorder %s5247, 1
        %s5253 = scalar_select %p5252, %s5247, 1
        %s5254 = smul.addr %s5251, 2
        %s5255 = sadd.s32 %s5253, %s5254
        %s5256 = smul.addr %s5249, 8
        %s5257 = sadd.s32 %s5255, %s5256
        %s5258 = smul.addr %s5257, 8
        %s5259 = scalar_lea.vmem %s5, %s5258
        // Predicated region
        $region131: #{upsample_forward.1} parent=121 // pred_check
          %p5260 = pneg %p190
        $region132: #{upsample_forward.1} parent=121 // pred_check_branch
          %5262 = sbr.rel (%p5260) target = $region134
        $region133: #{upsample_forward.1} parent=121 // pred_region
          %s5263 = smul.u32 4, %s22
          %s5264 = smul.u32 2, %s23
        $region134: #{upsample_forward.1} parent=121 // pred_fallthru
          _
      $region122: #{upsample_forward.1} parent=5 // pred_fallthru
        _
      %p5265 = scmp.le.s32.totalorder 2, %s11
      // Predicated region
      $region135: #{upsample_forward.1} parent=5 // pred_check
        %p5266 = pneg %p5265
      $region136: #{upsample_forward.1} parent=5 // pred_check_branch
        %5268 = sbr.rel (%p5266) target = $region138
      $region137: #{upsample_forward.1} parent=5 // pred_region
        %s5269 = ssub.s32 %s11, 2
        // Predicated region
        $region139: #{upsample_forward.1} parent=137 // pred_check
          %p5270 = pneg %p196
        $region140: #{upsample_forward.1} parent=137 // pred_check_branch
          %5272 = sbr.rel (%p5270) target = $region142
        $region141: #{upsample_forward.1} parent=137 // pred_region
          %s5273 = smul.u32 4, %s25
          %s5274 = smul.u32 2, %s26
          %p5275 = scmp.lt.s32.totalorder %s24, 1
          %s5276 = scalar_select %p5275, %s24, 1
          %p5277 = scmp.lt.s32.totalorder %s5273, 3
          %s5278 = scalar_select %p5277, %s5273, 3
          %p5279 = scmp.lt.s32.totalorder %s5274, 1
          %s5280 = scalar_select %p5279, %s5274, 1
          %s5281 = smul.addr %s5278, 2
          %s5282 = sadd.s32 %s5280, %s5281
          %s5283 = smul.addr %s5276, 8
          %s5284 = sadd.s32 %s5282, %s5283
          %s5285 = smul.addr %s5284, 8
          %s5286 = scalar_lea.vmem %s5, %s5285
        $region142: #{upsample_forward.1} parent=137 // pred_fallthru
          _
      $region138: #{upsample_forward.1} parent=5 // pred_fallthru
        _
    $region6: #{upsample_forward.1} parent=1 // loop_footer
      %s15 = sadd.s32 1, %s11
    $region7: #{upsample_forward.1} parent=1 // loop_footer_branch
      %10 = sbr.rel target = $region3
    $region8: #{upsample_forward.1} parent=1 // loop_exit
      _

</llo_original>
